<compile_context>
chip_gen: v7x
topology: tpu7x:2x2x1
jax: 0.10.0
libtpu: 0.0.40
codegen_flags: <defaults>
</compile_context>

<pallas_src>
import functools
import math

import jax
import jax.numpy as jnp
import numpy as np
from jax.experimental import pallas as pl
from jax.experimental.pallas import tpu as pltpu


def transform_attention_kernel(pred_ref, his_ref, x_ref,
                               wq_ref, bq_ref, wk_ref, bk_ref,
                               wv_ref, bv_ref, wo_ref, bo_ref,
                               o_ref, *, heads, hdim, vpu_dtype):
    _, Tp, NB, D = pred_ref.shape
    Th = his_ref.shape[1]
    mm_dtype = wq_ref.dtype  # bf16 by default (f32 accumulation kept)

    # --- Projections: (1, T, NB, D) block -> (T*NB, D) rows, one GEMM each. ---
    pred = pred_ref[0].reshape(Tp * NB, D)
    his = his_ref[0].reshape(Th * NB, D)
    xin = x_ref[0].reshape(Th * NB, D)

    q = jnp.dot(pred.astype(mm_dtype), wq_ref[...],
                preferred_element_type=jnp.float32) + bq_ref[...]   # scale folded in
    k = jnp.dot(his.astype(mm_dtype), wk_ref[...],
                preferred_element_type=jnp.float32) + bk_ref[...]
    v = jnp.dot(xin.astype(mm_dtype), wv_ref[...],
                preferred_element_type=jnp.float32) + bv_ref[...]

    # Vertex axis onto lanes for the attention math: (T, NB, D) -> (T, D, NB).
    # Features are already in head-major order (f' = h*hdim + c) thanks to the
    # trace-time column permutation of Wq/Wk/Wv.
    q_t = jnp.swapaxes(q.reshape(Tp, NB, D), -1, -2).astype(vpu_dtype)   # (Tp, D, NB)
    k_t = jnp.swapaxes(k.reshape(Th, NB, D), -1, -2).astype(vpu_dtype)   # (Th, D, NB)
    v_t = jnp.swapaxes(v.reshape(Th, NB, D), -1, -2).astype(vpu_dtype)   # (Th, D, NB)

    # Hoisted, grid-/loop-invariant views.
    wo = wo_ref[...]            # (D, D): rows = output feat, cols = head-major feat
    bo = bo_ref[...]            # (D, 1): broadcasts over the lane (vertex) axis
    k_blocks = [k_t[:, h * hdim:(h + 1) * hdim, :] for h in range(heads)]
    v_blocks = [v_t[:, h * hdim:(h + 1) * hdim, :] for h in range(heads)]

    # --- Attention, one prediction time-step at a time (bounded live set). ---
    for tp in range(Tp):
        q_tp = q_t[tp]                                            # (D, NB)

        # Chunk scores: sum over `heads` contiguous hdim-wide sublane slices.
        s = (q_tp[0:hdim][None, :, :] * k_blocks[0]).astype(jnp.float32)
        for h in range(1, heads):
            lo = h * hdim
            s = s + (q_tp[lo:lo + hdim][None, :, :] * k_blocks[h]).astype(jnp.float32)
        # s: (Th, hdim, NB), already scaled by 1/sqrt(hdim) via the folded weights.

        # Softmax over history time (axis 0); f32 stats, EUP reciprocal.
        s = s - jnp.max(s, axis=0, keepdims=True)
        e = jnp.exp(s)
        p = (e * pl.reciprocal(jnp.sum(e, axis=0, keepdims=True),
                               approx=True)).astype(vpu_dtype)    # (Th, hdim, NB)

        # PV: per head-block weighting, accumulate (reduce) over history time.
        o_blocks = []
        for h in range(heads):
            o_blocks.append(jnp.sum((p * v_blocks[h]).astype(jnp.float32), axis=0))
        o_tp = jnp.concatenate(o_blocks, axis=0)                  # (D, NB), head-major

        # Output projection, lane-dense on the MXU: (D, D) @ (D, NB).
        out_tp = jnp.dot(wo, o_tp.astype(mm_dtype),
                         preferred_element_type=jnp.float32) + bo  # (D, NB)

        # Store back in the PyTorch (B, Tp, N, D) layout.
        o_ref[0, tp, :, :] = jnp.swapaxes(out_tp, 0, 1).astype(o_ref.dtype)


def _default_vpu_dtype():
    # bf16 VPU is native on v6e/v7x; v5e (and older) would emulate it -> keep f32.
    try:
        kind = jax.devices()[0].device_kind.lower()
    except Exception:
        return jnp.float32
    if ("v6" in kind) or ("v7" in kind):
        return jnp.bfloat16
    return jnp.float32


def transform_attention(x, ste_his, ste_pred, params, heads, *,
                        nb_target=128, matmul_dtype=jnp.bfloat16, vpu_dtype=None):
    """x, ste_his, ste_pred: (B, T, N, D) float32, PyTorch layout (no transposes needed)."""
    B, Th, N, D = x.shape
    Tp = ste_pred.shape[1]
    hdim = D // heads
    assert hdim * heads == D, "d_model must be divisible by heads"

    if vpu_dtype is None:
        vpu_dtype = _default_vpu_dtype()

    # Intentional: scale is 1/sqrt(hdim) (matches the PyTorch module), not 1/sqrt(heads).
    scale = 1.0 / math.sqrt(hdim)

    # Vertices per grid step (lane axis of the attention math). Prefer nb | N.
    nb = min(nb_target, N)
    grid_n = pl.cdiv(N, nb)
    # (On v7x, keep B*grid_n >= 2 so both TensorCores get work; B>=2 suffices here.)

    # Head-major feature permutation: new position f' = h*hdim + c holds the
    # original feature f = c*heads + h.  Makes the per-chunk (size-`heads`)
    # reduction a sum of contiguous hdim-wide sublane slices inside the kernel.
    perm = np.arange(D).reshape(hdim, heads).T.reshape(-1)

    # PyTorch Linear weight is (out, in); pre-transpose to (in, out) so the kernel
    # does x @ W, permute output columns to head-major order, and fold the softmax
    # scale into Wq/bq (one-time trace-level weight transforms).
    wq = (params["wq"].T[:, perm] * scale).astype(matmul_dtype)
    wk = params["wk"].T[:, perm].astype(matmul_dtype)
    wv = params["wv"].T[:, perm].astype(matmul_dtype)
    # Wo is consumed as Wo @ o_t (features-on-sublanes), so keep (out, in) and
    # permute its *input* columns to match the head-major attention output.
    wo = params["wo"][:, perm].astype(matmul_dtype)
    bq = (params["bq"][perm] * scale).reshape(1, D).astype(jnp.float32)
    bk = params["bk"][perm].reshape(1, D).astype(jnp.float32)
    bv = params["bv"][perm].reshape(1, D).astype(jnp.float32)
    bo = params["bo"].reshape(D, 1).astype(jnp.float32)

    def seq_spec(T):
        return pl.BlockSpec((1, T, nb, D), lambda b, n: (b, 0, n, 0))

    w_spec = pl.BlockSpec((D, D), lambda b, n: (0, 0))
    brow_spec = pl.BlockSpec((1, D), lambda b, n: (0, 0))
    bcol_spec = pl.BlockSpec((D, 1), lambda b, n: (0, 0))

    return pl.pallas_call(
        functools.partial(transform_attention_kernel,
                          heads=heads, hdim=hdim, vpu_dtype=vpu_dtype),
        out_shape=jax.ShapeDtypeStruct((B, Tp, N, D), jnp.float32),
        grid=(B, grid_n),
        in_specs=[seq_spec(Tp), seq_spec(Th), seq_spec(Th),
                  w_spec, brow_spec, w_spec, brow_spec,
                  w_spec, brow_spec, w_spec, bcol_spec],
        out_specs=pl.BlockSpec((1, Tp, nb, D), lambda b, n: (b, 0, n, 0)),
        compiler_params=pltpu.CompilerParams(
            dimension_semantics=("parallel", "parallel"),
            vmem_limit_bytes=32 * 1024 * 1024),
    )(ste_pred, ste_his, x, wq, bq, wk, bk, wv, bv, wo, bo)


def reference_transform_attention(x, ste_his, ste_pred, params, heads):
    """Pure-JAX transcription of the PyTorch forward for validation."""
    B, _, _, D = x.shape
    hdim = D // heads
    q = ste_pred @ params["wq"].T + params["bq"]
    k = ste_his @ params["wk"].T + params["bk"]
    v = x @ params["wv"].T + params["bv"]
    split_cat = lambda t: jnp.concatenate(jnp.split(t, hdim, axis=-1), axis=0)
    q, k, v = split_cat(q), split_cat(k), split_cat(v)
    q = jnp.transpose(q, (0, 2, 1, 3))
    k = jnp.transpose(k, (0, 2, 3, 1))
    v = jnp.transpose(v, (0, 2, 1, 3))
    a = jnp.matmul(q, k) / math.sqrt(hdim)
    a = jax.nn.softmax(a, axis=-1)
    out = jnp.matmul(a, v)
    out = jnp.transpose(out, (0, 2, 1, 3))
    out = jnp.concatenate(jnp.split(out, hdim, axis=0), axis=-1)
    return out @ params["wo"].T + params["bo"]


def init_params(key, d_model):
    ks = jax.random.split(key, 8)
    bound = 1.0 / math.sqrt(d_model)
    u = lambda k, shape: jax.random.uniform(k, shape, jnp.float32, -bound, bound)
    return {
        "wq": u(ks[0], (d_model, d_model)), "bq": u(ks[1], (d_model,)),
        "wk": u(ks[2], (d_model, d_model)), "bk": u(ks[3], (d_model,)),
        "wv": u(ks[4], (d_model, d_model)), "bv": u(ks[5], (d_model,)),
        "wo": u(ks[6], (d_model, d_model)), "bo": u(ks[7], (d_model,)),
    }


if __name__ == "__main__":
    B, T_his, T_pred, N, d_model, heads = 2, 8, 8, 16, 32, 4

    key = jax.random.PRNGKey(0)
    kx, kh, kp, kw = jax.random.split(key, 4)
    x = jax.random.normal(kx, (B, T_his, N, d_model), jnp.float32)
    ste_his = jax.random.normal(kh, (B, T_his, N, d_model), jnp.float32)
    ste_pred = jax.random.normal(kp, (B, T_pred, N, d_model), jnp.float32)
    params = init_params(kw, d_model)

    out = transform_attention(x, ste_his, ste_pred, params, heads)
    out = jax.block_until_ready(out)

    ref = reference_transform_attention(x, ste_his, ste_pred, params, heads)
    assert out.shape == (B, T_pred, N, d_model)
    # bf16 MXU operands + approx reciprocal -> slightly looser tolerance than f32.
    np.testing.assert_allclose(np.asarray(out), np.asarray(ref), rtol=2e-2, atol=2e-2)

    print("KERNEL_OK")
</pallas_src>

<mosaic_0001>
module attributes {stable_mosaic.version = 11 : i64} {
  func.func @transform_attention_kernel(%arg0: i32, %arg1: i32, %arg2: memref<1x8x16x32xf32, #tpu.memory_space<vmem>>, %arg3: memref<1x8x16x32xf32, #tpu.memory_space<vmem>>, %arg4: memref<1x8x16x32xf32, #tpu.memory_space<vmem>>, %arg5: memref<32x32xbf16, #tpu.memory_space<vmem>>, %arg6: memref<1x32xf32, #tpu.memory_space<vmem>>, %arg7: memref<32x32xbf16, #tpu.memory_space<vmem>>, %arg8: memref<1x32xf32, #tpu.memory_space<vmem>>, %arg9: memref<32x32xbf16, #tpu.memory_space<vmem>>, %arg10: memref<1x32xf32, #tpu.memory_space<vmem>>, %arg11: memref<32x32xbf16, #tpu.memory_space<vmem>>, %arg12: memref<32x1xf32, #tpu.memory_space<vmem>>, %arg13: memref<1x8x16x32xf32, #tpu.memory_space<vmem>>) attributes {dimension_semantics = [#tpu.dimension_semantics<parallel>, #tpu.dimension_semantics<parallel>], iteration_bounds = array<i64: 2, 1>, scalar_prefetch = 0 : i64, scratch_operands = 0 : i64, tpu.core_type = #tpu.core_type<tc>, window_params = [{transform_indices = @transform_0, window_bounds = array<i64: 1, 8, 16, 32>}, {transform_indices = @transform_1, window_bounds = array<i64: 1, 8, 16, 32>}, {transform_indices = @transform_2, window_bounds = array<i64: 1, 8, 16, 32>}, {pipeline_mode = #tpu.pipeline_mode<synchronous>, transform_indices = @transform_3, window_bounds = array<i64: 32, 32>}, {pipeline_mode = #tpu.pipeline_mode<synchronous>, transform_indices = @transform_4, window_bounds = array<i64: 1, 32>}, {pipeline_mode = #tpu.pipeline_mode<synchronous>, transform_indices = @transform_5, window_bounds = array<i64: 32, 32>}, {pipeline_mode = #tpu.pipeline_mode<synchronous>, transform_indices = @transform_6, window_bounds = array<i64: 1, 32>}, {pipeline_mode = #tpu.pipeline_mode<synchronous>, transform_indices = @transform_7, window_bounds = array<i64: 32, 32>}, {pipeline_mode = #tpu.pipeline_mode<synchronous>, transform_indices = @transform_8, window_bounds = array<i64: 1, 32>}, {pipeline_mode = #tpu.pipeline_mode<synchronous>, transform_indices = @transform_9, window_bounds = array<i64: 32, 32>}, {pipeline_mode = #tpu.pipeline_mode<synchronous>, transform_indices = @transform_10, window_bounds = array<i64: 32, 1>}, {transform_indices = @transform_11, window_bounds = array<i64: 1, 8, 16, 32>}]} {
    %c0 = arith.constant 0 : index
    %c0_0 = arith.constant 0 : index
    %c0_1 = arith.constant 0 : index
    %c0_2 = arith.constant 0 : index
    %0 = vector.load %arg2[%c0, %c0_0, %c0_1, %c0_2] : memref<1x8x16x32xf32, #tpu.memory_space<vmem>>, vector<1x8x16x32xf32>
    %1 = vector.shape_cast %0 : vector<1x8x16x32xf32> to vector<8x16x32xf32>
    %2 = vector.shape_cast %1 : vector<8x16x32xf32> to vector<128x32xf32>
    %c0_3 = arith.constant 0 : index
    %c0_4 = arith.constant 0 : index
    %c0_5 = arith.constant 0 : index
    %c0_6 = arith.constant 0 : index
    %3 = vector.load %arg3[%c0_3, %c0_4, %c0_5, %c0_6] : memref<1x8x16x32xf32, #tpu.memory_space<vmem>>, vector<1x8x16x32xf32>
    %4 = vector.shape_cast %3 : vector<1x8x16x32xf32> to vector<8x16x32xf32>
    %5 = vector.shape_cast %4 : vector<8x16x32xf32> to vector<128x32xf32>
    %c0_7 = arith.constant 0 : index
    %c0_8 = arith.constant 0 : index
    %c0_9 = arith.constant 0 : index
    %c0_10 = arith.constant 0 : index
    %6 = vector.load %arg4[%c0_7, %c0_8, %c0_9, %c0_10] : memref<1x8x16x32xf32, #tpu.memory_space<vmem>>, vector<1x8x16x32xf32>
    %7 = vector.shape_cast %6 : vector<1x8x16x32xf32> to vector<8x16x32xf32>
    %8 = vector.shape_cast %7 : vector<8x16x32xf32> to vector<128x32xf32>
    %9 = arith.truncf %2 : vector<128x32xf32> to vector<128x32xbf16>
    %c0_11 = arith.constant 0 : index
    %c0_12 = arith.constant 0 : index
    %10 = vector.load %arg5[%c0_11, %c0_12] : memref<32x32xbf16, #tpu.memory_space<vmem>>, vector<32x32xbf16>
    %cst = arith.constant dense<0.000000e+00> : vector<128x32xf32>
    %11 = tpu.matmul %9, %10, %cst {dimension_numbers = #tpu.dot_dimension_numbers<[1], [0], [0], [1], [0, 0, 1, 1], [], []>} : vector<128x32xbf16>, vector<32x32xbf16>, vector<128x32xf32> -> vector<128x32xf32>
    %c0_13 = arith.constant 0 : index
    %c0_14 = arith.constant 0 : index
    %12 = vector.load %arg6[%c0_13, %c0_14] : memref<1x32xf32, #tpu.memory_space<vmem>>, vector<1x32xf32>
    %13 = vector.broadcast %12 : vector<1x32xf32> to vector<128x32xf32>
    %14 = arith.addf %11, %13 : vector<128x32xf32>
    %15 = arith.truncf %5 : vector<128x32xf32> to vector<128x32xbf16>
    %c0_15 = arith.constant 0 : index
    %c0_16 = arith.constant 0 : index
    %16 = vector.load %arg7[%c0_15, %c0_16] : memref<32x32xbf16, #tpu.memory_space<vmem>>, vector<32x32xbf16>
    %cst_17 = arith.constant dense<0.000000e+00> : vector<128x32xf32>
    %17 = tpu.matmul %15, %16, %cst_17 {dimension_numbers = #tpu.dot_dimension_numbers<[1], [0], [0], [1], [0, 0, 1, 1], [], []>} : vector<128x32xbf16>, vector<32x32xbf16>, vector<128x32xf32> -> vector<128x32xf32>
    %c0_18 = arith.constant 0 : index
    %c0_19 = arith.constant 0 : index
    %18 = vector.load %arg8[%c0_18, %c0_19] : memref<1x32xf32, #tpu.memory_space<vmem>>, vector<1x32xf32>
    %19 = vector.broadcast %18 : vector<1x32xf32> to vector<128x32xf32>
    %20 = arith.addf %17, %19 : vector<128x32xf32>
    %21 = arith.truncf %8 : vector<128x32xf32> to vector<128x32xbf16>
    %c0_20 = arith.constant 0 : index
    %c0_21 = arith.constant 0 : index
    %22 = vector.load %arg9[%c0_20, %c0_21] : memref<32x32xbf16, #tpu.memory_space<vmem>>, vector<32x32xbf16>
    %cst_22 = arith.constant dense<0.000000e+00> : vector<128x32xf32>
    %23 = tpu.matmul %21, %22, %cst_22 {dimension_numbers = #tpu.dot_dimension_numbers<[1], [0], [0], [1], [0, 0, 1, 1], [], []>} : vector<128x32xbf16>, vector<32x32xbf16>, vector<128x32xf32> -> vector<128x32xf32>
    %c0_23 = arith.constant 0 : index
    %c0_24 = arith.constant 0 : index
    %24 = vector.load %arg10[%c0_23, %c0_24] : memref<1x32xf32, #tpu.memory_space<vmem>>, vector<1x32xf32>
    %25 = vector.broadcast %24 : vector<1x32xf32> to vector<128x32xf32>
    %26 = arith.addf %23, %25 : vector<128x32xf32>
    %27 = vector.shape_cast %14 : vector<128x32xf32> to vector<8x16x32xf32>
    %28 = tpu.transpose %27, [0, 2, 1] : vector<8x16x32xf32> -> vector<8x32x16xf32>
    %29 = vector.shape_cast %20 : vector<128x32xf32> to vector<8x16x32xf32>
    %30 = tpu.transpose %29, [0, 2, 1] : vector<8x16x32xf32> -> vector<8x32x16xf32>
    %31 = vector.shape_cast %26 : vector<128x32xf32> to vector<8x16x32xf32>
    %32 = tpu.transpose %31, [0, 2, 1] : vector<8x16x32xf32> -> vector<8x32x16xf32>
    %c0_25 = arith.constant 0 : index
    %c0_26 = arith.constant 0 : index
    %33 = vector.load %arg11[%c0_25, %c0_26] : memref<32x32xbf16, #tpu.memory_space<vmem>>, vector<32x32xbf16>
    %c0_27 = arith.constant 0 : index
    %c0_28 = arith.constant 0 : index
    %34 = vector.load %arg12[%c0_27, %c0_28] : memref<32x1xf32, #tpu.memory_space<vmem>>, vector<32x1xf32>
    %35 = vector.extract_strided_slice %30 {offsets = [0, 0, 0], sizes = [8, 8, 16], strides = [1, 1, 1]} : vector<8x32x16xf32> to vector<8x8x16xf32>
    %36 = vector.extract_strided_slice %30 {offsets = [0, 8, 0], sizes = [8, 8, 16], strides = [1, 1, 1]} : vector<8x32x16xf32> to vector<8x8x16xf32>
    %37 = vector.extract_strided_slice %30 {offsets = [0, 16, 0], sizes = [8, 8, 16], strides = [1, 1, 1]} : vector<8x32x16xf32> to vector<8x8x16xf32>
    %38 = vector.extract_strided_slice %30 {offsets = [0, 24, 0], sizes = [8, 8, 16], strides = [1, 1, 1]} : vector<8x32x16xf32> to vector<8x8x16xf32>
    %39 = vector.extract_strided_slice %32 {offsets = [0, 0, 0], sizes = [8, 8, 16], strides = [1, 1, 1]} : vector<8x32x16xf32> to vector<8x8x16xf32>
    %40 = vector.extract_strided_slice %32 {offsets = [0, 8, 0], sizes = [8, 8, 16], strides = [1, 1, 1]} : vector<8x32x16xf32> to vector<8x8x16xf32>
    %41 = vector.extract_strided_slice %32 {offsets = [0, 16, 0], sizes = [8, 8, 16], strides = [1, 1, 1]} : vector<8x32x16xf32> to vector<8x8x16xf32>
    %42 = vector.extract_strided_slice %32 {offsets = [0, 24, 0], sizes = [8, 8, 16], strides = [1, 1, 1]} : vector<8x32x16xf32> to vector<8x8x16xf32>
    %43 = vector.extract_strided_slice %28 {offsets = [0, 0, 0], sizes = [1, 32, 16], strides = [1, 1, 1]} : vector<8x32x16xf32> to vector<1x32x16xf32>
    %44 = vector.shape_cast %43 : vector<1x32x16xf32> to vector<32x16xf32>
    %45 = vector.extract_strided_slice %44 {offsets = [0, 0], sizes = [8, 16], strides = [1, 1]} : vector<32x16xf32> to vector<8x16xf32>
    %46 = vector.shape_cast %45 : vector<8x16xf32> to vector<1x8x16xf32>
    %47 = vector.broadcast %46 : vector<1x8x16xf32> to vector<8x8x16xf32>
    %48 = arith.mulf %47, %35 : vector<8x8x16xf32>
    %49 = vector.extract_strided_slice %44 {offsets = [8, 0], sizes = [8, 16], strides = [1, 1]} : vector<32x16xf32> to vector<8x16xf32>
    %50 = vector.shape_cast %49 : vector<8x16xf32> to vector<1x8x16xf32>
    %51 = vector.broadcast %50 : vector<1x8x16xf32> to vector<8x8x16xf32>
    %52 = arith.mulf %51, %36 : vector<8x8x16xf32>
    %53 = arith.addf %48, %52 : vector<8x8x16xf32>
    %54 = vector.extract_strided_slice %44 {offsets = [16, 0], sizes = [8, 16], strides = [1, 1]} : vector<32x16xf32> to vector<8x16xf32>
    %55 = vector.shape_cast %54 : vector<8x16xf32> to vector<1x8x16xf32>
    %56 = vector.broadcast %55 : vector<1x8x16xf32> to vector<8x8x16xf32>
    %57 = arith.mulf %56, %37 : vector<8x8x16xf32>
    %58 = arith.addf %53, %57 : vector<8x8x16xf32>
    %59 = vector.extract_strided_slice %44 {offsets = [24, 0], sizes = [8, 16], strides = [1, 1]} : vector<32x16xf32> to vector<8x16xf32>
    %60 = vector.shape_cast %59 : vector<8x16xf32> to vector<1x8x16xf32>
    %61 = vector.broadcast %60 : vector<1x8x16xf32> to vector<8x8x16xf32>
    %62 = arith.mulf %61, %38 : vector<8x8x16xf32>
    %63 = arith.addf %58, %62 : vector<8x8x16xf32>
    %cst_29 = arith.constant dense<0xFF800000> : vector<8x16xf32>
    %64 = vector.multi_reduction <maximumf>, %63, %cst_29 [0] : vector<8x8x16xf32> to vector<8x16xf32>
    %65 = vector.shape_cast %64 : vector<8x16xf32> to vector<1x8x16xf32>
    %66 = vector.broadcast %65 : vector<1x8x16xf32> to vector<8x8x16xf32>
    %67 = arith.subf %63, %66 : vector<8x8x16xf32>
    %68 = math.exp %67 : vector<8x8x16xf32>
    %cst_30 = arith.constant dense<0.000000e+00> : vector<8x16xf32>
    %69 = vector.multi_reduction <add>, %68, %cst_30 [0] : vector<8x8x16xf32> to vector<8x16xf32>
    %70 = vector.shape_cast %69 : vector<8x16xf32> to vector<1x8x16xf32>
    %71 = tpu.reciprocal %70 {approx = true} : vector<1x8x16xf32> -> vector<1x8x16xf32>
    %72 = vector.broadcast %71 : vector<1x8x16xf32> to vector<8x8x16xf32>
    %73 = arith.mulf %68, %72 : vector<8x8x16xf32>
    %74 = arith.mulf %73, %39 : vector<8x8x16xf32>
    %cst_31 = arith.constant dense<0.000000e+00> : vector<8x16xf32>
    %75 = vector.multi_reduction <add>, %74, %cst_31 [0] : vector<8x8x16xf32> to vector<8x16xf32>
    %76 = arith.mulf %73, %40 : vector<8x8x16xf32>
    %cst_32 = arith.constant dense<0.000000e+00> : vector<8x16xf32>
    %77 = vector.multi_reduction <add>, %76, %cst_32 [0] : vector<8x8x16xf32> to vector<8x16xf32>
    %78 = arith.mulf %73, %41 : vector<8x8x16xf32>
    %cst_33 = arith.constant dense<0.000000e+00> : vector<8x16xf32>
    %79 = vector.multi_reduction <add>, %78, %cst_33 [0] : vector<8x8x16xf32> to vector<8x16xf32>
    %80 = arith.mulf %73, %42 : vector<8x8x16xf32>
    %cst_34 = arith.constant dense<0.000000e+00> : vector<8x16xf32>
    %81 = vector.multi_reduction <add>, %80, %cst_34 [0] : vector<8x8x16xf32> to vector<8x16xf32>
    %82 = tpu.concatenate %75, %77, %79, %81 in 0 : vector<8x16xf32>, vector<8x16xf32>, vector<8x16xf32>, vector<8x16xf32> -> vector<32x16xf32>
    %83 = arith.truncf %82 : vector<32x16xf32> to vector<32x16xbf16>
    %cst_35 = arith.constant dense<0.000000e+00> : vector<32x16xf32>
    %84 = tpu.matmul %33, %83, %cst_35 {dimension_numbers = #tpu.dot_dimension_numbers<[1], [0], [0], [1], [0, 0, 1, 1], [], []>} : vector<32x32xbf16>, vector<32x16xbf16>, vector<32x16xf32> -> vector<32x16xf32>
    %85 = vector.broadcast %34 : vector<32x1xf32> to vector<32x16xf32>
    %86 = arith.addf %84, %85 : vector<32x16xf32>
    %87 = tpu.transpose %86, [1, 0] : vector<32x16xf32> -> vector<16x32xf32>
    %c0_36 = arith.constant 0 : index
    %c0_37 = arith.constant 0 : index
    %c0_38 = arith.constant 0 : index
    %c0_39 = arith.constant 0 : index
    %88 = vector.load %arg13[%c0_36, %c0_37, %c0_38, %c0_39] : memref<1x8x16x32xf32, #tpu.memory_space<vmem>>, vector<1x1x16x32xf32>
    %89 = vector.shape_cast %88 : vector<1x1x16x32xf32> to vector<16x32xf32>
    %90 = vector.shape_cast %87 : vector<16x32xf32> to vector<1x1x16x32xf32>
    tpu.vector_store %arg13[%c0_36, %c0_37, %c0_38, %c0_39], %90 {strides = array<i32>} : memref<1x8x16x32xf32, #tpu.memory_space<vmem>>, vector<1x1x16x32xf32>,
    %91 = vector.extract_strided_slice %28 {offsets = [1, 0, 0], sizes = [1, 32, 16], strides = [1, 1, 1]} : vector<8x32x16xf32> to vector<1x32x16xf32>
    %92 = vector.shape_cast %91 : vector<1x32x16xf32> to vector<32x16xf32>
    %93 = vector.extract_strided_slice %92 {offsets = [0, 0], sizes = [8, 16], strides = [1, 1]} : vector<32x16xf32> to vector<8x16xf32>
    %94 = vector.shape_cast %93 : vector<8x16xf32> to vector<1x8x16xf32>
    %95 = vector.broadcast %94 : vector<1x8x16xf32> to vector<8x8x16xf32>
    %96 = arith.mulf %95, %35 : vector<8x8x16xf32>
    %97 = vector.extract_strided_slice %92 {offsets = [8, 0], sizes = [8, 16], strides = [1, 1]} : vector<32x16xf32> to vector<8x16xf32>
    %98 = vector.shape_cast %97 : vector<8x16xf32> to vector<1x8x16xf32>
    %99 = vector.broadcast %98 : vector<1x8x16xf32> to vector<8x8x16xf32>
    %100 = arith.mulf %99, %36 : vector<8x8x16xf32>
    %101 = arith.addf %96, %100 : vector<8x8x16xf32>
    %102 = vector.extract_strided_slice %92 {offsets = [16, 0], sizes = [8, 16], strides = [1, 1]} : vector<32x16xf32> to vector<8x16xf32>
    %103 = vector.shape_cast %102 : vector<8x16xf32> to vector<1x8x16xf32>
    %104 = vector.broadcast %103 : vector<1x8x16xf32> to vector<8x8x16xf32>
    %105 = arith.mulf %104, %37 : vector<8x8x16xf32>
    %106 = arith.addf %101, %105 : vector<8x8x16xf32>
    %107 = vector.extract_strided_slice %92 {offsets = [24, 0], sizes = [8, 16], strides = [1, 1]} : vector<32x16xf32> to vector<8x16xf32>
    %108 = vector.shape_cast %107 : vector<8x16xf32> to vector<1x8x16xf32>
    %109 = vector.broadcast %108 : vector<1x8x16xf32> to vector<8x8x16xf32>
    %110 = arith.mulf %109, %38 : vector<8x8x16xf32>
    %111 = arith.addf %106, %110 : vector<8x8x16xf32>
    %cst_40 = arith.constant dense<0xFF800000> : vector<8x16xf32>
    %112 = vector.multi_reduction <maximumf>, %111, %cst_40 [0] : vector<8x8x16xf32> to vector<8x16xf32>
    %113 = vector.shape_cast %112 : vector<8x16xf32> to vector<1x8x16xf32>
    %114 = vector.broadcast %113 : vector<1x8x16xf32> to vector<8x8x16xf32>
    %115 = arith.subf %111, %114 : vector<8x8x16xf32>
    %116 = math.exp %115 : vector<8x8x16xf32>
    %cst_41 = arith.constant dense<0.000000e+00> : vector<8x16xf32>
    %117 = vector.multi_reduction <add>, %116, %cst_41 [0] : vector<8x8x16xf32> to vector<8x16xf32>
    %118 = vector.shape_cast %117 : vector<8x16xf32> to vector<1x8x16xf32>
    %119 = tpu.reciprocal %118 {approx = true} : vector<1x8x16xf32> -> vector<1x8x16xf32>
    %120 = vector.broadcast %119 : vector<1x8x16xf32> to vector<8x8x16xf32>
    %121 = arith.mulf %116, %120 : vector<8x8x16xf32>
    %122 = arith.mulf %121, %39 : vector<8x8x16xf32>
    %cst_42 = arith.constant dense<0.000000e+00> : vector<8x16xf32>
    %123 = vector.multi_reduction <add>, %122, %cst_42 [0] : vector<8x8x16xf32> to vector<8x16xf32>
    %124 = arith.mulf %121, %40 : vector<8x8x16xf32>
    %cst_43 = arith.constant dense<0.000000e+00> : vector<8x16xf32>
    %125 = vector.multi_reduction <add>, %124, %cst_43 [0] : vector<8x8x16xf32> to vector<8x16xf32>
    %126 = arith.mulf %121, %41 : vector<8x8x16xf32>
    %cst_44 = arith.constant dense<0.000000e+00> : vector<8x16xf32>
    %127 = vector.multi_reduction <add>, %126, %cst_44 [0] : vector<8x8x16xf32> to vector<8x16xf32>
    %128 = arith.mulf %121, %42 : vector<8x8x16xf32>
    %cst_45 = arith.constant dense<0.000000e+00> : vector<8x16xf32>
    %129 = vector.multi_reduction <add>, %128, %cst_45 [0] : vector<8x8x16xf32> to vector<8x16xf32>
    %130 = tpu.concatenate %123, %125, %127, %129 in 0 : vector<8x16xf32>, vector<8x16xf32>, vector<8x16xf32>, vector<8x16xf32> -> vector<32x16xf32>
    %131 = arith.truncf %130 : vector<32x16xf32> to vector<32x16xbf16>
    %cst_46 = arith.constant dense<0.000000e+00> : vector<32x16xf32>
    %132 = tpu.matmul %33, %131, %cst_46 {dimension_numbers = #tpu.dot_dimension_numbers<[1], [0], [0], [1], [0, 0, 1, 1], [], []>} : vector<32x32xbf16>, vector<32x16xbf16>, vector<32x16xf32> -> vector<32x16xf32>
    %133 = vector.broadcast %34 : vector<32x1xf32> to vector<32x16xf32>
    %134 = arith.addf %132, %133 : vector<32x16xf32>
    %135 = tpu.transpose %134, [1, 0] : vector<32x16xf32> -> vector<16x32xf32>
    %c0_47 = arith.constant 0 : index
    %c1 = arith.constant 1 : index
    %c0_48 = arith.constant 0 : index
    %c0_49 = arith.constant 0 : index
    %136 = vector.load %arg13[%c0_47, %c1, %c0_48, %c0_49] : memref<1x8x16x32xf32, #tpu.memory_space<vmem>>, vector<1x1x16x32xf32>
    %137 = vector.shape_cast %136 : vector<1x1x16x32xf32> to vector<16x32xf32>
    %138 = vector.shape_cast %135 : vector<16x32xf32> to vector<1x1x16x32xf32>
    tpu.vector_store %arg13[%c0_47, %c1, %c0_48, %c0_49], %138 {strides = array<i32>} : memref<1x8x16x32xf32, #tpu.memory_space<vmem>>, vector<1x1x16x32xf32>,
    %139 = vector.extract_strided_slice %28 {offsets = [2, 0, 0], sizes = [1, 32, 16], strides = [1, 1, 1]} : vector<8x32x16xf32> to vector<1x32x16xf32>
    %140 = vector.shape_cast %139 : vector<1x32x16xf32> to vector<32x16xf32>
    %141 = vector.extract_strided_slice %140 {offsets = [0, 0], sizes = [8, 16], strides = [1, 1]} : vector<32x16xf32> to vector<8x16xf32>
    %142 = vector.shape_cast %141 : vector<8x16xf32> to vector<1x8x16xf32>
    %143 = vector.broadcast %142 : vector<1x8x16xf32> to vector<8x8x16xf32>
    %144 = arith.mulf %143, %35 : vector<8x8x16xf32>
    %145 = vector.extract_strided_slice %140 {offsets = [8, 0], sizes = [8, 16], strides = [1, 1]} : vector<32x16xf32> to vector<8x16xf32>
    %146 = vector.shape_cast %145 : vector<8x16xf32> to vector<1x8x16xf32>
    %147 = vector.broadcast %146 : vector<1x8x16xf32> to vector<8x8x16xf32>
    %148 = arith.mulf %147, %36 : vector<8x8x16xf32>
    %149 = arith.addf %144, %148 : vector<8x8x16xf32>
    %150 = vector.extract_strided_slice %140 {offsets = [16, 0], sizes = [8, 16], strides = [1, 1]} : vector<32x16xf32> to vector<8x16xf32>
    %151 = vector.shape_cast %150 : vector<8x16xf32> to vector<1x8x16xf32>
    %152 = vector.broadcast %151 : vector<1x8x16xf32> to vector<8x8x16xf32>
    %153 = arith.mulf %152, %37 : vector<8x8x16xf32>
    %154 = arith.addf %149, %153 : vector<8x8x16xf32>
    %155 = vector.extract_strided_slice %140 {offsets = [24, 0], sizes = [8, 16], strides = [1, 1]} : vector<32x16xf32> to vector<8x16xf32>
    %156 = vector.shape_cast %155 : vector<8x16xf32> to vector<1x8x16xf32>
    %157 = vector.broadcast %156 : vector<1x8x16xf32> to vector<8x8x16xf32>
    %158 = arith.mulf %157, %38 : vector<8x8x16xf32>
    %159 = arith.addf %154, %158 : vector<8x8x16xf32>
    %cst_50 = arith.constant dense<0xFF800000> : vector<8x16xf32>
    %160 = vector.multi_reduction <maximumf>, %159, %cst_50 [0] : vector<8x8x16xf32> to vector<8x16xf32>
    %161 = vector.shape_cast %160 : vector<8x16xf32> to vector<1x8x16xf32>
    %162 = vector.broadcast %161 : vector<1x8x16xf32> to vector<8x8x16xf32>
    %163 = arith.subf %159, %162 : vector<8x8x16xf32>
    %164 = math.exp %163 : vector<8x8x16xf32>
    %cst_51 = arith.constant dense<0.000000e+00> : vector<8x16xf32>
    %165 = vector.multi_reduction <add>, %164, %cst_51 [0] : vector<8x8x16xf32> to vector<8x16xf32>
    %166 = vector.shape_cast %165 : vector<8x16xf32> to vector<1x8x16xf32>
    %167 = tpu.reciprocal %166 {approx = true} : vector<1x8x16xf32> -> vector<1x8x16xf32>
    %168 = vector.broadcast %167 : vector<1x8x16xf32> to vector<8x8x16xf32>
    %169 = arith.mulf %164, %168 : vector<8x8x16xf32>
    %170 = arith.mulf %169, %39 : vector<8x8x16xf32>
    %cst_52 = arith.constant dense<0.000000e+00> : vector<8x16xf32>
    %171 = vector.multi_reduction <add>, %170, %cst_52 [0] : vector<8x8x16xf32> to vector<8x16xf32>
    %172 = arith.mulf %169, %40 : vector<8x8x16xf32>
    %cst_53 = arith.constant dense<0.000000e+00> : vector<8x16xf32>
    %173 = vector.multi_reduction <add>, %172, %cst_53 [0] : vector<8x8x16xf32> to vector<8x16xf32>
    %174 = arith.mulf %169, %41 : vector<8x8x16xf32>
    %cst_54 = arith.constant dense<0.000000e+00> : vector<8x16xf32>
    %175 = vector.multi_reduction <add>, %174, %cst_54 [0] : vector<8x8x16xf32> to vector<8x16xf32>
    %176 = arith.mulf %169, %42 : vector<8x8x16xf32>
    %cst_55 = arith.constant dense<0.000000e+00> : vector<8x16xf32>
    %177 = vector.multi_reduction <add>, %176, %cst_55 [0] : vector<8x8x16xf32> to vector<8x16xf32>
    %178 = tpu.concatenate %171, %173, %175, %177 in 0 : vector<8x16xf32>, vector<8x16xf32>, vector<8x16xf32>, vector<8x16xf32> -> vector<32x16xf32>
    %179 = arith.truncf %178 : vector<32x16xf32> to vector<32x16xbf16>
    %cst_56 = arith.constant dense<0.000000e+00> : vector<32x16xf32>
    %180 = tpu.matmul %33, %179, %cst_56 {dimension_numbers = #tpu.dot_dimension_numbers<[1], [0], [0], [1], [0, 0, 1, 1], [], []>} : vector<32x32xbf16>, vector<32x16xbf16>, vector<32x16xf32> -> vector<32x16xf32>
    %181 = vector.broadcast %34 : vector<32x1xf32> to vector<32x16xf32>
    %182 = arith.addf %180, %181 : vector<32x16xf32>
    %183 = tpu.transpose %182, [1, 0] : vector<32x16xf32> -> vector<16x32xf32>
    %c0_57 = arith.constant 0 : index
    %c2 = arith.constant 2 : index
    %c0_58 = arith.constant 0 : index
    %c0_59 = arith.constant 0 : index
    %184 = vector.load %arg13[%c0_57, %c2, %c0_58, %c0_59] : memref<1x8x16x32xf32, #tpu.memory_space<vmem>>, vector<1x1x16x32xf32>
    %185 = vector.shape_cast %184 : vector<1x1x16x32xf32> to vector<16x32xf32>
    %186 = vector.shape_cast %183 : vector<16x32xf32> to vector<1x1x16x32xf32>
    tpu.vector_store %arg13[%c0_57, %c2, %c0_58, %c0_59], %186 {strides = array<i32>} : memref<1x8x16x32xf32, #tpu.memory_space<vmem>>, vector<1x1x16x32xf32>,
    %187 = vector.extract_strided_slice %28 {offsets = [3, 0, 0], sizes = [1, 32, 16], strides = [1, 1, 1]} : vector<8x32x16xf32> to vector<1x32x16xf32>
    %188 = vector.shape_cast %187 : vector<1x32x16xf32> to vector<32x16xf32>
    %189 = vector.extract_strided_slice %188 {offsets = [0, 0], sizes = [8, 16], strides = [1, 1]} : vector<32x16xf32> to vector<8x16xf32>
    %190 = vector.shape_cast %189 : vector<8x16xf32> to vector<1x8x16xf32>
    %191 = vector.broadcast %190 : vector<1x8x16xf32> to vector<8x8x16xf32>
    %192 = arith.mulf %191, %35 : vector<8x8x16xf32>
    %193 = vector.extract_strided_slice %188 {offsets = [8, 0], sizes = [8, 16], strides = [1, 1]} : vector<32x16xf32> to vector<8x16xf32>
    %194 = vector.shape_cast %193 : vector<8x16xf32> to vector<1x8x16xf32>
    %195 = vector.broadcast %194 : vector<1x8x16xf32> to vector<8x8x16xf32>
    %196 = arith.mulf %195, %36 : vector<8x8x16xf32>
    %197 = arith.addf %192, %196 : vector<8x8x16xf32>
    %198 = vector.extract_strided_slice %188 {offsets = [16, 0], sizes = [8, 16], strides = [1, 1]} : vector<32x16xf32> to vector<8x16xf32>
    %199 = vector.shape_cast %198 : vector<8x16xf32> to vector<1x8x16xf32>
    %200 = vector.broadcast %199 : vector<1x8x16xf32> to vector<8x8x16xf32>
    %201 = arith.mulf %200, %37 : vector<8x8x16xf32>
    %202 = arith.addf %197, %201 : vector<8x8x16xf32>
    %203 = vector.extract_strided_slice %188 {offsets = [24, 0], sizes = [8, 16], strides = [1, 1]} : vector<32x16xf32> to vector<8x16xf32>
    %204 = vector.shape_cast %203 : vector<8x16xf32> to vector<1x8x16xf32>
    %205 = vector.broadcast %204 : vector<1x8x16xf32> to vector<8x8x16xf32>
    %206 = arith.mulf %205, %38 : vector<8x8x16xf32>
    %207 = arith.addf %202, %206 : vector<8x8x16xf32>
    %cst_60 = arith.constant dense<0xFF800000> : vector<8x16xf32>
    %208 = vector.multi_reduction <maximumf>, %207, %cst_60 [0] : vector<8x8x16xf32> to vector<8x16xf32>
    %209 = vector.shape_cast %208 : vector<8x16xf32> to vector<1x8x16xf32>
    %210 = vector.broadcast %209 : vector<1x8x16xf32> to vector<8x8x16xf32>
    %211 = arith.subf %207, %210 : vector<8x8x16xf32>
    %212 = math.exp %211 : vector<8x8x16xf32>
    %cst_61 = arith.constant dense<0.000000e+00> : vector<8x16xf32>
    %213 = vector.multi_reduction <add>, %212, %cst_61 [0] : vector<8x8x16xf32> to vector<8x16xf32>
    %214 = vector.shape_cast %213 : vector<8x16xf32> to vector<1x8x16xf32>
    %215 = tpu.reciprocal %214 {approx = true} : vector<1x8x16xf32> -> vector<1x8x16xf32>
    %216 = vector.broadcast %215 : vector<1x8x16xf32> to vector<8x8x16xf32>
    %217 = arith.mulf %212, %216 : vector<8x8x16xf32>
    %218 = arith.mulf %217, %39 : vector<8x8x16xf32>
    %cst_62 = arith.constant dense<0.000000e+00> : vector<8x16xf32>
    %219 = vector.multi_reduction <add>, %218, %cst_62 [0] : vector<8x8x16xf32> to vector<8x16xf32>
    %220 = arith.mulf %217, %40 : vector<8x8x16xf32>
    %cst_63 = arith.constant dense<0.000000e+00> : vector<8x16xf32>
    %221 = vector.multi_reduction <add>, %220, %cst_63 [0] : vector<8x8x16xf32> to vector<8x16xf32>
    %222 = arith.mulf %217, %41 : vector<8x8x16xf32>
    %cst_64 = arith.constant dense<0.000000e+00> : vector<8x16xf32>
    %223 = vector.multi_reduction <add>, %222, %cst_64 [0] : vector<8x8x16xf32> to vector<8x16xf32>
    %224 = arith.mulf %217, %42 : vector<8x8x16xf32>
    %cst_65 = arith.constant dense<0.000000e+00> : vector<8x16xf32>
    %225 = vector.multi_reduction <add>, %224, %cst_65 [0] : vector<8x8x16xf32> to vector<8x16xf32>
    %226 = tpu.concatenate %219, %221, %223, %225 in 0 : vector<8x16xf32>, vector<8x16xf32>, vector<8x16xf32>, vector<8x16xf32> -> vector<32x16xf32>
    %227 = arith.truncf %226 : vector<32x16xf32> to vector<32x16xbf16>
    %cst_66 = arith.constant dense<0.000000e+00> : vector<32x16xf32>
    %228 = tpu.matmul %33, %227, %cst_66 {dimension_numbers = #tpu.dot_dimension_numbers<[1], [0], [0], [1], [0, 0, 1, 1], [], []>} : vector<32x32xbf16>, vector<32x16xbf16>, vector<32x16xf32> -> vector<32x16xf32>
    %229 = vector.broadcast %34 : vector<32x1xf32> to vector<32x16xf32>
    %230 = arith.addf %228, %229 : vector<32x16xf32>
    %231 = tpu.transpose %230, [1, 0] : vector<32x16xf32> -> vector<16x32xf32>
    %c0_67 = arith.constant 0 : index
    %c3 = arith.constant 3 : index
    %c0_68 = arith.constant 0 : index
    %c0_69 = arith.constant 0 : index
    %232 = vector.load %arg13[%c0_67, %c3, %c0_68, %c0_69] : memref<1x8x16x32xf32, #tpu.memory_space<vmem>>, vector<1x1x16x32xf32>
    %233 = vector.shape_cast %232 : vector<1x1x16x32xf32> to vector<16x32xf32>
    %234 = vector.shape_cast %231 : vector<16x32xf32> to vector<1x1x16x32xf32>
    tpu.vector_store %arg13[%c0_67, %c3, %c0_68, %c0_69], %234 {strides = array<i32>} : memref<1x8x16x32xf32, #tpu.memory_space<vmem>>, vector<1x1x16x32xf32>,
    %235 = vector.extract_strided_slice %28 {offsets = [4, 0, 0], sizes = [1, 32, 16], strides = [1, 1, 1]} : vector<8x32x16xf32> to vector<1x32x16xf32>
    %236 = vector.shape_cast %235 : vector<1x32x16xf32> to vector<32x16xf32>
    %237 = vector.extract_strided_slice %236 {offsets = [0, 0], sizes = [8, 16], strides = [1, 1]} : vector<32x16xf32> to vector<8x16xf32>
    %238 = vector.shape_cast %237 : vector<8x16xf32> to vector<1x8x16xf32>
    %239 = vector.broadcast %238 : vector<1x8x16xf32> to vector<8x8x16xf32>
    %240 = arith.mulf %239, %35 : vector<8x8x16xf32>
    %241 = vector.extract_strided_slice %236 {offsets = [8, 0], sizes = [8, 16], strides = [1, 1]} : vector<32x16xf32> to vector<8x16xf32>
    %242 = vector.shape_cast %241 : vector<8x16xf32> to vector<1x8x16xf32>
    %243 = vector.broadcast %242 : vector<1x8x16xf32> to vector<8x8x16xf32>
    %244 = arith.mulf %243, %36 : vector<8x8x16xf32>
    %245 = arith.addf %240, %244 : vector<8x8x16xf32>
    %246 = vector.extract_strided_slice %236 {offsets = [16, 0], sizes = [8, 16], strides = [1, 1]} : vector<32x16xf32> to vector<8x16xf32>
    %247 = vector.shape_cast %246 : vector<8x16xf32> to vector<1x8x16xf32>
    %248 = vector.broadcast %247 : vector<1x8x16xf32> to vector<8x8x16xf32>
    %249 = arith.mulf %248, %37 : vector<8x8x16xf32>
    %250 = arith.addf %245, %249 : vector<8x8x16xf32>
    %251 = vector.extract_strided_slice %236 {offsets = [24, 0], sizes = [8, 16], strides = [1, 1]} : vector<32x16xf32> to vector<8x16xf32>
    %252 = vector.shape_cast %251 : vector<8x16xf32> to vector<1x8x16xf32>
    %253 = vector.broadcast %252 : vector<1x8x16xf32> to vector<8x8x16xf32>
    %254 = arith.mulf %253, %38 : vector<8x8x16xf32>
    %255 = arith.addf %250, %254 : vector<8x8x16xf32>
    %cst_70 = arith.constant dense<0xFF800000> : vector<8x16xf32>
    %256 = vector.multi_reduction <maximumf>, %255, %cst_70 [0] : vector<8x8x16xf32> to vector<8x16xf32>
    %257 = vector.shape_cast %256 : vector<8x16xf32> to vector<1x8x16xf32>
    %258 = vector.broadcast %257 : vector<1x8x16xf32> to vector<8x8x16xf32>
    %259 = arith.subf %255, %258 : vector<8x8x16xf32>
    %260 = math.exp %259 : vector<8x8x16xf32>
    %cst_71 = arith.constant dense<0.000000e+00> : vector<8x16xf32>
    %261 = vector.multi_reduction <add>, %260, %cst_71 [0] : vector<8x8x16xf32> to vector<8x16xf32>
    %262 = vector.shape_cast %261 : vector<8x16xf32> to vector<1x8x16xf32>
    %263 = tpu.reciprocal %262 {approx = true} : vector<1x8x16xf32> -> vector<1x8x16xf32>
    %264 = vector.broadcast %263 : vector<1x8x16xf32> to vector<8x8x16xf32>
    %265 = arith.mulf %260, %264 : vector<8x8x16xf32>
    %266 = arith.mulf %265, %39 : vector<8x8x16xf32>
    %cst_72 = arith.constant dense<0.000000e+00> : vector<8x16xf32>
    %267 = vector.multi_reduction <add>, %266, %cst_72 [0] : vector<8x8x16xf32> to vector<8x16xf32>
    %268 = arith.mulf %265, %40 : vector<8x8x16xf32>
    %cst_73 = arith.constant dense<0.000000e+00> : vector<8x16xf32>
    %269 = vector.multi_reduction <add>, %268, %cst_73 [0] : vector<8x8x16xf32> to vector<8x16xf32>
    %270 = arith.mulf %265, %41 : vector<8x8x16xf32>
    %cst_74 = arith.constant dense<0.000000e+00> : vector<8x16xf32>
    %271 = vector.multi_reduction <add>, %270, %cst_74 [0] : vector<8x8x16xf32> to vector<8x16xf32>
    %272 = arith.mulf %265, %42 : vector<8x8x16xf32>
    %cst_75 = arith.constant dense<0.000000e+00> : vector<8x16xf32>
    %273 = vector.multi_reduction <add>, %272, %cst_75 [0] : vector<8x8x16xf32> to vector<8x16xf32>
    %274 = tpu.concatenate %267, %269, %271, %273 in 0 : vector<8x16xf32>, vector<8x16xf32>, vector<8x16xf32>, vector<8x16xf32> -> vector<32x16xf32>
    %275 = arith.truncf %274 : vector<32x16xf32> to vector<32x16xbf16>
    %cst_76 = arith.constant dense<0.000000e+00> : vector<32x16xf32>
    %276 = tpu.matmul %33, %275, %cst_76 {dimension_numbers = #tpu.dot_dimension_numbers<[1], [0], [0], [1], [0, 0, 1, 1], [], []>} : vector<32x32xbf16>, vector<32x16xbf16>, vector<32x16xf32> -> vector<32x16xf32>
    %277 = vector.broadcast %34 : vector<32x1xf32> to vector<32x16xf32>
    %278 = arith.addf %276, %277 : vector<32x16xf32>
    %279 = tpu.transpose %278, [1, 0] : vector<32x16xf32> -> vector<16x32xf32>
    %c0_77 = arith.constant 0 : index
    %c4 = arith.constant 4 : index
    %c0_78 = arith.constant 0 : index
    %c0_79 = arith.constant 0 : index
    %280 = vector.load %arg13[%c0_77, %c4, %c0_78, %c0_79] : memref<1x8x16x32xf32, #tpu.memory_space<vmem>>, vector<1x1x16x32xf32>
    %281 = vector.shape_cast %280 : vector<1x1x16x32xf32> to vector<16x32xf32>
    %282 = vector.shape_cast %279 : vector<16x32xf32> to vector<1x1x16x32xf32>
    tpu.vector_store %arg13[%c0_77, %c4, %c0_78, %c0_79], %282 {strides = array<i32>} : memref<1x8x16x32xf32, #tpu.memory_space<vmem>>, vector<1x1x16x32xf32>,
    %283 = vector.extract_strided_slice %28 {offsets = [5, 0, 0], sizes = [1, 32, 16], strides = [1, 1, 1]} : vector<8x32x16xf32> to vector<1x32x16xf32>
    %284 = vector.shape_cast %283 : vector<1x32x16xf32> to vector<32x16xf32>
    %285 = vector.extract_strided_slice %284 {offsets = [0, 0], sizes = [8, 16], strides = [1, 1]} : vector<32x16xf32> to vector<8x16xf32>
    %286 = vector.shape_cast %285 : vector<8x16xf32> to vector<1x8x16xf32>
    %287 = vector.broadcast %286 : vector<1x8x16xf32> to vector<8x8x16xf32>
    %288 = arith.mulf %287, %35 : vector<8x8x16xf32>
    %289 = vector.extract_strided_slice %284 {offsets = [8, 0], sizes = [8, 16], strides = [1, 1]} : vector<32x16xf32> to vector<8x16xf32>
    %290 = vector.shape_cast %289 : vector<8x16xf32> to vector<1x8x16xf32>
    %291 = vector.broadcast %290 : vector<1x8x16xf32> to vector<8x8x16xf32>
    %292 = arith.mulf %291, %36 : vector<8x8x16xf32>
    %293 = arith.addf %288, %292 : vector<8x8x16xf32>
    %294 = vector.extract_strided_slice %284 {offsets = [16, 0], sizes = [8, 16], strides = [1, 1]} : vector<32x16xf32> to vector<8x16xf32>
    %295 = vector.shape_cast %294 : vector<8x16xf32> to vector<1x8x16xf32>
    %296 = vector.broadcast %295 : vector<1x8x16xf32> to vector<8x8x16xf32>
    %297 = arith.mulf %296, %37 : vector<8x8x16xf32>
    %298 = arith.addf %293, %297 : vector<8x8x16xf32>
    %299 = vector.extract_strided_slice %284 {offsets = [24, 0], sizes = [8, 16], strides = [1, 1]} : vector<32x16xf32> to vector<8x16xf32>
    %300 = vector.shape_cast %299 : vector<8x16xf32> to vector<1x8x16xf32>
    %301 = vector.broadcast %300 : vector<1x8x16xf32> to vector<8x8x16xf32>
    %302 = arith.mulf %301, %38 : vector<8x8x16xf32>
    %303 = arith.addf %298, %302 : vector<8x8x16xf32>
    %cst_80 = arith.constant dense<0xFF800000> : vector<8x16xf32>
    %304 = vector.multi_reduction <maximumf>, %303, %cst_80 [0] : vector<8x8x16xf32> to vector<8x16xf32>
    %305 = vector.shape_cast %304 : vector<8x16xf32> to vector<1x8x16xf32>
    %306 = vector.broadcast %305 : vector<1x8x16xf32> to vector<8x8x16xf32>
    %307 = arith.subf %303, %306 : vector<8x8x16xf32>
    %308 = math.exp %307 : vector<8x8x16xf32>
    %cst_81 = arith.constant dense<0.000000e+00> : vector<8x16xf32>
    %309 = vector.multi_reduction <add>, %308, %cst_81 [0] : vector<8x8x16xf32> to vector<8x16xf32>
    %310 = vector.shape_cast %309 : vector<8x16xf32> to vector<1x8x16xf32>
    %311 = tpu.reciprocal %310 {approx = true} : vector<1x8x16xf32> -> vector<1x8x16xf32>
    %312 = vector.broadcast %311 : vector<1x8x16xf32> to vector<8x8x16xf32>
    %313 = arith.mulf %308, %312 : vector<8x8x16xf32>
    %314 = arith.mulf %313, %39 : vector<8x8x16xf32>
    %cst_82 = arith.constant dense<0.000000e+00> : vector<8x16xf32>
    %315 = vector.multi_reduction <add>, %314, %cst_82 [0] : vector<8x8x16xf32> to vector<8x16xf32>
    %316 = arith.mulf %313, %40 : vector<8x8x16xf32>
    %cst_83 = arith.constant dense<0.000000e+00> : vector<8x16xf32>
    %317 = vector.multi_reduction <add>, %316, %cst_83 [0] : vector<8x8x16xf32> to vector<8x16xf32>
    %318 = arith.mulf %313, %41 : vector<8x8x16xf32>
    %cst_84 = arith.constant dense<0.000000e+00> : vector<8x16xf32>
    %319 = vector.multi_reduction <add>, %318, %cst_84 [0] : vector<8x8x16xf32> to vector<8x16xf32>
    %320 = arith.mulf %313, %42 : vector<8x8x16xf32>
    %cst_85 = arith.constant dense<0.000000e+00> : vector<8x16xf32>
    %321 = vector.multi_reduction <add>, %320, %cst_85 [0] : vector<8x8x16xf32> to vector<8x16xf32>
    %322 = tpu.concatenate %315, %317, %319, %321 in 0 : vector<8x16xf32>, vector<8x16xf32>, vector<8x16xf32>, vector<8x16xf32> -> vector<32x16xf32>
    %323 = arith.truncf %322 : vector<32x16xf32> to vector<32x16xbf16>
    %cst_86 = arith.constant dense<0.000000e+00> : vector<32x16xf32>
    %324 = tpu.matmul %33, %323, %cst_86 {dimension_numbers = #tpu.dot_dimension_numbers<[1], [0], [0], [1], [0, 0, 1, 1], [], []>} : vector<32x32xbf16>, vector<32x16xbf16>, vector<32x16xf32> -> vector<32x16xf32>
    %325 = vector.broadcast %34 : vector<32x1xf32> to vector<32x16xf32>
    %326 = arith.addf %324, %325 : vector<32x16xf32>
    %327 = tpu.transpose %326, [1, 0] : vector<32x16xf32> -> vector<16x32xf32>
    %c0_87 = arith.constant 0 : index
    %c5 = arith.constant 5 : index
    %c0_88 = arith.constant 0 : index
    %c0_89 = arith.constant 0 : index
    %328 = vector.load %arg13[%c0_87, %c5, %c0_88, %c0_89] : memref<1x8x16x32xf32, #tpu.memory_space<vmem>>, vector<1x1x16x32xf32>
    %329 = vector.shape_cast %328 : vector<1x1x16x32xf32> to vector<16x32xf32>
    %330 = vector.shape_cast %327 : vector<16x32xf32> to vector<1x1x16x32xf32>
    tpu.vector_store %arg13[%c0_87, %c5, %c0_88, %c0_89], %330 {strides = array<i32>} : memref<1x8x16x32xf32, #tpu.memory_space<vmem>>, vector<1x1x16x32xf32>,
    %331 = vector.extract_strided_slice %28 {offsets = [6, 0, 0], sizes = [1, 32, 16], strides = [1, 1, 1]} : vector<8x32x16xf32> to vector<1x32x16xf32>
    %332 = vector.shape_cast %331 : vector<1x32x16xf32> to vector<32x16xf32>
    %333 = vector.extract_strided_slice %332 {offsets = [0, 0], sizes = [8, 16], strides = [1, 1]} : vector<32x16xf32> to vector<8x16xf32>
    %334 = vector.shape_cast %333 : vector<8x16xf32> to vector<1x8x16xf32>
    %335 = vector.broadcast %334 : vector<1x8x16xf32> to vector<8x8x16xf32>
    %336 = arith.mulf %335, %35 : vector<8x8x16xf32>
    %337 = vector.extract_strided_slice %332 {offsets = [8, 0], sizes = [8, 16], strides = [1, 1]} : vector<32x16xf32> to vector<8x16xf32>
    %338 = vector.shape_cast %337 : vector<8x16xf32> to vector<1x8x16xf32>
    %339 = vector.broadcast %338 : vector<1x8x16xf32> to vector<8x8x16xf32>
    %340 = arith.mulf %339, %36 : vector<8x8x16xf32>
    %341 = arith.addf %336, %340 : vector<8x8x16xf32>
    %342 = vector.extract_strided_slice %332 {offsets = [16, 0], sizes = [8, 16], strides = [1, 1]} : vector<32x16xf32> to vector<8x16xf32>
    %343 = vector.shape_cast %342 : vector<8x16xf32> to vector<1x8x16xf32>
    %344 = vector.broadcast %343 : vector<1x8x16xf32> to vector<8x8x16xf32>
    %345 = arith.mulf %344, %37 : vector<8x8x16xf32>
    %346 = arith.addf %341, %345 : vector<8x8x16xf32>
    %347 = vector.extract_strided_slice %332 {offsets = [24, 0], sizes = [8, 16], strides = [1, 1]} : vector<32x16xf32> to vector<8x16xf32>
    %348 = vector.shape_cast %347 : vector<8x16xf32> to vector<1x8x16xf32>
    %349 = vector.broadcast %348 : vector<1x8x16xf32> to vector<8x8x16xf32>
    %350 = arith.mulf %349, %38 : vector<8x8x16xf32>
    %351 = arith.addf %346, %350 : vector<8x8x16xf32>
    %cst_90 = arith.constant dense<0xFF800000> : vector<8x16xf32>
    %352 = vector.multi_reduction <maximumf>, %351, %cst_90 [0] : vector<8x8x16xf32> to vector<8x16xf32>
    %353 = vector.shape_cast %352 : vector<8x16xf32> to vector<1x8x16xf32>
    %354 = vector.broadcast %353 : vector<1x8x16xf32> to vector<8x8x16xf32>
    %355 = arith.subf %351, %354 : vector<8x8x16xf32>
    %356 = math.exp %355 : vector<8x8x16xf32>
    %cst_91 = arith.constant dense<0.000000e+00> : vector<8x16xf32>
    %357 = vector.multi_reduction <add>, %356, %cst_91 [0] : vector<8x8x16xf32> to vector<8x16xf32>
    %358 = vector.shape_cast %357 : vector<8x16xf32> to vector<1x8x16xf32>
    %359 = tpu.reciprocal %358 {approx = true} : vector<1x8x16xf32> -> vector<1x8x16xf32>
    %360 = vector.broadcast %359 : vector<1x8x16xf32> to vector<8x8x16xf32>
    %361 = arith.mulf %356, %360 : vector<8x8x16xf32>
    %362 = arith.mulf %361, %39 : vector<8x8x16xf32>
    %cst_92 = arith.constant dense<0.000000e+00> : vector<8x16xf32>
    %363 = vector.multi_reduction <add>, %362, %cst_92 [0] : vector<8x8x16xf32> to vector<8x16xf32>
    %364 = arith.mulf %361, %40 : vector<8x8x16xf32>
    %cst_93 = arith.constant dense<0.000000e+00> : vector<8x16xf32>
    %365 = vector.multi_reduction <add>, %364, %cst_93 [0] : vector<8x8x16xf32> to vector<8x16xf32>
    %366 = arith.mulf %361, %41 : vector<8x8x16xf32>
    %cst_94 = arith.constant dense<0.000000e+00> : vector<8x16xf32>
    %367 = vector.multi_reduction <add>, %366, %cst_94 [0] : vector<8x8x16xf32> to vector<8x16xf32>
    %368 = arith.mulf %361, %42 : vector<8x8x16xf32>
    %cst_95 = arith.constant dense<0.000000e+00> : vector<8x16xf32>
    %369 = vector.multi_reduction <add>, %368, %cst_95 [0] : vector<8x8x16xf32> to vector<8x16xf32>
    %370 = tpu.concatenate %363, %365, %367, %369 in 0 : vector<8x16xf32>, vector<8x16xf32>, vector<8x16xf32>, vector<8x16xf32> -> vector<32x16xf32>
    %371 = arith.truncf %370 : vector<32x16xf32> to vector<32x16xbf16>
    %cst_96 = arith.constant dense<0.000000e+00> : vector<32x16xf32>
    %372 = tpu.matmul %33, %371, %cst_96 {dimension_numbers = #tpu.dot_dimension_numbers<[1], [0], [0], [1], [0, 0, 1, 1], [], []>} : vector<32x32xbf16>, vector<32x16xbf16>, vector<32x16xf32> -> vector<32x16xf32>
    %373 = vector.broadcast %34 : vector<32x1xf32> to vector<32x16xf32>
    %374 = arith.addf %372, %373 : vector<32x16xf32>
    %375 = tpu.transpose %374, [1, 0] : vector<32x16xf32> -> vector<16x32xf32>
    %c0_97 = arith.constant 0 : index
    %c6 = arith.constant 6 : index
    %c0_98 = arith.constant 0 : index
    %c0_99 = arith.constant 0 : index
    %376 = vector.load %arg13[%c0_97, %c6, %c0_98, %c0_99] : memref<1x8x16x32xf32, #tpu.memory_space<vmem>>, vector<1x1x16x32xf32>
    %377 = vector.shape_cast %376 : vector<1x1x16x32xf32> to vector<16x32xf32>
    %378 = vector.shape_cast %375 : vector<16x32xf32> to vector<1x1x16x32xf32>
    tpu.vector_store %arg13[%c0_97, %c6, %c0_98, %c0_99], %378 {strides = array<i32>} : memref<1x8x16x32xf32, #tpu.memory_space<vmem>>, vector<1x1x16x32xf32>,
    %379 = vector.extract_strided_slice %28 {offsets = [7, 0, 0], sizes = [1, 32, 16], strides = [1, 1, 1]} : vector<8x32x16xf32> to vector<1x32x16xf32>
    %380 = vector.shape_cast %379 : vector<1x32x16xf32> to vector<32x16xf32>
    %381 = vector.extract_strided_slice %380 {offsets = [0, 0], sizes = [8, 16], strides = [1, 1]} : vector<32x16xf32> to vector<8x16xf32>
    %382 = vector.shape_cast %381 : vector<8x16xf32> to vector<1x8x16xf32>
    %383 = vector.broadcast %382 : vector<1x8x16xf32> to vector<8x8x16xf32>
    %384 = arith.mulf %383, %35 : vector<8x8x16xf32>
    %385 = vector.extract_strided_slice %380 {offsets = [8, 0], sizes = [8, 16], strides = [1, 1]} : vector<32x16xf32> to vector<8x16xf32>
    %386 = vector.shape_cast %385 : vector<8x16xf32> to vector<1x8x16xf32>
    %387 = vector.broadcast %386 : vector<1x8x16xf32> to vector<8x8x16xf32>
    %388 = arith.mulf %387, %36 : vector<8x8x16xf32>
    %389 = arith.addf %384, %388 : vector<8x8x16xf32>
    %390 = vector.extract_strided_slice %380 {offsets = [16, 0], sizes = [8, 16], strides = [1, 1]} : vector<32x16xf32> to vector<8x16xf32>
    %391 = vector.shape_cast %390 : vector<8x16xf32> to vector<1x8x16xf32>
    %392 = vector.broadcast %391 : vector<1x8x16xf32> to vector<8x8x16xf32>
    %393 = arith.mulf %392, %37 : vector<8x8x16xf32>
    %394 = arith.addf %389, %393 : vector<8x8x16xf32>
    %395 = vector.extract_strided_slice %380 {offsets = [24, 0], sizes = [8, 16], strides = [1, 1]} : vector<32x16xf32> to vector<8x16xf32>
    %396 = vector.shape_cast %395 : vector<8x16xf32> to vector<1x8x16xf32>
    %397 = vector.broadcast %396 : vector<1x8x16xf32> to vector<8x8x16xf32>
    %398 = arith.mulf %397, %38 : vector<8x8x16xf32>
    %399 = arith.addf %394, %398 : vector<8x8x16xf32>
    %cst_100 = arith.constant dense<0xFF800000> : vector<8x16xf32>
    %400 = vector.multi_reduction <maximumf>, %399, %cst_100 [0] : vector<8x8x16xf32> to vector<8x16xf32>
    %401 = vector.shape_cast %400 : vector<8x16xf32> to vector<1x8x16xf32>
    %402 = vector.broadcast %401 : vector<1x8x16xf32> to vector<8x8x16xf32>
    %403 = arith.subf %399, %402 : vector<8x8x16xf32>
    %404 = math.exp %403 : vector<8x8x16xf32>
    %cst_101 = arith.constant dense<0.000000e+00> : vector<8x16xf32>
    %405 = vector.multi_reduction <add>, %404, %cst_101 [0] : vector<8x8x16xf32> to vector<8x16xf32>
    %406 = vector.shape_cast %405 : vector<8x16xf32> to vector<1x8x16xf32>
    %407 = tpu.reciprocal %406 {approx = true} : vector<1x8x16xf32> -> vector<1x8x16xf32>
    %408 = vector.broadcast %407 : vector<1x8x16xf32> to vector<8x8x16xf32>
    %409 = arith.mulf %404, %408 : vector<8x8x16xf32>
    %410 = arith.mulf %409, %39 : vector<8x8x16xf32>
    %cst_102 = arith.constant dense<0.000000e+00> : vector<8x16xf32>
    %411 = vector.multi_reduction <add>, %410, %cst_102 [0] : vector<8x8x16xf32> to vector<8x16xf32>
    %412 = arith.mulf %409, %40 : vector<8x8x16xf32>
    %cst_103 = arith.constant dense<0.000000e+00> : vector<8x16xf32>
    %413 = vector.multi_reduction <add>, %412, %cst_103 [0] : vector<8x8x16xf32> to vector<8x16xf32>
    %414 = arith.mulf %409, %41 : vector<8x8x16xf32>
    %cst_104 = arith.constant dense<0.000000e+00> : vector<8x16xf32>
    %415 = vector.multi_reduction <add>, %414, %cst_104 [0] : vector<8x8x16xf32> to vector<8x16xf32>
    %416 = arith.mulf %409, %42 : vector<8x8x16xf32>
    %cst_105 = arith.constant dense<0.000000e+00> : vector<8x16xf32>
    %417 = vector.multi_reduction <add>, %416, %cst_105 [0] : vector<8x8x16xf32> to vector<8x16xf32>
    %418 = tpu.concatenate %411, %413, %415, %417 in 0 : vector<8x16xf32>, vector<8x16xf32>, vector<8x16xf32>, vector<8x16xf32> -> vector<32x16xf32>
    %419 = arith.truncf %418 : vector<32x16xf32> to vector<32x16xbf16>
    %cst_106 = arith.constant dense<0.000000e+00> : vector<32x16xf32>
    %420 = tpu.matmul %33, %419, %cst_106 {dimension_numbers = #tpu.dot_dimension_numbers<[1], [0], [0], [1], [0, 0, 1, 1], [], []>} : vector<32x32xbf16>, vector<32x16xbf16>, vector<32x16xf32> -> vector<32x16xf32>
    %421 = vector.broadcast %34 : vector<32x1xf32> to vector<32x16xf32>
    %422 = arith.addf %420, %421 : vector<32x16xf32>
    %423 = tpu.transpose %422, [1, 0] : vector<32x16xf32> -> vector<16x32xf32>
    %c0_107 = arith.constant 0 : index
    %c7 = arith.constant 7 : index
    %c0_108 = arith.constant 0 : index
    %c0_109 = arith.constant 0 : index
    %424 = vector.load %arg13[%c0_107, %c7, %c0_108, %c0_109] : memref<1x8x16x32xf32, #tpu.memory_space<vmem>>, vector<1x1x16x32xf32>
    %425 = vector.shape_cast %424 : vector<1x1x16x32xf32> to vector<16x32xf32>
    %426 = vector.shape_cast %423 : vector<16x32xf32> to vector<1x1x16x32xf32>
    tpu.vector_store %arg13[%c0_107, %c7, %c0_108, %c0_109], %426 {strides = array<i32>} : memref<1x8x16x32xf32, #tpu.memory_space<vmem>>, vector<1x1x16x32xf32>,
    return
  }
  func.func @transform_0(%arg0: i32, %arg1: i32) -> (i32, i32, i32, i32) {
    %c0_i32 = arith.constant 0 : i32
    %c0_i32_0 = arith.constant 0 : i32
    %c0_i32_1 = arith.constant 0 : i32
    return %arg0, %c0_i32, %arg1, %c0_i32_0 : i32, i32, i32, i32
  }
  func.func @transform_1(%arg0: i32, %arg1: i32) -> (i32, i32, i32, i32) {
    %c0_i32 = arith.constant 0 : i32
    %c0_i32_0 = arith.constant 0 : i32
    %c0_i32_1 = arith.constant 0 : i32
    return %arg0, %c0_i32, %arg1, %c0_i32_0 : i32, i32, i32, i32
  }
  func.func @transform_2(%arg0: i32, %arg1: i32) -> (i32, i32, i32, i32) {
    %c0_i32 = arith.constant 0 : i32
    %c0_i32_0 = arith.constant 0 : i32
    %c0_i32_1 = arith.constant 0 : i32
    return %arg0, %c0_i32, %arg1, %c0_i32_0 : i32, i32, i32, i32
  }
  func.func @transform_3(%arg0: i32, %arg1: i32) -> (i32, i32) {
    %c0_i32 = arith.constant 0 : i32
    %c0_i32_0 = arith.constant 0 : i32
    %c0_i32_1 = arith.constant 0 : i32
    return %c0_i32, %c0_i32_0 : i32, i32
  }
  func.func @transform_4(%arg0: i32, %arg1: i32) -> (i32, i32) {
    %c0_i32 = arith.constant 0 : i32
    %c0_i32_0 = arith.constant 0 : i32
    %c0_i32_1 = arith.constant 0 : i32
    return %c0_i32, %c0_i32_0 : i32, i32
  }
  func.func @transform_5(%arg0: i32, %arg1: i32) -> (i32, i32) {
    %c0_i32 = arith.constant 0 : i32
    %c0_i32_0 = arith.constant 0 : i32
    %c0_i32_1 = arith.constant 0 : i32
    return %c0_i32, %c0_i32_0 : i32, i32
  }
  func.func @transform_6(%arg0: i32, %arg1: i32) -> (i32, i32) {
    %c0_i32 = arith.constant 0 : i32
    %c0_i32_0 = arith.constant 0 : i32
    %c0_i32_1 = arith.constant 0 : i32
    return %c0_i32, %c0_i32_0 : i32, i32
  }
  func.func @transform_7(%arg0: i32, %arg1: i32) -> (i32, i32) {
    %c0_i32 = arith.constant 0 : i32
    %c0_i32_0 = arith.constant 0 : i32
    %c0_i32_1 = arith.constant 0 : i32
    return %c0_i32, %c0_i32_0 : i32, i32
  }
  func.func @transform_8(%arg0: i32, %arg1: i32) -> (i32, i32) {
    %c0_i32 = arith.constant 0 : i32
    %c0_i32_0 = arith.constant 0 : i32
    %c0_i32_1 = arith.constant 0 : i32
    return %c0_i32, %c0_i32_0 : i32, i32
  }
  func.func @transform_9(%arg0: i32, %arg1: i32) -> (i32, i32) {
    %c0_i32 = arith.constant 0 : i32
    %c0_i32_0 = arith.constant 0 : i32
    %c0_i32_1 = arith.constant 0 : i32
    return %c0_i32, %c0_i32_0 : i32, i32
  }
  func.func @transform_10(%arg0: i32, %arg1: i32) -> (i32, i32) {
    %c0_i32 = arith.constant 0 : i32
    %c0_i32_0 = arith.constant 0 : i32
    %c0_i32_1 = arith.constant 0 : i32
    return %c0_i32, %c0_i32_0 : i32, i32
  }
  func.func @transform_11(%arg0: i32, %arg1: i32) -> (i32, i32, i32, i32) {
    %c0_i32 = arith.constant 0 : i32
    %c0_i32_0 = arith.constant 0 : i32
    %c0_i32_1 = arith.constant 0 : i32
    return %arg0, %c0_i32, %arg1, %c0_i32_0 : i32, i32, i32, i32
  }
}

</mosaic_0001>

<llo_original>
// kernel: tpu_custom_call.1
$region0: #{tpu_custom_call.1}
  #allocation0 [shape = 'u32[]', space=smem, size = 0x4, offset = 0x4, fixed_abs, tag = 'smem constant byte address 0x4 - core index']
  #allocation1 [shape = 'u32[144,128]{1,0:T(1,128)}', space=vmem, size = 0x12000, scoped, tag = 'internal scratch']
  %s0 = inlined_call_operand.hbm [shape: f32[2,8,16,32], index: 0, kind: input, shape index: {}]
  %s1 = inlined_call_operand.hbm [shape: f32[2,8,16,32], index: 1, kind: input, shape index: {}]
  %s2 = inlined_call_operand.hbm [shape: f32[2,8,16,32], index: 2, kind: input, shape index: {}]
  %s3 = inlined_call_operand.vmem [shape: bf16[32,32], index: 3, kind: input, shape index: {}]
  %s4 = inlined_call_operand.hbm [shape: f32[1,32], index: 4, kind: input, shape index: {}]
  %s5 = inlined_call_operand.vmem [shape: bf16[32,32], index: 5, kind: input, shape index: {}]
  %s6 = inlined_call_operand.vmem [shape: f32[1,32], index: 6, kind: input, shape index: {}]
  %s7 = inlined_call_operand.vmem [shape: bf16[32,32], index: 7, kind: input, shape index: {}]
  %s8 = inlined_call_operand.vmem [shape: f32[1,32], index: 8, kind: input, shape index: {}]
  %s9 = inlined_call_operand.vmem [shape: bf16[32,32], index: 9, kind: input, shape index: {}]
  %s10 = inlined_call_operand.vmem [shape: f32[32,1], index: 10, kind: input, shape index: {}]
  %s11 = inlined_call_operand.hbm [shape: f32[2,8,16,32], index: 11, kind: output, shape index: {}]
  %s12 = sld [smem:[#allocation0]]
  $region93: #{tpu_custom_call.1} parent=0
    _
  %s14 = ssub.s32 1, %s12
  %s15 = scalar_select 0, %s14, %s12
  $region1: #{tpu_custom_call.1} parent=0
    #allocation2 [shape = 'u8[131072]{0}', space=vmem, size = 0x20000, scoped, tag = 'input window, operand 0']
    #allocation3 [shape = 's32[2]{0}', space=sflag, size = 0x8, scoped, tag = 'scoped memory for tpu_custom_call.1']
    #allocation4 [shape = 's32[2]{0}', space=sflag, size = 0x8, scoped, tag = 'scoped memory for tpu_custom_call.1']
    #allocation5 [shape = 'u8[131072]{0}', space=vmem, size = 0x20000, scoped, tag = 'input window, operand 1']
    #allocation6 [shape = 's32[2]{0}', space=sflag, size = 0x8, scoped, tag = 'scoped memory for tpu_custom_call.1']
    #allocation7 [shape = 'u8[131072]{0}', space=vmem, size = 0x20000, scoped, tag = 'input window, operand 2']
    #allocation8 [shape = 'u8[512]{0}', space=vmem, size = 0x400, scoped, tag = 'input window, operand 4, single buffered']
    #allocation9 [shape = 's32[1]{0}', space=sflag, size = 0x4, scoped, tag = 'scoped memory for tpu_custom_call.1']
    #allocation10 [shape = 'u8[131072]{0}', space=vmem, size = 0x20000, scoped, tag = 'output window, operand 0']
    %16 = vsyncpa [#allocation3], 0
    %s17 = scalar_lea.sflag [#allocation3], 1
    %18 = vsyncpa %s17, 0
    %19 = vsyncpa [#allocation6], 0
    %s20 = scalar_lea.sflag [#allocation6], 1
    %21 = vsyncpa %s20, 0
    %22 = vsyncpa [#allocation9], 0
    %23 = vsyncpa [#allocation4], 0
    %s24 = scalar_lea.sflag [#allocation4], 1
    %25 = vsyncpa %s24, 0
    loop: start=0, step=1, limit=4
    $region2: #{tpu_custom_call.1} parent=1 // loop_pre_header
      _
    $region3: #{tpu_custom_call.1} parent=1 // loop_header
      %s27 = sphi 0, %s31
      %p28 = scmp.ge.s32.totalorder %s27, 4
      %s34 = sphi 0, %s46
      %s35 = sphi 0, %s42
      %s36 = sphi 0, %s34
      %s37 = sphi 0, %s35
      %s38 = sphi 0, %s36
      %s39 = sphi 0, %s37
      %s51 = sphi 0, %s53
      %s54 = sphi 0, %s51
      %s55 = sphi 0, %s54
      %s71 = sphi 0, %s55
      %s79 = sphi 0, %s81
      %s82 = sphi 0, %s79
      %s83 = sphi 0, %s82
      %s99 = sphi 0, %s83
      %s107 = sphi 0, %s109
      %s110 = sphi 0, %s107
      %s111 = sphi 0, %s110
      %s127 = sphi 0, %s111
      %s131 = sphi 0, %s131
      %s133 = sphi 0, %s131
      %s134 = sphi 0, %s133
      %s148 = sphi 0, %s134
      %s152 = sphi 0, %s152
      %s154 = sphi 0, %s152
      %s155 = sphi 0, %s154
      %s169 = sphi 0, %s155
      %s173 = sphi 0, %s173
      %s175 = sphi 0, %s173
      %s176 = sphi 0, %s175
      %s190 = sphi 0, %s176
      %s194 = sphi 0, %s194
      %s196 = sphi 0, %s194
      %s197 = sphi 0, %s196
      %s211 = sphi 0, %s197
      %s215 = sphi 0, %s215
      %s217 = sphi 0, %s215
      %s218 = sphi 0, %s217
      %s232 = sphi 0, %s218
      %s236 = sphi 0, %s236
      %s238 = sphi 0, %s236
      %s239 = sphi 0, %s238
      %s253 = sphi 0, %s239
      %s257 = sphi 0, %s257
      %s259 = sphi 0, %s257
      %s260 = sphi 0, %s259
      %s274 = sphi 0, %s260
      %s278 = sphi 0, %s278
      %s280 = sphi 0, %s278
      %s281 = sphi 0, %s280
      %s295 = sphi 0, %s281
      %s303 = sphi 0, %s305
      %s306 = sphi 0, %s303
      %s307 = sphi 0, %s306
      %s323 = sphi 0, %s307
    $region4: #{tpu_custom_call.1} parent=1 // loop_header_branch
      %30 = sbr.rel (%p28) target = $region8
    $region5: #{tpu_custom_call.1} parent=1 // loop_body
      %s32 = ssub.s32 %s27, 1
      %s33 = ssub.s32 %s27, 2
      %s40 = sadd.s32 1, %s35
      %p41 = scmp.ge.s32.totalorder %s40, 1
      %s42 = scalar_select %p41, 0, %s40
      %s43 = sadd.s32 1, %s34
      %s44 = scalar_select %p41, %s43, %s34
      %p45 = scmp.ge.s32.totalorder %s44, 2
      %s46 = scalar_select %p45, 0, %s44
      %s47 = ssub.s32 %s34, %s46
      %s48 = ssub.s32 %s35, %s42
      %s49 = sor.u32 %s47, %s48
      %p50 = scmp.eq.s32.totalorder %s49, 0
      %s52 = sadd.s32 %s51, 1
      %s53 = scalar_select %p50, %s51, %s52
      %p56 = pneg %p50
      %p57 = scmp.eq.s32.totalorder %s27, 1
      %p58 = por %p56, %p57
      %p59 = scmp.ne.s32.totalorder %s51, %s54
      %p60 = scmp.eq.s32.totalorder %s27, 0
      %p61 = por %p59, %p60
      %p62 = scmp.ne.s32.totalorder %s51, %s54
      %p63 = scmp.eq.s32.totalorder %s32, 1
      %p64 = por %p62, %p63
      %p65 = scmp.ne.s32.totalorder %s54, %s55
      %p66 = scmp.eq.s32.totalorder %s32, 0
      %p67 = por %p65, %p66
      %p68 = scmp.ne.s32.totalorder %s54, %s55
      %p69 = scmp.eq.s32.totalorder %s33, 1
      %p70 = por %p68, %p69
      %p72 = scmp.ne.s32.totalorder %s55, %s71
      %p73 = scmp.eq.s32.totalorder %s33, 0
      %p74 = por %p72, %p73
      %s75 = ssub.s32 %s34, %s46
      %s76 = ssub.s32 %s35, %s42
      %s77 = sor.u32 %s75, %s76
      %p78 = scmp.eq.s32.totalorder %s77, 0
      %s80 = sadd.s32 %s79, 1
      %s81 = scalar_select %p78, %s79, %s80
      %p84 = pneg %p78
      %p85 = scmp.eq.s32.totalorder %s27, 1
      %p86 = por %p84, %p85
      %p87 = scmp.ne.s32.totalorder %s79, %s82
      %p88 = scmp.eq.s32.totalorder %s27, 0
      %p89 = por %p87, %p88
      %p90 = scmp.ne.s32.totalorder %s79, %s82
      %p91 = scmp.eq.s32.totalorder %s32, 1
      %p92 = por %p90, %p91
      %p93 = scmp.ne.s32.totalorder %s82, %s83
      %p94 = scmp.eq.s32.totalorder %s32, 0
      %p95 = por %p93, %p94
      %p96 = scmp.ne.s32.totalorder %s82, %s83
      %p97 = scmp.eq.s32.totalorder %s33, 1
      %p98 = por %p96, %p97
      %p100 = scmp.ne.s32.totalorder %s83, %s99
      %p101 = scmp.eq.s32.totalorder %s33, 0
      %p102 = por %p100, %p101
      %s103 = ssub.s32 %s34, %s46
      %s104 = ssub.s32 %s35, %s42
      %s105 = sor.u32 %s103, %s104
      %p106 = scmp.eq.s32.totalorder %s105, 0
      %s108 = sadd.s32 %s107, 1
      %s109 = scalar_select %p106, %s107, %s108
      %p112 = pneg %p106
      %p113 = scmp.eq.s32.totalorder %s27, 1
      %p114 = por %p112, %p113
      %p115 = scmp.ne.s32.totalorder %s107, %s110
      %p116 = scmp.eq.s32.totalorder %s27, 0
      %p117 = por %p115, %p116
      %p118 = scmp.ne.s32.totalorder %s107, %s110
      %p119 = scmp.eq.s32.totalorder %s32, 1
      %p120 = por %p118, %p119
      %p121 = scmp.ne.s32.totalorder %s110, %s111
      %p122 = scmp.eq.s32.totalorder %s32, 0
      %p123 = por %p121, %p122
      %p124 = scmp.ne.s32.totalorder %s110, %s111
      %p125 = scmp.eq.s32.totalorder %s33, 1
      %p126 = por %p124, %p125
      %p128 = scmp.ne.s32.totalorder %s111, %s127
      %p129 = scmp.eq.s32.totalorder %s33, 0
      %p130 = por %p128, %p129
      %s132 = sadd.s32 %s131, 1
      %p135 = scmp.eq.s32.totalorder %s27, 1
      %p136 = scmp.ne.s32.totalorder %s131, %s133
      %p137 = scmp.eq.s32.totalorder %s27, 0
      %p138 = por %p136, %p137
      %p139 = scmp.ne.s32.totalorder %s131, %s133
      %p140 = scmp.eq.s32.totalorder %s32, 1
      %p141 = por %p139, %p140
      %p142 = scmp.ne.s32.totalorder %s133, %s134
      %p143 = scmp.eq.s32.totalorder %s32, 0
      %p144 = por %p142, %p143
      %p145 = scmp.ne.s32.totalorder %s133, %s134
      %p146 = scmp.eq.s32.totalorder %s33, 1
      %p147 = por %p145, %p146
      %p149 = scmp.ne.s32.totalorder %s134, %s148
      %p150 = scmp.eq.s32.totalorder %s33, 0
      %p151 = por %p149, %p150
      %s153 = sadd.s32 %s152, 1
      %p156 = scmp.eq.s32.totalorder %s27, 1
      %p157 = scmp.ne.s32.totalorder %s152, %s154
      %p158 = scmp.eq.s32.totalorder %s27, 0
      %p159 = por %p157, %p158
      %p160 = scmp.ne.s32.totalorder %s152, %s154
      %p161 = scmp.eq.s32.totalorder %s32, 1
      %p162 = por %p160, %p161
      %p163 = scmp.ne.s32.totalorder %s154, %s155
      %p164 = scmp.eq.s32.totalorder %s32, 0
      %p165 = por %p163, %p164
      %p166 = scmp.ne.s32.totalorder %s154, %s155
      %p167 = scmp.eq.s32.totalorder %s33, 1
      %p168 = por %p166, %p167
      %p170 = scmp.ne.s32.totalorder %s155, %s169
      %p171 = scmp.eq.s32.totalorder %s33, 0
      %p172 = por %p170, %p171
      %s174 = sadd.s32 %s173, 1
      %p177 = scmp.eq.s32.totalorder %s27, 1
      %p178 = scmp.ne.s32.totalorder %s173, %s175
      %p179 = scmp.eq.s32.totalorder %s27, 0
      %p180 = por %p178, %p179
      %p181 = scmp.ne.s32.totalorder %s173, %s175
      %p182 = scmp.eq.s32.totalorder %s32, 1
      %p183 = por %p181, %p182
      %p184 = scmp.ne.s32.totalorder %s175, %s176
      %p185 = scmp.eq.s32.totalorder %s32, 0
      %p186 = por %p184, %p185
      %p187 = scmp.ne.s32.totalorder %s175, %s176
      %p188 = scmp.eq.s32.totalorder %s33, 1
      %p189 = por %p187, %p188
      %p191 = scmp.ne.s32.totalorder %s176, %s190
      %p192 = scmp.eq.s32.totalorder %s33, 0
      %p193 = por %p191, %p192
      %s195 = sadd.s32 %s194, 1
      %p198 = scmp.eq.s32.totalorder %s27, 1
      %p199 = scmp.ne.s32.totalorder %s194, %s196
      %p200 = scmp.eq.s32.totalorder %s27, 0
      %p201 = por %p199, %p200
      %p202 = scmp.ne.s32.totalorder %s194, %s196
      %p203 = scmp.eq.s32.totalorder %s32, 1
      %p204 = por %p202, %p203
      %p205 = scmp.ne.s32.totalorder %s196, %s197
      %p206 = scmp.eq.s32.totalorder %s32, 0
      %p207 = por %p205, %p206
      %p208 = scmp.ne.s32.totalorder %s196, %s197
      %p209 = scmp.eq.s32.totalorder %s33, 1
      %p210 = por %p208, %p209
      %p212 = scmp.ne.s32.totalorder %s197, %s211
      %p213 = scmp.eq.s32.totalorder %s33, 0
      %p214 = por %p212, %p213
      %s216 = sadd.s32 %s215, 1
      %p219 = scmp.eq.s32.totalorder %s27, 1
      %p220 = scmp.ne.s32.totalorder %s215, %s217
      %p221 = scmp.eq.s32.totalorder %s27, 0
      %p222 = por %p220, %p221
      %p223 = scmp.ne.s32.totalorder %s215, %s217
      %p224 = scmp.eq.s32.totalorder %s32, 1
      %p225 = por %p223, %p224
      %p226 = scmp.ne.s32.totalorder %s217, %s218
      %p227 = scmp.eq.s32.totalorder %s32, 0
      %p228 = por %p226, %p227
      %p229 = scmp.ne.s32.totalorder %s217, %s218
      %p230 = scmp.eq.s32.totalorder %s33, 1
      %p231 = por %p229, %p230
      %p233 = scmp.ne.s32.totalorder %s218, %s232
      %p234 = scmp.eq.s32.totalorder %s33, 0
      %p235 = por %p233, %p234
      %s237 = sadd.s32 %s236, 1
      %p240 = scmp.eq.s32.totalorder %s27, 1
      %p241 = scmp.ne.s32.totalorder %s236, %s238
      %p242 = scmp.eq.s32.totalorder %s27, 0
      %p243 = por %p241, %p242
      %p244 = scmp.ne.s32.totalorder %s236, %s238
      %p245 = scmp.eq.s32.totalorder %s32, 1
      %p246 = por %p244, %p245
      %p247 = scmp.ne.s32.totalorder %s238, %s239
      %p248 = scmp.eq.s32.totalorder %s32, 0
      %p249 = por %p247, %p248
      %p250 = scmp.ne.s32.totalorder %s238, %s239
      %p251 = scmp.eq.s32.totalorder %s33, 1
      %p252 = por %p250, %p251
      %p254 = scmp.ne.s32.totalorder %s239, %s253
      %p255 = scmp.eq.s32.totalorder %s33, 0
      %p256 = por %p254, %p255
      %s258 = sadd.s32 %s257, 1
      %p261 = scmp.eq.s32.totalorder %s27, 1
      %p262 = scmp.ne.s32.totalorder %s257, %s259
      %p263 = scmp.eq.s32.totalorder %s27, 0
      %p264 = por %p262, %p263
      %p265 = scmp.ne.s32.totalorder %s257, %s259
      %p266 = scmp.eq.s32.totalorder %s32, 1
      %p267 = por %p265, %p266
      %p268 = scmp.ne.s32.totalorder %s259, %s260
      %p269 = scmp.eq.s32.totalorder %s32, 0
      %p270 = por %p268, %p269
      %p271 = scmp.ne.s32.totalorder %s259, %s260
      %p272 = scmp.eq.s32.totalorder %s33, 1
      %p273 = por %p271, %p272
      %p275 = scmp.ne.s32.totalorder %s260, %s274
      %p276 = scmp.eq.s32.totalorder %s33, 0
      %p277 = por %p275, %p276
      %s279 = sadd.s32 %s278, 1
      %p282 = scmp.eq.s32.totalorder %s27, 1
      %p283 = scmp.ne.s32.totalorder %s278, %s280
      %p284 = scmp.eq.s32.totalorder %s27, 0
      %p285 = por %p283, %p284
      %p286 = scmp.ne.s32.totalorder %s278, %s280
      %p287 = scmp.eq.s32.totalorder %s32, 1
      %p288 = por %p286, %p287
      %p289 = scmp.ne.s32.totalorder %s280, %s281
      %p290 = scmp.eq.s32.totalorder %s32, 0
      %p291 = por %p289, %p290
      %p292 = scmp.ne.s32.totalorder %s280, %s281
      %p293 = scmp.eq.s32.totalorder %s33, 1
      %p294 = por %p292, %p293
      %p296 = scmp.ne.s32.totalorder %s281, %s295
      %p297 = scmp.eq.s32.totalorder %s33, 0
      %p298 = por %p296, %p297
      %s299 = ssub.s32 %s34, %s46
      %s300 = ssub.s32 %s35, %s42
      %s301 = sor.u32 %s299, %s300
      %p302 = scmp.eq.s32.totalorder %s301, 0
      %s304 = sadd.s32 %s303, 1
      %s305 = scalar_select %p302, %s303, %s304
      %p308 = pneg %p302
      %p309 = scmp.eq.s32.totalorder %s27, 1
      %p310 = por %p308, %p309
      %p311 = scmp.ne.s32.totalorder %s303, %s306
      %p312 = scmp.eq.s32.totalorder %s27, 0
      %p313 = por %p311, %p312
      %p314 = scmp.ne.s32.totalorder %s303, %s306
      %p315 = scmp.eq.s32.totalorder %s32, 1
      %p316 = por %p314, %p315
      %p317 = scmp.ne.s32.totalorder %s306, %s307
      %p318 = scmp.eq.s32.totalorder %s32, 0
      %p319 = por %p317, %p318
      %p320 = scmp.ne.s32.totalorder %s306, %s307
      %p321 = scmp.eq.s32.totalorder %s33, 1
      %p322 = por %p320, %p321
      %p324 = scmp.ne.s32.totalorder %s307, %s323
      %p325 = scmp.eq.s32.totalorder %s33, 0
      %p326 = por %p324, %p325
      %p327 = scmp.le.s32.totalorder 1, %s27
      %p328 = scmp.lt.s32.totalorder %s27, 3
      %p329 = pnand %p327, %p328
      %p330 = pneg %p329
      // Predicated region
      $region9: #{tpu_custom_call.1} parent=5 // pred_check
        _
      $region10: #{tpu_custom_call.1} parent=5 // pred_check_branch
        %332 = sbr.rel (%p329) target = $region12
      $region11: #{tpu_custom_call.1} parent=5 // pred_region
        %s333 = ssub.s32 %s27, 1
        // Predicated region
        $region13: #{tpu_custom_call.1} parent=11 // pred_check
          %p334 = pneg %p144
        $region14: #{tpu_custom_call.1} parent=11 // pred_check_branch
          %336 = sbr.rel (%p334) target = $region16
        $region15: #{tpu_custom_call.1} parent=11 // pred_region
          _
        $region16: #{tpu_custom_call.1} parent=11 // pred_fallthru
          _
        // Predicated region
        $region17: #{tpu_custom_call.1} parent=11 // pred_check
          %p337 = pneg %p165
        $region18: #{tpu_custom_call.1} parent=11 // pred_check_branch
          %339 = sbr.rel (%p337) target = $region20
        $region19: #{tpu_custom_call.1} parent=11 // pred_region
          %s341 = ssub.s32 16, 16
          %342 = vsyncadd [#allocation9], %s341
          %s344 = sshll.u32 [#allocation8], 4
          %s345 = int_to_ptr.vmem [resolvable:$true] %s344
          %347 = dma.hbm_to_vmem [thread:$0]  %s4, 16, %s345, [#allocation9]
        $region20: #{tpu_custom_call.1} parent=11 // pred_fallthru
          _
        // Predicated region
        $region21: #{tpu_custom_call.1} parent=11 // pred_check
          %p348 = pneg %p186
        $region22: #{tpu_custom_call.1} parent=11 // pred_check_branch
          %350 = sbr.rel (%p348) target = $region24
        $region23: #{tpu_custom_call.1} parent=11 // pred_region
          _
        $region24: #{tpu_custom_call.1} parent=11 // pred_fallthru
          _
        // Predicated region
        $region25: #{tpu_custom_call.1} parent=11 // pred_check
          %p351 = pneg %p207
        $region26: #{tpu_custom_call.1} parent=11 // pred_check_branch
          %353 = sbr.rel (%p351) target = $region28
        $region27: #{tpu_custom_call.1} parent=11 // pred_region
          _
        $region28: #{tpu_custom_call.1} parent=11 // pred_fallthru
          _
        // Predicated region
        $region29: #{tpu_custom_call.1} parent=11 // pred_check
          %p354 = pneg %p228
        $region30: #{tpu_custom_call.1} parent=11 // pred_check_branch
          %356 = sbr.rel (%p354) target = $region32
        $region31: #{tpu_custom_call.1} parent=11 // pred_region
          _
        $region32: #{tpu_custom_call.1} parent=11 // pred_fallthru
          _
        // Predicated region
        $region33: #{tpu_custom_call.1} parent=11 // pred_check
          %p357 = pneg %p249
        $region34: #{tpu_custom_call.1} parent=11 // pred_check_branch
          %359 = sbr.rel (%p357) target = $region36
        $region35: #{tpu_custom_call.1} parent=11 // pred_region
          _
        $region36: #{tpu_custom_call.1} parent=11 // pred_fallthru
          _
        // Predicated region
        $region37: #{tpu_custom_call.1} parent=11 // pred_check
          %p360 = pneg %p270
        $region38: #{tpu_custom_call.1} parent=11 // pred_check_branch
          %362 = sbr.rel (%p360) target = $region40
        $region39: #{tpu_custom_call.1} parent=11 // pred_region
          _
        $region40: #{tpu_custom_call.1} parent=11 // pred_fallthru
          _
        // Predicated region
        $region41: #{tpu_custom_call.1} parent=11 // pred_check
          %p363 = pneg %p291
        $region42: #{tpu_custom_call.1} parent=11 // pred_check_branch
          %365 = sbr.rel (%p363) target = $region44
        $region43: #{tpu_custom_call.1} parent=11 // pred_region
          _
        $region44: #{tpu_custom_call.1} parent=11 // pred_fallthru
          _
      $region12: #{tpu_custom_call.1} parent=5 // pred_fallthru
        _
      %p366 = scmp.lt.s32.totalorder %s27, 2
      // Predicated region
      $region45: #{tpu_custom_call.1} parent=5 // pred_check
        %p367 = pneg %p366
      $region46: #{tpu_custom_call.1} parent=5 // pred_check_branch
        %369 = sbr.rel (%p367) target = $region48
      $region47: #{tpu_custom_call.1} parent=5 // pred_region
        // Predicated region
        $region49: #{tpu_custom_call.1} parent=47 // pred_check
          %p370 = pneg %p61
        $region50: #{tpu_custom_call.1} parent=47 // pred_check_branch
          %372 = sbr.rel (%p370) target = $region52
        $region51: #{tpu_custom_call.1} parent=47 // pred_region
          %s373 = sand.u32 %s51, 1
          %s374 = scalar_lea.sflag [#allocation3], %s373
          %s375 = sand.u32 %s51, 1
          %s376 = smul.addr %s375, 128
          %s377 = scalar_lea.vmem [#allocation2], %s376
          %s378 = smul.u32 2, %s35
          %s380 = ssub.s32 2048, 2048
          %381 = vsyncadd %s374, %s380
          %s382 = smul.addr %s34, 16
          %s383 = sadd.s32 %s378, %s382
          %s384 = smul.addr %s383, 128
          %s385 = scalar_lea.hbm %s0, %s384
          %s386 = sshll.u32 %s377, 4
          %s387 = int_to_ptr.vmem [resolvable:$true] %s386
          %392 = dma.hbm_to_vmem [thread:$0]  %s385, 2048, %s387, %s374, 128, 128, 8
        $region52: #{tpu_custom_call.1} parent=47 // pred_fallthru
          _
        // Predicated region
        $region53: #{tpu_custom_call.1} parent=47 // pred_check
          %p393 = pneg %p89
        $region54: #{tpu_custom_call.1} parent=47 // pred_check_branch
          %395 = sbr.rel (%p393) target = $region56
        $region55: #{tpu_custom_call.1} parent=47 // pred_region
          %s396 = sand.u32 %s27, 1
          %s397 = scalar_lea.sflag [#allocation6], %s396
          %s398 = sand.u32 %s79, 1
          %s399 = smul.addr %s398, 128
          %s400 = scalar_lea.vmem [#allocation5], %s399
          %s401 = smul.u32 2, %s35
          %s403 = ssub.s32 2048, 2048
          %404 = vsyncadd %s397, %s403
          %s405 = smul.addr %s34, 16
          %s406 = sadd.s32 %s401, %s405
          %s407 = smul.addr %s406, 128
          %s408 = scalar_lea.hbm %s1, %s407
          %s409 = sshll.u32 %s400, 4
          %s410 = int_to_ptr.vmem [resolvable:$true] %s409
          %415 = dma.hbm_to_vmem [thread:$0]  %s408, 2048, %s410, %s397, 128, 128, 8
        $region56: #{tpu_custom_call.1} parent=47 // pred_fallthru
          _
        // Predicated region
        $region57: #{tpu_custom_call.1} parent=47 // pred_check
          %p416 = pneg %p117
        $region58: #{tpu_custom_call.1} parent=47 // pred_check_branch
          %418 = sbr.rel (%p416) target = $region60
        $region59: #{tpu_custom_call.1} parent=47 // pred_region
          %s419 = sand.u32 %s27, 1
          %s420 = scalar_lea.sflag [#allocation6], %s419
          %s421 = sand.u32 %s107, 1
          %s422 = smul.addr %s421, 128
          %s423 = scalar_lea.vmem [#allocation7], %s422
          %s424 = smul.u32 2, %s35
          %s426 = ssub.s32 2048, 2048
          %427 = vsyncadd %s420, %s426
          %s428 = smul.addr %s34, 16
          %s429 = sadd.s32 %s424, %s428
          %s430 = smul.addr %s429, 128
          %s431 = scalar_lea.hbm %s2, %s430
          %s432 = sshll.u32 %s423, 4
          %s433 = int_to_ptr.vmem [resolvable:$true] %s432
          %438 = dma.hbm_to_vmem [thread:$0]  %s431, 2048, %s433, %s420, 128, 128, 8
        $region60: #{tpu_custom_call.1} parent=47 // pred_fallthru
          _
      $region48: #{tpu_custom_call.1} parent=5 // pred_fallthru
        _
      %p439 = scmp.le.s32.totalorder 1, %s27
      %p440 = scmp.lt.s32.totalorder %s27, 3
      %p441 = pnand %p439, %p440
      %p442 = pneg %p441
      // Predicated region
      $region61: #{tpu_custom_call.1} parent=5 // pred_check
        _
      $region62: #{tpu_custom_call.1} parent=5 // pred_check_branch
        %444 = sbr.rel (%p441) target = $region64
      $region63: #{tpu_custom_call.1} parent=5 // pred_region
        %s445 = ssub.s32 %s27, 1
        %s446 = sand.u32 %s54, 1
        %s447 = scalar_lea.sflag [#allocation3], %s446
        %s448 = sand.u32 %s54, 1
        %s449 = smul.addr %s448, 128
        %s450 = scalar_lea.vmem [#allocation2], %s449
        // Predicated region
        $region65: #{tpu_custom_call.1} parent=63 // pred_check
          %p451 = pneg %p67
        $region66: #{tpu_custom_call.1} parent=63 // pred_check_branch
          %453 = sbr.rel (%p451) target = $region68
        $region67: #{tpu_custom_call.1} parent=63 // pred_region
          %454 = dma.done %s447, 2048
        $region68: #{tpu_custom_call.1} parent=63 // pred_fallthru
          _
        %s455 = sand.u32 %s32, 1
        %s456 = scalar_lea.sflag [#allocation6], %s455
        %s457 = sand.u32 %s82, 1
        %s458 = smul.addr %s457, 128
        %s459 = scalar_lea.vmem [#allocation5], %s458
        // Predicated region
        $region69: #{tpu_custom_call.1} parent=63 // pred_check
          %p460 = pneg %p95
        $region70: #{tpu_custom_call.1} parent=63 // pred_check_branch
          %462 = sbr.rel (%p460) target = $region72
        $region71: #{tpu_custom_call.1} parent=63 // pred_region
          %463 = dma.done %s456, 2048
        $region72: #{tpu_custom_call.1} parent=63 // pred_fallthru
          _
        %s464 = sand.u32 %s32, 1
        %s465 = scalar_lea.sflag [#allocation6], %s464
        %s466 = sand.u32 %s110, 1
        %s467 = smul.addr %s466, 128
        %s468 = scalar_lea.vmem [#allocation7], %s467
        // Predicated region
        $region73: #{tpu_custom_call.1} parent=63 // pred_check
          %p469 = pneg %p123
        $region74: #{tpu_custom_call.1} parent=63 // pred_check_branch
          %471 = sbr.rel (%p469) target = $region76
        $region75: #{tpu_custom_call.1} parent=63 // pred_region
          %472 = dma.done %s465, 2048
        $region76: #{tpu_custom_call.1} parent=63 // pred_fallthru
          _
        // Predicated region
        $region77: #{tpu_custom_call.1} parent=63 // pred_check
          %p473 = pneg %p165
        $region78: #{tpu_custom_call.1} parent=63 // pred_check_branch
          %475 = sbr.rel (%p473) target = $region80
        $region79: #{tpu_custom_call.1} parent=63 // pred_region
          %476 = dma.done [#allocation9], 16
        $region80: #{tpu_custom_call.1} parent=63 // pred_fallthru
          _
        %s477 = sand.u32 %s54, 1
        %s478 = scalar_lea.sflag [#allocation3], %s477
        %s479 = sand.u32 %s54, 1
        %s480 = smul.addr %s479, 128
        %s481 = scalar_lea.vmem [#allocation2], %s480
        %p482 = pneg %p67
        %p483 = pneg %p64
        %s484 = sand.u32 %s32, 1
        %s485 = scalar_lea.sflag [#allocation6], %s484
        %s486 = sand.u32 %s82, 1
        %s487 = smul.addr %s486, 128
        %s488 = scalar_lea.vmem [#allocation5], %s487
        %p489 = pneg %p95
        %p490 = pneg %p92
        %s491 = sand.u32 %s32, 1
        %s492 = scalar_lea.sflag [#allocation6], %s491
        %s493 = sand.u32 %s110, 1
        %s494 = smul.addr %s493, 128
        %s495 = scalar_lea.vmem [#allocation7], %s494
        %p496 = pneg %p123
        %p497 = pneg %p120
        %p498 = pneg %p144
        %p499 = pneg %p141
        %p500 = pneg %p165
        %p501 = pneg %p162
        %p502 = pneg %p186
        %p503 = pneg %p183
        %p504 = pneg %p207
        %p505 = pneg %p204
        %p506 = pneg %p228
        %p507 = pneg %p225
        %p508 = pneg %p249
        %p509 = pneg %p246
        %p510 = pneg %p270
        %p511 = pneg %p267
        %p512 = pneg %p291
        %p513 = pneg %p288
        %p514 = pneg %p319
        %p515 = pneg %p316
        %s516 = sand.u32 %s306, 1
        %s517 = scalar_lea.sflag [#allocation4], %s516
        %s518 = sand.u32 %s306, 1
        %s519 = smul.addr %s518, 128
        %s520 = scalar_lea.vmem [#allocation10], %s519
        %s521 = smul.u32 2, %s37
        %s522 = smul.u32 2, %s37
        %s523 = smul.u32 2, %s37
        %s524 = smul.u32 2, %s37
        %v526 = vld [vmem:[%s450] sm:$0xff]
        %v527 = vld [vmem:[%s450 + $0x8] sm:$0xff]
        %v528 = vld [vmem:[%s450 + $0x10] sm:$0xff]
        %v529 = vld [vmem:[%s450 + $0x18] sm:$0xff]
        %v530 = vld [vmem:[%s450 + $0x20] sm:$0xff]
        %v531 = vld [vmem:[%s450 + $0x28] sm:$0xff]
        %v532 = vld [vmem:[%s450 + $0x30] sm:$0xff]
        %v533 = vld [vmem:[%s450 + $0x38] sm:$0xff]
        %v534 = vld [vmem:[%s450 + $0x40] sm:$0xff]
        %v535 = vld [vmem:[%s450 + $0x48] sm:$0xff]
        %v536 = vld [vmem:[%s450 + $0x50] sm:$0xff]
        %v537 = vld [vmem:[%s450 + $0x58] sm:$0xff]
        %v538 = vld [vmem:[%s450 + $0x60] sm:$0xff]
        %v539 = vld [vmem:[%s450 + $0x68] sm:$0xff]
        %v540 = vld [vmem:[%s450 + $0x70] sm:$0xff]
        %v541 = vld [vmem:[%s450 + $0x78] sm:$0xff]
        %v542 = vld [vmem:[%s459] sm:$0xff]
        %v543 = vld [vmem:[%s459 + $0x8] sm:$0xff]
        %v544 = vld [vmem:[%s459 + $0x10] sm:$0xff]
        %v545 = vld [vmem:[%s459 + $0x18] sm:$0xff]
        %v546 = vld [vmem:[%s459 + $0x20] sm:$0xff]
        %v547 = vld [vmem:[%s459 + $0x28] sm:$0xff]
        %v548 = vld [vmem:[%s459 + $0x30] sm:$0xff]
        %v549 = vld [vmem:[%s459 + $0x38] sm:$0xff]
        %v550 = vld [vmem:[%s459 + $0x40] sm:$0xff]
        %v551 = vld [vmem:[%s459 + $0x48] sm:$0xff]
        %v552 = vld [vmem:[%s459 + $0x50] sm:$0xff]
        %v553 = vld [vmem:[%s459 + $0x58] sm:$0xff]
        %v554 = vld [vmem:[%s459 + $0x60] sm:$0xff]
        %v555 = vld [vmem:[%s459 + $0x68] sm:$0xff]
        %v556 = vld [vmem:[%s459 + $0x70] sm:$0xff]
        %v557 = vld [vmem:[%s459 + $0x78] sm:$0xff]
        %v558 = vld [vmem:[%s468] sm:$0xff]
        %v559 = vld [vmem:[%s468 + $0x8] sm:$0xff]
        %v560 = vld [vmem:[%s468 + $0x10] sm:$0xff]
        %v561 = vld [vmem:[%s468 + $0x18] sm:$0xff]
        %v562 = vld [vmem:[%s468 + $0x20] sm:$0xff]
        %v563 = vld [vmem:[%s468 + $0x28] sm:$0xff]
        %v564 = vld [vmem:[%s468 + $0x30] sm:$0xff]
        %v565 = vld [vmem:[%s468 + $0x38] sm:$0xff]
        %v566 = vld [vmem:[%s468 + $0x40] sm:$0xff]
        %v567 = vld [vmem:[%s468 + $0x48] sm:$0xff]
        %v568 = vld [vmem:[%s468 + $0x50] sm:$0xff]
        %v569 = vld [vmem:[%s468 + $0x58] sm:$0xff]
        %v570 = vld [vmem:[%s468 + $0x60] sm:$0xff]
        %v571 = vld [vmem:[%s468 + $0x68] sm:$0xff]
        %v572 = vld [vmem:[%s468 + $0x70] sm:$0xff]
        %v573 = vld [vmem:[%s468 + $0x78] sm:$0xff]
        %v574 = vpack.c.bf16 %v527, %v526
        %v575 = vpack.c.bf16 %v529, %v528
        %v576 = vpack.c.bf16 %v531, %v530
        %v577 = vpack.c.bf16 %v533, %v532
        %v578 = vpack.c.bf16 %v535, %v534
        %v579 = vpack.c.bf16 %v537, %v536
        %v580 = vpack.c.bf16 %v539, %v538
        %v581 = vpack.c.bf16 %v541, %v540
        %v582 = vld [vmem:[%s3] sm:$0xf]
        %v583 = vld [vmem:[%s3 + $0x4] sm:$0xf]
        %v584 = vld [vmem:[%s3 + $0x8] sm:$0xf]
        %v585 = vld [vmem:[%s3 + $0xc] sm:$0xf]
        %v586 = vld [vmem:[#allocation8] sm:$0x1]
        %v588 = vlaneseq
        %v589 = vshrl.u32 %v588, 7
        %v590 = vsub.s32 0, %v589
        %v591 = vrot.slane %v586, %v590
        %v597 = vunpack.c.l.b16 %v582
        %v598 = vunpack.c.l.b16 %v583
        %v599 = vunpack.c.l.b16 %v584
        %v600 = vunpack.c.l.b16 %v585
        %v601 = vpack.c.b16 %v598, %v597
        %v602 = vpack.c.b16 %v600, %v599
        %vm605 = vcmask 261120
        %v607 = vsel %vm605, %v574, 0
        %v610 = vsel %vm605, %v575, 0
        %v613 = vsel %vm605, %v576, 0
        %v616 = vsel %vm605, %v577, 0
        %v619 = vsel %vm605, %v578, 0
        %v622 = vsel %vm605, %v579, 0
        %v625 = vsel %vm605, %v580, 0
        %v628 = vsel %vm605, %v581, 0
        %630 = vmatprep.subr.bf16.mxu0 0
        %631 = vmatpush1.bf16.msra.mxu0 %v601
        %632 = vmatprep.subr.bf16.mxu0 0
        %633 = vmatpush1.bf16.msra.mxu0 %v602
        %634 = vmatprep.subr.bf16.mxu0 0
        %635 = vmatpush1.bf16.msra.mxu0 0
        %636 = vmatprep.subr.bf16.mxu0 0
        %637 = vmatpush1.bf16.msra.mxu0 0
        %638 = vmatprep.subr.bf16.mxu0 0
        %639 = vmatpush1.bf16.msra.mxu0 0
        %640 = vmatprep.subr.bf16.mxu0 0
        %641 = vmatpush1.bf16.msra.mxu0 0
        %642 = vmatprep.subr.bf16.mxu0 0
        %643 = vmatpush1.bf16.msra.mxu0 0
        %644 = vmatprep.subr.bf16.mxu0 0
        %645 = vmatpush1.bf16.msra.mxu0 0
        %646 = vmatprep.subr.bf16.mxu0 0
        %647 = vmatpush1.bf16.msra.mxu0 0
        %648 = vmatprep.subr.bf16.mxu0 0
        %649 = vmatpush1.bf16.msra.mxu0 0
        %650 = vmatprep.subr.bf16.mxu0 0
        %651 = vmatpush1.bf16.msra.mxu0 0
        %652 = vmatprep.subr.bf16.mxu0 0
        %653 = vmatpush1.bf16.msra.mxu0 0
        %654 = vmatprep.subr.bf16.mxu0 0
        %655 = vmatpush1.bf16.msra.mxu0 0
        %656 = vmatprep.subr.bf16.mxu0 0
        %657 = vmatpush1.bf16.msra.mxu0 0
        %658 = vmatprep.subr.bf16.mxu0 0
        %659 = vmatpush1.bf16.msra.mxu0 0
        %660 = vmatprep.subr.bf16.mxu0 0
        %661 = vmatpush1.bf16.msra.mxu0 0
        %662 = vmatprep.mubr.bf16.mxu0 0
        %663 = vmatmul.mubr.bf16.gmra.mrb[0].mxu0 %v607
        %v664 = vpop.f32.mrb[0].mxu0
        %v665 = vadd.f32 %v591, %v664
        %v666 = vpop.f32.mrb[0].mxu0
        %v667 = vpop.f32.mrb[0].mxu0
        %v668 = vadd.f32 %v591, %v667
        %v669 = vpop.f32.mrb[0].mxu0
        %670 = vmatprep.mubr.bf16.mxu0 0
        %671 = vmatmul.mubr.bf16.gmra.mrb[0].mxu0 %v610
        %v672 = vpop.f32.mrb[0].mxu0
        %v673 = vadd.f32 %v591, %v672
        %v674 = vpop.f32.mrb[0].mxu0
        %v675 = vpop.f32.mrb[0].mxu0
        %v676 = vadd.f32 %v591, %v675
        %v677 = vpop.f32.mrb[0].mxu0
        %678 = vmatprep.mubr.bf16.mxu0 0
        %679 = vmatmul.mubr.bf16.gmra.mrb[0].mxu0 %v613
        %v680 = vpop.f32.mrb[0].mxu0
        %v681 = vadd.f32 %v591, %v680
        %v682 = vpop.f32.mrb[0].mxu0
        %v683 = vpop.f32.mrb[0].mxu0
        %v684 = vadd.f32 %v591, %v683
        %v685 = vpop.f32.mrb[0].mxu0
        %686 = vmatprep.mubr.bf16.mxu0 0
        %687 = vmatmul.mubr.bf16.gmra.mrb[0].mxu0 %v616
        %v688 = vpop.f32.mrb[0].mxu0
        %v689 = vadd.f32 %v591, %v688
        %v690 = vpop.f32.mrb[0].mxu0
        %v691 = vpop.f32.mrb[0].mxu0
        %v692 = vadd.f32 %v591, %v691
        %v693 = vpop.f32.mrb[0].mxu0
        %694 = vmatprep.mubr.bf16.mxu0 0
        %695 = vmatmul.mubr.bf16.gmra.mrb[0].mxu0 %v619
        %v696 = vpop.f32.mrb[0].mxu0
        %v697 = vadd.f32 %v591, %v696
        %v698 = vpop.f32.mrb[0].mxu0
        %v699 = vpop.f32.mrb[0].mxu0
        %v700 = vadd.f32 %v591, %v699
        %v701 = vpop.f32.mrb[0].mxu0
        %702 = vmatprep.mubr.bf16.mxu0 0
        %703 = vmatmul.mubr.bf16.gmra.mrb[0].mxu0 %v622
        %v704 = vpop.f32.mrb[0].mxu0
        %v705 = vadd.f32 %v591, %v704
        %v706 = vpop.f32.mrb[0].mxu0
        %v707 = vpop.f32.mrb[0].mxu0
        %v708 = vadd.f32 %v591, %v707
        %v709 = vpop.f32.mrb[0].mxu0
        %710 = vmatprep.mubr.bf16.mxu0 0
        %711 = vmatmul.mubr.bf16.gmra.mrb[0].mxu0 %v625
        %v712 = vpop.f32.mrb[0].mxu0
        %v713 = vadd.f32 %v591, %v712
        %v714 = vpop.f32.mrb[0].mxu0
        %v715 = vpop.f32.mrb[0].mxu0
        %v716 = vadd.f32 %v591, %v715
        %v717 = vpop.f32.mrb[0].mxu0
        %718 = vmatprep.mubr.bf16.mxu0 0
        %719 = vmatmul.mubr.bf16.gmra.mrb[0].mxu0 %v628
        %v720 = vpop.f32.mrb[0].mxu0
        %v721 = vadd.f32 %v591, %v720
        %v722 = vpop.f32.mrb[0].mxu0
        %v723 = vpop.f32.mrb[0].mxu0
        %v724 = vadd.f32 %v591, %v723
        %v725 = vpop.f32.mrb[0].mxu0
        %726 = vdwg.mxu0
        %v727 = vpack.c.bf16 %v543, %v542
        %v728 = vpack.c.bf16 %v545, %v544
        %v729 = vpack.c.bf16 %v547, %v546
        %v730 = vpack.c.bf16 %v549, %v548
        %v731 = vpack.c.bf16 %v551, %v550
        %v732 = vpack.c.bf16 %v553, %v552
        %v733 = vpack.c.bf16 %v555, %v554
        %v734 = vpack.c.bf16 %v557, %v556
        %v735 = vld [vmem:[%s5] sm:$0xf]
        %v736 = vld [vmem:[%s5 + $0x4] sm:$0xf]
        %v737 = vld [vmem:[%s5 + $0x8] sm:$0xf]
        %v738 = vld [vmem:[%s5 + $0xc] sm:$0xf]
        %v739 = vld [vmem:[%s6] sm:$0x1]
        %v741 = vlaneseq
        %v742 = vshrl.u32 %v741, 7
        %v743 = vsub.s32 0, %v742
        %v744 = vrot.slane %v739, %v743
        %v750 = vunpack.c.l.b16 %v735
        %v751 = vunpack.c.l.b16 %v736
        %v752 = vunpack.c.l.b16 %v737
        %v753 = vunpack.c.l.b16 %v738
        %v754 = vpack.c.b16 %v751, %v750
        %v755 = vpack.c.b16 %v753, %v752
        %v759 = vsel %vm605, %v727, 0
        %v762 = vsel %vm605, %v728, 0
        %v765 = vsel %vm605, %v729, 0
        %v768 = vsel %vm605, %v730, 0
        %v771 = vsel %vm605, %v731, 0
        %v774 = vsel %vm605, %v732, 0
        %v777 = vsel %vm605, %v733, 0
        %v780 = vsel %vm605, %v734, 0
        %782 = vmatprep.subr.bf16.mxu0 0
        %783 = vmatpush1.bf16.msra.mxu0 %v754
        %784 = vmatprep.subr.bf16.mxu0 0
        %785 = vmatpush1.bf16.msra.mxu0 %v755
        %786 = vmatprep.subr.bf16.mxu0 0
        %787 = vmatpush1.bf16.msra.mxu0 0
        %788 = vmatprep.subr.bf16.mxu0 0
        %789 = vmatpush1.bf16.msra.mxu0 0
        %790 = vmatprep.subr.bf16.mxu0 0
        %791 = vmatpush1.bf16.msra.mxu0 0
        %792 = vmatprep.subr.bf16.mxu0 0
        %793 = vmatpush1.bf16.msra.mxu0 0
        %794 = vmatprep.subr.bf16.mxu0 0
        %795 = vmatpush1.bf16.msra.mxu0 0
        %796 = vmatprep.subr.bf16.mxu0 0
        %797 = vmatpush1.bf16.msra.mxu0 0
        %798 = vmatprep.subr.bf16.mxu0 0
        %799 = vmatpush1.bf16.msra.mxu0 0
        %800 = vmatprep.subr.bf16.mxu0 0
        %801 = vmatpush1.bf16.msra.mxu0 0
        %802 = vmatprep.subr.bf16.mxu0 0
        %803 = vmatpush1.bf16.msra.mxu0 0
        %804 = vmatprep.subr.bf16.mxu0 0
        %805 = vmatpush1.bf16.msra.mxu0 0
        %806 = vmatprep.subr.bf16.mxu0 0
        %807 = vmatpush1.bf16.msra.mxu0 0
        %808 = vmatprep.subr.bf16.mxu0 0
        %809 = vmatpush1.bf16.msra.mxu0 0
        %810 = vmatprep.subr.bf16.mxu0 0
        %811 = vmatpush1.bf16.msra.mxu0 0
        %812 = vmatprep.subr.bf16.mxu0 0
        %813 = vmatpush1.bf16.msra.mxu0 0
        %814 = vmatprep.mubr.bf16.mxu0 0
        %815 = vmatmul.mubr.bf16.gmra.mrb[0].mxu0 %v759
        %v816 = vpop.f32.mrb[0].mxu0
        %v817 = vadd.f32 %v744, %v816
        %v818 = vpop.f32.mrb[0].mxu0
        %v819 = vpop.f32.mrb[0].mxu0
        %v820 = vadd.f32 %v744, %v819
        %v821 = vpop.f32.mrb[0].mxu0
        %822 = vmatprep.mubr.bf16.mxu0 0
        %823 = vmatmul.mubr.bf16.gmra.mrb[0].mxu0 %v762
        %v824 = vpop.f32.mrb[0].mxu0
        %v825 = vadd.f32 %v744, %v824
        %v826 = vpop.f32.mrb[0].mxu0
        %v827 = vpop.f32.mrb[0].mxu0
        %v828 = vadd.f32 %v744, %v827
        %v829 = vpop.f32.mrb[0].mxu0
        %830 = vmatprep.mubr.bf16.mxu0 0
        %831 = vmatmul.mubr.bf16.gmra.mrb[0].mxu0 %v765
        %v832 = vpop.f32.mrb[0].mxu0
        %v833 = vadd.f32 %v744, %v832
        %v834 = vpop.f32.mrb[0].mxu0
        %v835 = vpop.f32.mrb[0].mxu0
        %v836 = vadd.f32 %v744, %v835
        %v837 = vpop.f32.mrb[0].mxu0
        %838 = vmatprep.mubr.bf16.mxu0 0
        %839 = vmatmul.mubr.bf16.gmra.mrb[0].mxu0 %v768
        %v840 = vpop.f32.mrb[0].mxu0
        %v841 = vadd.f32 %v744, %v840
        %v842 = vpop.f32.mrb[0].mxu0
        %v843 = vpop.f32.mrb[0].mxu0
        %v844 = vadd.f32 %v744, %v843
        %v845 = vpop.f32.mrb[0].mxu0
        %846 = vmatprep.mubr.bf16.mxu0 0
        %847 = vmatmul.mubr.bf16.gmra.mrb[0].mxu0 %v771
        %v848 = vpop.f32.mrb[0].mxu0
        %v849 = vadd.f32 %v744, %v848
        %v850 = vpop.f32.mrb[0].mxu0
        %v851 = vpop.f32.mrb[0].mxu0
        %v852 = vadd.f32 %v744, %v851
        %v853 = vpop.f32.mrb[0].mxu0
        %854 = vmatprep.mubr.bf16.mxu0 0
        %855 = vmatmul.mubr.bf16.gmra.mrb[0].mxu0 %v774
        %v856 = vpop.f32.mrb[0].mxu0
        %v857 = vadd.f32 %v744, %v856
        %v858 = vpop.f32.mrb[0].mxu0
        %v859 = vpop.f32.mrb[0].mxu0
        %v860 = vadd.f32 %v744, %v859
        %v861 = vpop.f32.mrb[0].mxu0
        %862 = vmatprep.mubr.bf16.mxu0 0
        %863 = vmatmul.mubr.bf16.gmra.mrb[0].mxu0 %v777
        %v864 = vpop.f32.mrb[0].mxu0
        %v865 = vadd.f32 %v744, %v864
        %v866 = vpop.f32.mrb[0].mxu0
        %v867 = vpop.f32.mrb[0].mxu0
        %v868 = vadd.f32 %v744, %v867
        %v869 = vpop.f32.mrb[0].mxu0
        %870 = vmatprep.mubr.bf16.mxu0 0
        %871 = vmatmul.mubr.bf16.gmra.mrb[0].mxu0 %v780
        %v872 = vpop.f32.mrb[0].mxu0
        %v873 = vadd.f32 %v744, %v872
        %v874 = vpop.f32.mrb[0].mxu0
        %v875 = vpop.f32.mrb[0].mxu0
        %v876 = vadd.f32 %v744, %v875
        %v877 = vpop.f32.mrb[0].mxu0
        %878 = vdwg.mxu0
        %v879 = vpack.c.bf16 %v559, %v558
        %v880 = vpack.c.bf16 %v561, %v560
        %v881 = vpack.c.bf16 %v563, %v562
        %v882 = vpack.c.bf16 %v565, %v564
        %v883 = vpack.c.bf16 %v567, %v566
        %v884 = vpack.c.bf16 %v569, %v568
        %v885 = vpack.c.bf16 %v571, %v570
        %v886 = vpack.c.bf16 %v573, %v572
        %v887 = vld [vmem:[%s7] sm:$0xf]
        %v888 = vld [vmem:[%s7 + $0x4] sm:$0xf]
        %v889 = vld [vmem:[%s7 + $0x8] sm:$0xf]
        %v890 = vld [vmem:[%s7 + $0xc] sm:$0xf]
        %v891 = vld [vmem:[%s8] sm:$0x1]
        %v893 = vlaneseq
        %v894 = vshrl.u32 %v893, 7
        %v895 = vsub.s32 0, %v894
        %v896 = vrot.slane %v891, %v895
        %v902 = vunpack.c.l.b16 %v887
        %v903 = vunpack.c.l.b16 %v888
        %v904 = vunpack.c.l.b16 %v889
        %v905 = vunpack.c.l.b16 %v890
        %v906 = vpack.c.b16 %v903, %v902
        %v907 = vpack.c.b16 %v905, %v904
        %v911 = vsel %vm605, %v879, 0
        %v914 = vsel %vm605, %v880, 0
        %v917 = vsel %vm605, %v881, 0
        %v920 = vsel %vm605, %v882, 0
        %v923 = vsel %vm605, %v883, 0
        %v926 = vsel %vm605, %v884, 0
        %v929 = vsel %vm605, %v885, 0
        %v932 = vsel %vm605, %v886, 0
        %934 = vmatprep.subr.bf16.mxu0 0
        %935 = vmatpush1.bf16.msra.mxu0 %v906
        %936 = vmatprep.subr.bf16.mxu0 0
        %937 = vmatpush1.bf16.msra.mxu0 %v907
        %938 = vmatprep.subr.bf16.mxu0 0
        %939 = vmatpush1.bf16.msra.mxu0 0
        %940 = vmatprep.subr.bf16.mxu0 0
        %941 = vmatpush1.bf16.msra.mxu0 0
        %942 = vmatprep.subr.bf16.mxu0 0
        %943 = vmatpush1.bf16.msra.mxu0 0
        %944 = vmatprep.subr.bf16.mxu0 0
        %945 = vmatpush1.bf16.msra.mxu0 0
        %946 = vmatprep.subr.bf16.mxu0 0
        %947 = vmatpush1.bf16.msra.mxu0 0
        %948 = vmatprep.subr.bf16.mxu0 0
        %949 = vmatpush1.bf16.msra.mxu0 0
        %950 = vmatprep.subr.bf16.mxu0 0
        %951 = vmatpush1.bf16.msra.mxu0 0
        %952 = vmatprep.subr.bf16.mxu0 0
        %953 = vmatpush1.bf16.msra.mxu0 0
        %954 = vmatprep.subr.bf16.mxu0 0
        %955 = vmatpush1.bf16.msra.mxu0 0
        %956 = vmatprep.subr.bf16.mxu0 0
        %957 = vmatpush1.bf16.msra.mxu0 0
        %958 = vmatprep.subr.bf16.mxu0 0
        %959 = vmatpush1.bf16.msra.mxu0 0
        %960 = vmatprep.subr.bf16.mxu0 0
        %961 = vmatpush1.bf16.msra.mxu0 0
        %962 = vmatprep.subr.bf16.mxu0 0
        %963 = vmatpush1.bf16.msra.mxu0 0
        %964 = vmatprep.subr.bf16.mxu0 0
        %965 = vmatpush1.bf16.msra.mxu0 0
        %966 = vmatprep.mubr.bf16.mxu0 0
        %967 = vmatmul.mubr.bf16.gmra.mrb[0].mxu0 %v911
        %v968 = vpop.f32.mrb[0].mxu0
        %v969 = vadd.f32 %v896, %v968
        %v970 = vpop.f32.mrb[0].mxu0
        %v971 = vpop.f32.mrb[0].mxu0
        %v972 = vadd.f32 %v896, %v971
        %v973 = vpop.f32.mrb[0].mxu0
        %974 = vmatprep.mubr.bf16.mxu0 0
        %975 = vmatmul.mubr.bf16.gmra.mrb[0].mxu0 %v914
        %v976 = vpop.f32.mrb[0].mxu0
        %v977 = vadd.f32 %v896, %v976
        %v978 = vpop.f32.mrb[0].mxu0
        %v979 = vpop.f32.mrb[0].mxu0
        %v980 = vadd.f32 %v896, %v979
        %v981 = vpop.f32.mrb[0].mxu0
        %982 = vmatprep.mubr.bf16.mxu0 0
        %983 = vmatmul.mubr.bf16.gmra.mrb[0].mxu0 %v917
        %v984 = vpop.f32.mrb[0].mxu0
        %v985 = vadd.f32 %v896, %v984
        %v986 = vpop.f32.mrb[0].mxu0
        %v987 = vpop.f32.mrb[0].mxu0
        %v988 = vadd.f32 %v896, %v987
        %v989 = vpop.f32.mrb[0].mxu0
        %990 = vmatprep.mubr.bf16.mxu0 0
        %991 = vmatmul.mubr.bf16.gmra.mrb[0].mxu0 %v920
        %v992 = vpop.f32.mrb[0].mxu0
        %v993 = vadd.f32 %v896, %v992
        %v994 = vpop.f32.mrb[0].mxu0
        %v995 = vpop.f32.mrb[0].mxu0
        %v996 = vadd.f32 %v896, %v995
        %v997 = vpop.f32.mrb[0].mxu0
        %998 = vmatprep.mubr.bf16.mxu0 0
        %999 = vmatmul.mubr.bf16.gmra.mrb[0].mxu0 %v923
        %v1000 = vpop.f32.mrb[0].mxu0
        %v1001 = vadd.f32 %v896, %v1000
        %v1002 = vpop.f32.mrb[0].mxu0
        %v1003 = vpop.f32.mrb[0].mxu0
        %v1004 = vadd.f32 %v896, %v1003
        %v1005 = vpop.f32.mrb[0].mxu0
        %1006 = vmatprep.mubr.bf16.mxu0 0
        %1007 = vmatmul.mubr.bf16.gmra.mrb[0].mxu0 %v926
        %v1008 = vpop.f32.mrb[0].mxu0
        %v1009 = vadd.f32 %v896, %v1008
        %v1010 = vpop.f32.mrb[0].mxu0
        %v1011 = vpop.f32.mrb[0].mxu0
        %v1012 = vadd.f32 %v896, %v1011
        %v1013 = vpop.f32.mrb[0].mxu0
        %1014 = vmatprep.mubr.bf16.mxu0 0
        %1015 = vmatmul.mubr.bf16.gmra.mrb[0].mxu0 %v929
        %v1016 = vpop.f32.mrb[0].mxu0
        %v1017 = vadd.f32 %v896, %v1016
        %v1018 = vpop.f32.mrb[0].mxu0
        %v1019 = vpop.f32.mrb[0].mxu0
        %v1020 = vadd.f32 %v896, %v1019
        %v1021 = vpop.f32.mrb[0].mxu0
        %1022 = vmatprep.mubr.bf16.mxu0 0
        %1023 = vmatmul.mubr.bf16.gmra.mrb[0].mxu0 %v932
        %v1024 = vpop.f32.mrb[0].mxu0
        %v1025 = vadd.f32 %v896, %v1024
        %v1026 = vpop.f32.mrb[0].mxu0
        %v1027 = vpop.f32.mrb[0].mxu0
        %v1028 = vadd.f32 %v896, %v1027
        %v1029 = vpop.f32.mrb[0].mxu0
        %1030 = vdwg.mxu0
        %1031 = vxpose.xlu0.b32.start [1/16] %v665, 128
        %1032 = vxpose.xlu0.b32.cont [2/16] %v668, 128
        %1033 = vxpose.xlu0.b32.cont [3/16] 0.0, 128
        %1034 = vxpose.xlu0.b32.cont [4/16] 0.0, 128
        %1035 = vxpose.xlu0.b32.cont [5/16] 0.0, 128
        %1036 = vxpose.xlu0.b32.cont [6/16] 0.0, 128
        %1037 = vxpose.xlu0.b32.cont [7/16] 0.0, 128
        %1038 = vxpose.xlu0.b32.cont [8/16] 0.0, 128
        %1039 = vxpose.xlu0.b32.cont [9/16] 0.0, 128
        %1040 = vxpose.xlu0.b32.cont [10/16] 0.0, 128
        %1041 = vxpose.xlu0.b32.cont [11/16] 0.0, 128
        %1042 = vxpose.xlu0.b32.cont [12/16] 0.0, 128
        %1043 = vxpose.xlu0.b32.cont [13/16] 0.0, 128
        %1044 = vxpose.xlu0.b32.cont [14/16] 0.0, 128
        %1045 = vxpose.xlu0.b32.cont [15/16] 0.0, 128
        %1046 = vxpose.xlu0.b32.end [16/16] 0.0, 128
        %v1047 = vpop.trf.xlu0
        %v1048 = vpop.trf.xlu0
        %v1049 = vpop.trf.xlu0
        %v1050 = vpop.trf.xlu0
        %v1051 = vpop.trf.xlu0
        %v1052 = vpop.trf.xlu0
        %v1053 = vpop.trf.xlu0
        %v1054 = vpop.trf.xlu0
        %v1055 = vpop.trf.xlu0
        %v1056 = vpop.trf.xlu0
        %v1057 = vpop.trf.xlu0
        %v1058 = vpop.trf.xlu0
        %v1059 = vpop.trf.xlu0
        %v1060 = vpop.trf.xlu0
        %v1061 = vpop.trf.xlu0
        %v1062 = vpop.trf.xlu0
        %1063 = vxpose.xlu0.b32.start [1/16] %v673, 128
        %1064 = vxpose.xlu0.b32.cont [2/16] %v676, 128
        %1065 = vxpose.xlu0.b32.cont [3/16] 0.0, 128
        %1066 = vxpose.xlu0.b32.cont [4/16] 0.0, 128
        %1067 = vxpose.xlu0.b32.cont [5/16] 0.0, 128
        %1068 = vxpose.xlu0.b32.cont [6/16] 0.0, 128
        %1069 = vxpose.xlu0.b32.cont [7/16] 0.0, 128
        %1070 = vxpose.xlu0.b32.cont [8/16] 0.0, 128
        %1071 = vxpose.xlu0.b32.cont [9/16] 0.0, 128
        %1072 = vxpose.xlu0.b32.cont [10/16] 0.0, 128
        %1073 = vxpose.xlu0.b32.cont [11/16] 0.0, 128
        %1074 = vxpose.xlu0.b32.cont [12/16] 0.0, 128
        %1075 = vxpose.xlu0.b32.cont [13/16] 0.0, 128
        %1076 = vxpose.xlu0.b32.cont [14/16] 0.0, 128
        %1077 = vxpose.xlu0.b32.cont [15/16] 0.0, 128
        %1078 = vxpose.xlu0.b32.end [16/16] 0.0, 128
        %v1079 = vpop.trf.xlu0
        %v1080 = vpop.trf.xlu0
        %v1081 = vpop.trf.xlu0
        %v1082 = vpop.trf.xlu0
        %v1083 = vpop.trf.xlu0
        %v1084 = vpop.trf.xlu0
        %v1085 = vpop.trf.xlu0
        %v1086 = vpop.trf.xlu0
        %v1087 = vpop.trf.xlu0
        %v1088 = vpop.trf.xlu0
        %v1089 = vpop.trf.xlu0
        %v1090 = vpop.trf.xlu0
        %v1091 = vpop.trf.xlu0
        %v1092 = vpop.trf.xlu0
        %v1093 = vpop.trf.xlu0
        %v1094 = vpop.trf.xlu0
        %1095 = vxpose.xlu0.b32.start [1/16] %v681, 128
        %1096 = vxpose.xlu0.b32.cont [2/16] %v684, 128
        %1097 = vxpose.xlu0.b32.cont [3/16] 0.0, 128
        %1098 = vxpose.xlu0.b32.cont [4/16] 0.0, 128
        %1099 = vxpose.xlu0.b32.cont [5/16] 0.0, 128
        %1100 = vxpose.xlu0.b32.cont [6/16] 0.0, 128
        %1101 = vxpose.xlu0.b32.cont [7/16] 0.0, 128
        %1102 = vxpose.xlu0.b32.cont [8/16] 0.0, 128
        %1103 = vxpose.xlu0.b32.cont [9/16] 0.0, 128
        %1104 = vxpose.xlu0.b32.cont [10/16] 0.0, 128
        %1105 = vxpose.xlu0.b32.cont [11/16] 0.0, 128
        %1106 = vxpose.xlu0.b32.cont [12/16] 0.0, 128
        %1107 = vxpose.xlu0.b32.cont [13/16] 0.0, 128
        %1108 = vxpose.xlu0.b32.cont [14/16] 0.0, 128
        %1109 = vxpose.xlu0.b32.cont [15/16] 0.0, 128
        %1110 = vxpose.xlu0.b32.end [16/16] 0.0, 128
        %v1111 = vpop.trf.xlu0
        %v1112 = vpop.trf.xlu0
        %v1113 = vpop.trf.xlu0
        %v1114 = vpop.trf.xlu0
        %v1115 = vpop.trf.xlu0
        %v1116 = vpop.trf.xlu0
        %v1117 = vpop.trf.xlu0
        %v1118 = vpop.trf.xlu0
        %v1119 = vpop.trf.xlu0
        %v1120 = vpop.trf.xlu0
        %v1121 = vpop.trf.xlu0
        %v1122 = vpop.trf.xlu0
        %v1123 = vpop.trf.xlu0
        %v1124 = vpop.trf.xlu0
        %v1125 = vpop.trf.xlu0
        %v1126 = vpop.trf.xlu0
        %1127 = vxpose.xlu0.b32.start [1/16] %v689, 128
        %1128 = vxpose.xlu0.b32.cont [2/16] %v692, 128
        %1129 = vxpose.xlu0.b32.cont [3/16] 0.0, 128
        %1130 = vxpose.xlu0.b32.cont [4/16] 0.0, 128
        %1131 = vxpose.xlu0.b32.cont [5/16] 0.0, 128
        %1132 = vxpose.xlu0.b32.cont [6/16] 0.0, 128
        %1133 = vxpose.xlu0.b32.cont [7/16] 0.0, 128
        %1134 = vxpose.xlu0.b32.cont [8/16] 0.0, 128
        %1135 = vxpose.xlu0.b32.cont [9/16] 0.0, 128
        %1136 = vxpose.xlu0.b32.cont [10/16] 0.0, 128
        %1137 = vxpose.xlu0.b32.cont [11/16] 0.0, 128
        %1138 = vxpose.xlu0.b32.cont [12/16] 0.0, 128
        %1139 = vxpose.xlu0.b32.cont [13/16] 0.0, 128
        %1140 = vxpose.xlu0.b32.cont [14/16] 0.0, 128
        %1141 = vxpose.xlu0.b32.cont [15/16] 0.0, 128
        %1142 = vxpose.xlu0.b32.end [16/16] 0.0, 128
        %v1143 = vpop.trf.xlu0
        %v1144 = vpop.trf.xlu0
        %v1145 = vpop.trf.xlu0
        %v1146 = vpop.trf.xlu0
        %v1147 = vpop.trf.xlu0
        %v1148 = vpop.trf.xlu0
        %v1149 = vpop.trf.xlu0
        %v1150 = vpop.trf.xlu0
        %v1151 = vpop.trf.xlu0
        %v1152 = vpop.trf.xlu0
        %v1153 = vpop.trf.xlu0
        %v1154 = vpop.trf.xlu0
        %v1155 = vpop.trf.xlu0
        %v1156 = vpop.trf.xlu0
        %v1157 = vpop.trf.xlu0
        %v1158 = vpop.trf.xlu0
        %1159 = vxpose.xlu0.b32.start [1/16] %v697, 128
        %1160 = vxpose.xlu0.b32.cont [2/16] %v700, 128
        %1161 = vxpose.xlu0.b32.cont [3/16] 0.0, 128
        %1162 = vxpose.xlu0.b32.cont [4/16] 0.0, 128
        %1163 = vxpose.xlu0.b32.cont [5/16] 0.0, 128
        %1164 = vxpose.xlu0.b32.cont [6/16] 0.0, 128
        %1165 = vxpose.xlu0.b32.cont [7/16] 0.0, 128
        %1166 = vxpose.xlu0.b32.cont [8/16] 0.0, 128
        %1167 = vxpose.xlu0.b32.cont [9/16] 0.0, 128
        %1168 = vxpose.xlu0.b32.cont [10/16] 0.0, 128
        %1169 = vxpose.xlu0.b32.cont [11/16] 0.0, 128
        %1170 = vxpose.xlu0.b32.cont [12/16] 0.0, 128
        %1171 = vxpose.xlu0.b32.cont [13/16] 0.0, 128
        %1172 = vxpose.xlu0.b32.cont [14/16] 0.0, 128
        %1173 = vxpose.xlu0.b32.cont [15/16] 0.0, 128
        %1174 = vxpose.xlu0.b32.end [16/16] 0.0, 128
        %v1175 = vpop.trf.xlu0
        %v1176 = vpop.trf.xlu0
        %v1177 = vpop.trf.xlu0
        %v1178 = vpop.trf.xlu0
        %v1179 = vpop.trf.xlu0
        %v1180 = vpop.trf.xlu0
        %v1181 = vpop.trf.xlu0
        %v1182 = vpop.trf.xlu0
        %v1183 = vpop.trf.xlu0
        %v1184 = vpop.trf.xlu0
        %v1185 = vpop.trf.xlu0
        %v1186 = vpop.trf.xlu0
        %v1187 = vpop.trf.xlu0
        %v1188 = vpop.trf.xlu0
        %v1189 = vpop.trf.xlu0
        %v1190 = vpop.trf.xlu0
        %1191 = vxpose.xlu0.b32.start [1/16] %v705, 128
        %1192 = vxpose.xlu0.b32.cont [2/16] %v708, 128
        %1193 = vxpose.xlu0.b32.cont [3/16] 0.0, 128
        %1194 = vxpose.xlu0.b32.cont [4/16] 0.0, 128
        %1195 = vxpose.xlu0.b32.cont [5/16] 0.0, 128
        %1196 = vxpose.xlu0.b32.cont [6/16] 0.0, 128
        %1197 = vxpose.xlu0.b32.cont [7/16] 0.0, 128
        %1198 = vxpose.xlu0.b32.cont [8/16] 0.0, 128
        %1199 = vxpose.xlu0.b32.cont [9/16] 0.0, 128
        %1200 = vxpose.xlu0.b32.cont [10/16] 0.0, 128
        %1201 = vxpose.xlu0.b32.cont [11/16] 0.0, 128
        %1202 = vxpose.xlu0.b32.cont [12/16] 0.0, 128
        %1203 = vxpose.xlu0.b32.cont [13/16] 0.0, 128
        %1204 = vxpose.xlu0.b32.cont [14/16] 0.0, 128
        %1205 = vxpose.xlu0.b32.cont [15/16] 0.0, 128
        %1206 = vxpose.xlu0.b32.end [16/16] 0.0, 128
        %v1207 = vpop.trf.xlu0
        %v1208 = vpop.trf.xlu0
        %v1209 = vpop.trf.xlu0
        %v1210 = vpop.trf.xlu0
        %v1211 = vpop.trf.xlu0
        %v1212 = vpop.trf.xlu0
        %v1213 = vpop.trf.xlu0
        %v1214 = vpop.trf.xlu0
        %v1215 = vpop.trf.xlu0
        %v1216 = vpop.trf.xlu0
        %v1217 = vpop.trf.xlu0
        %v1218 = vpop.trf.xlu0
        %v1219 = vpop.trf.xlu0
        %v1220 = vpop.trf.xlu0
        %v1221 = vpop.trf.xlu0
        %v1222 = vpop.trf.xlu0
        %1223 = vxpose.xlu0.b32.start [1/16] %v713, 128
        %1224 = vxpose.xlu0.b32.cont [2/16] %v716, 128
        %1225 = vxpose.xlu0.b32.cont [3/16] 0.0, 128
        %1226 = vxpose.xlu0.b32.cont [4/16] 0.0, 128
        %1227 = vxpose.xlu0.b32.cont [5/16] 0.0, 128
        %1228 = vxpose.xlu0.b32.cont [6/16] 0.0, 128
        %1229 = vxpose.xlu0.b32.cont [7/16] 0.0, 128
        %1230 = vxpose.xlu0.b32.cont [8/16] 0.0, 128
        %1231 = vxpose.xlu0.b32.cont [9/16] 0.0, 128
        %1232 = vxpose.xlu0.b32.cont [10/16] 0.0, 128
        %1233 = vxpose.xlu0.b32.cont [11/16] 0.0, 128
        %1234 = vxpose.xlu0.b32.cont [12/16] 0.0, 128
        %1235 = vxpose.xlu0.b32.cont [13/16] 0.0, 128
        %1236 = vxpose.xlu0.b32.cont [14/16] 0.0, 128
        %1237 = vxpose.xlu0.b32.cont [15/16] 0.0, 128
        %1238 = vxpose.xlu0.b32.end [16/16] 0.0, 128
        %v1239 = vpop.trf.xlu0
        %v1240 = vpop.trf.xlu0
        %v1241 = vpop.trf.xlu0
        %v1242 = vpop.trf.xlu0
        %v1243 = vpop.trf.xlu0
        %v1244 = vpop.trf.xlu0
        %v1245 = vpop.trf.xlu0
        %v1246 = vpop.trf.xlu0
        %v1247 = vpop.trf.xlu0
        %v1248 = vpop.trf.xlu0
        %v1249 = vpop.trf.xlu0
        %v1250 = vpop.trf.xlu0
        %v1251 = vpop.trf.xlu0
        %v1252 = vpop.trf.xlu0
        %v1253 = vpop.trf.xlu0
        %v1254 = vpop.trf.xlu0
        %1255 = vxpose.xlu0.b32.start [1/16] %v721, 128
        %1256 = vxpose.xlu0.b32.cont [2/16] %v724, 128
        %1257 = vxpose.xlu0.b32.cont [3/16] 0.0, 128
        %1258 = vxpose.xlu0.b32.cont [4/16] 0.0, 128
        %1259 = vxpose.xlu0.b32.cont [5/16] 0.0, 128
        %1260 = vxpose.xlu0.b32.cont [6/16] 0.0, 128
        %1261 = vxpose.xlu0.b32.cont [7/16] 0.0, 128
        %1262 = vxpose.xlu0.b32.cont [8/16] 0.0, 128
        %1263 = vxpose.xlu0.b32.cont [9/16] 0.0, 128
        %1264 = vxpose.xlu0.b32.cont [10/16] 0.0, 128
        %1265 = vxpose.xlu0.b32.cont [11/16] 0.0, 128
        %1266 = vxpose.xlu0.b32.cont [12/16] 0.0, 128
        %1267 = vxpose.xlu0.b32.cont [13/16] 0.0, 128
        %1268 = vxpose.xlu0.b32.cont [14/16] 0.0, 128
        %1269 = vxpose.xlu0.b32.cont [15/16] 0.0, 128
        %1270 = vxpose.xlu0.b32.end [16/16] 0.0, 128
        %v1271 = vpop.trf.xlu0
        %v1272 = vpop.trf.xlu0
        %v1273 = vpop.trf.xlu0
        %v1274 = vpop.trf.xlu0
        %v1275 = vpop.trf.xlu0
        %v1276 = vpop.trf.xlu0
        %v1277 = vpop.trf.xlu0
        %v1278 = vpop.trf.xlu0
        %v1279 = vpop.trf.xlu0
        %v1280 = vpop.trf.xlu0
        %v1281 = vpop.trf.xlu0
        %v1282 = vpop.trf.xlu0
        %v1283 = vpop.trf.xlu0
        %v1284 = vpop.trf.xlu0
        %v1285 = vpop.trf.xlu0
        %v1286 = vpop.trf.xlu0
        %1287 = vxpose.xlu0.b32.start [1/16] %v817, 128
        %1288 = vxpose.xlu0.b32.cont [2/16] %v820, 128
        %1289 = vxpose.xlu0.b32.cont [3/16] 0.0, 128
        %1290 = vxpose.xlu0.b32.cont [4/16] 0.0, 128
        %1291 = vxpose.xlu0.b32.cont [5/16] 0.0, 128
        %1292 = vxpose.xlu0.b32.cont [6/16] 0.0, 128
        %1293 = vxpose.xlu0.b32.cont [7/16] 0.0, 128
        %1294 = vxpose.xlu0.b32.cont [8/16] 0.0, 128
        %1295 = vxpose.xlu0.b32.cont [9/16] 0.0, 128
        %1296 = vxpose.xlu0.b32.cont [10/16] 0.0, 128
        %1297 = vxpose.xlu0.b32.cont [11/16] 0.0, 128
        %1298 = vxpose.xlu0.b32.cont [12/16] 0.0, 128
        %1299 = vxpose.xlu0.b32.cont [13/16] 0.0, 128
        %1300 = vxpose.xlu0.b32.cont [14/16] 0.0, 128
        %1301 = vxpose.xlu0.b32.cont [15/16] 0.0, 128
        %1302 = vxpose.xlu0.b32.end [16/16] 0.0, 128
        %v1303 = vpop.trf.xlu0
        %v1304 = vpop.trf.xlu0
        %v1305 = vpop.trf.xlu0
        %v1306 = vpop.trf.xlu0
        %v1307 = vpop.trf.xlu0
        %v1308 = vpop.trf.xlu0
        %v1309 = vpop.trf.xlu0
        %v1310 = vpop.trf.xlu0
        %v1311 = vpop.trf.xlu0
        %v1312 = vpop.trf.xlu0
        %v1313 = vpop.trf.xlu0
        %v1314 = vpop.trf.xlu0
        %v1315 = vpop.trf.xlu0
        %v1316 = vpop.trf.xlu0
        %v1317 = vpop.trf.xlu0
        %v1318 = vpop.trf.xlu0
        %1319 = vxpose.xlu0.b32.start [1/16] %v825, 128
        %1320 = vxpose.xlu0.b32.cont [2/16] %v828, 128
        %1321 = vxpose.xlu0.b32.cont [3/16] 0.0, 128
        %1322 = vxpose.xlu0.b32.cont [4/16] 0.0, 128
        %1323 = vxpose.xlu0.b32.cont [5/16] 0.0, 128
        %1324 = vxpose.xlu0.b32.cont [6/16] 0.0, 128
        %1325 = vxpose.xlu0.b32.cont [7/16] 0.0, 128
        %1326 = vxpose.xlu0.b32.cont [8/16] 0.0, 128
        %1327 = vxpose.xlu0.b32.cont [9/16] 0.0, 128
        %1328 = vxpose.xlu0.b32.cont [10/16] 0.0, 128
        %1329 = vxpose.xlu0.b32.cont [11/16] 0.0, 128
        %1330 = vxpose.xlu0.b32.cont [12/16] 0.0, 128
        %1331 = vxpose.xlu0.b32.cont [13/16] 0.0, 128
        %1332 = vxpose.xlu0.b32.cont [14/16] 0.0, 128
        %1333 = vxpose.xlu0.b32.cont [15/16] 0.0, 128
        %1334 = vxpose.xlu0.b32.end [16/16] 0.0, 128
        %v1335 = vpop.trf.xlu0
        %v1336 = vpop.trf.xlu0
        %v1337 = vpop.trf.xlu0
        %v1338 = vpop.trf.xlu0
        %v1339 = vpop.trf.xlu0
        %v1340 = vpop.trf.xlu0
        %v1341 = vpop.trf.xlu0
        %v1342 = vpop.trf.xlu0
        %v1343 = vpop.trf.xlu0
        %v1344 = vpop.trf.xlu0
        %v1345 = vpop.trf.xlu0
        %v1346 = vpop.trf.xlu0
        %v1347 = vpop.trf.xlu0
        %v1348 = vpop.trf.xlu0
        %v1349 = vpop.trf.xlu0
        %v1350 = vpop.trf.xlu0
        %1351 = vxpose.xlu0.b32.start [1/16] %v833, 128
        %1352 = vxpose.xlu0.b32.cont [2/16] %v836, 128
        %1353 = vxpose.xlu0.b32.cont [3/16] 0.0, 128
        %1354 = vxpose.xlu0.b32.cont [4/16] 0.0, 128
        %1355 = vxpose.xlu0.b32.cont [5/16] 0.0, 128
        %1356 = vxpose.xlu0.b32.cont [6/16] 0.0, 128
        %1357 = vxpose.xlu0.b32.cont [7/16] 0.0, 128
        %1358 = vxpose.xlu0.b32.cont [8/16] 0.0, 128
        %1359 = vxpose.xlu0.b32.cont [9/16] 0.0, 128
        %1360 = vxpose.xlu0.b32.cont [10/16] 0.0, 128
        %1361 = vxpose.xlu0.b32.cont [11/16] 0.0, 128
        %1362 = vxpose.xlu0.b32.cont [12/16] 0.0, 128
        %1363 = vxpose.xlu0.b32.cont [13/16] 0.0, 128
        %1364 = vxpose.xlu0.b32.cont [14/16] 0.0, 128
        %1365 = vxpose.xlu0.b32.cont [15/16] 0.0, 128
        %1366 = vxpose.xlu0.b32.end [16/16] 0.0, 128
        %v1367 = vpop.trf.xlu0
        %v1368 = vpop.trf.xlu0
        %v1369 = vpop.trf.xlu0
        %v1370 = vpop.trf.xlu0
        %v1371 = vpop.trf.xlu0
        %v1372 = vpop.trf.xlu0
        %v1373 = vpop.trf.xlu0
        %v1374 = vpop.trf.xlu0
        %v1375 = vpop.trf.xlu0
        %v1376 = vpop.trf.xlu0
        %v1377 = vpop.trf.xlu0
        %v1378 = vpop.trf.xlu0
        %v1379 = vpop.trf.xlu0
        %v1380 = vpop.trf.xlu0
        %v1381 = vpop.trf.xlu0
        %v1382 = vpop.trf.xlu0
        %1383 = vxpose.xlu0.b32.start [1/16] %v841, 128
        %1384 = vxpose.xlu0.b32.cont [2/16] %v844, 128
        %1385 = vxpose.xlu0.b32.cont [3/16] 0.0, 128
        %1386 = vxpose.xlu0.b32.cont [4/16] 0.0, 128
        %1387 = vxpose.xlu0.b32.cont [5/16] 0.0, 128
        %1388 = vxpose.xlu0.b32.cont [6/16] 0.0, 128
        %1389 = vxpose.xlu0.b32.cont [7/16] 0.0, 128
        %1390 = vxpose.xlu0.b32.cont [8/16] 0.0, 128
        %1391 = vxpose.xlu0.b32.cont [9/16] 0.0, 128
        %1392 = vxpose.xlu0.b32.cont [10/16] 0.0, 128
        %1393 = vxpose.xlu0.b32.cont [11/16] 0.0, 128
        %1394 = vxpose.xlu0.b32.cont [12/16] 0.0, 128
        %1395 = vxpose.xlu0.b32.cont [13/16] 0.0, 128
        %1396 = vxpose.xlu0.b32.cont [14/16] 0.0, 128
        %1397 = vxpose.xlu0.b32.cont [15/16] 0.0, 128
        %1398 = vxpose.xlu0.b32.end [16/16] 0.0, 128
        %v1399 = vpop.trf.xlu0
        %v1400 = vpop.trf.xlu0
        %v1401 = vpop.trf.xlu0
        %v1402 = vpop.trf.xlu0
        %v1403 = vpop.trf.xlu0
        %v1404 = vpop.trf.xlu0
        %v1405 = vpop.trf.xlu0
        %v1406 = vpop.trf.xlu0
        %v1407 = vpop.trf.xlu0
        %v1408 = vpop.trf.xlu0
        %v1409 = vpop.trf.xlu0
        %v1410 = vpop.trf.xlu0
        %v1411 = vpop.trf.xlu0
        %v1412 = vpop.trf.xlu0
        %v1413 = vpop.trf.xlu0
        %v1414 = vpop.trf.xlu0
        %1415 = vxpose.xlu0.b32.start [1/16] %v849, 128
        %1416 = vxpose.xlu0.b32.cont [2/16] %v852, 128
        %1417 = vxpose.xlu0.b32.cont [3/16] 0.0, 128
        %1418 = vxpose.xlu0.b32.cont [4/16] 0.0, 128
        %1419 = vxpose.xlu0.b32.cont [5/16] 0.0, 128
        %1420 = vxpose.xlu0.b32.cont [6/16] 0.0, 128
        %1421 = vxpose.xlu0.b32.cont [7/16] 0.0, 128
        %1422 = vxpose.xlu0.b32.cont [8/16] 0.0, 128
        %1423 = vxpose.xlu0.b32.cont [9/16] 0.0, 128
        %1424 = vxpose.xlu0.b32.cont [10/16] 0.0, 128
        %1425 = vxpose.xlu0.b32.cont [11/16] 0.0, 128
        %1426 = vxpose.xlu0.b32.cont [12/16] 0.0, 128
        %1427 = vxpose.xlu0.b32.cont [13/16] 0.0, 128
        %1428 = vxpose.xlu0.b32.cont [14/16] 0.0, 128
        %1429 = vxpose.xlu0.b32.cont [15/16] 0.0, 128
        %1430 = vxpose.xlu0.b32.end [16/16] 0.0, 128
        %v1431 = vpop.trf.xlu0
        %v1432 = vpop.trf.xlu0
        %v1433 = vpop.trf.xlu0
        %v1434 = vpop.trf.xlu0
        %v1435 = vpop.trf.xlu0
        %v1436 = vpop.trf.xlu0
        %v1437 = vpop.trf.xlu0
        %v1438 = vpop.trf.xlu0
        %v1439 = vpop.trf.xlu0
        %v1440 = vpop.trf.xlu0
        %v1441 = vpop.trf.xlu0
        %v1442 = vpop.trf.xlu0
        %v1443 = vpop.trf.xlu0
        %v1444 = vpop.trf.xlu0
        %v1445 = vpop.trf.xlu0
        %v1446 = vpop.trf.xlu0
        %1447 = vxpose.xlu0.b32.start [1/16] %v857, 128
        %1448 = vxpose.xlu0.b32.cont [2/16] %v860, 128
        %1449 = vxpose.xlu0.b32.cont [3/16] 0.0, 128
        %1450 = vxpose.xlu0.b32.cont [4/16] 0.0, 128
        %1451 = vxpose.xlu0.b32.cont [5/16] 0.0, 128
        %1452 = vxpose.xlu0.b32.cont [6/16] 0.0, 128
        %1453 = vxpose.xlu0.b32.cont [7/16] 0.0, 128
        %1454 = vxpose.xlu0.b32.cont [8/16] 0.0, 128
        %1455 = vxpose.xlu0.b32.cont [9/16] 0.0, 128
        %1456 = vxpose.xlu0.b32.cont [10/16] 0.0, 128
        %1457 = vxpose.xlu0.b32.cont [11/16] 0.0, 128
        %1458 = vxpose.xlu0.b32.cont [12/16] 0.0, 128
        %1459 = vxpose.xlu0.b32.cont [13/16] 0.0, 128
        %1460 = vxpose.xlu0.b32.cont [14/16] 0.0, 128
        %1461 = vxpose.xlu0.b32.cont [15/16] 0.0, 128
        %1462 = vxpose.xlu0.b32.end [16/16] 0.0, 128
        %v1463 = vpop.trf.xlu0
        %v1464 = vpop.trf.xlu0
        %v1465 = vpop.trf.xlu0
        %v1466 = vpop.trf.xlu0
        %v1467 = vpop.trf.xlu0
        %v1468 = vpop.trf.xlu0
        %v1469 = vpop.trf.xlu0
        %v1470 = vpop.trf.xlu0
        %v1471 = vpop.trf.xlu0
        %v1472 = vpop.trf.xlu0
        %v1473 = vpop.trf.xlu0
        %v1474 = vpop.trf.xlu0
        %v1475 = vpop.trf.xlu0
        %v1476 = vpop.trf.xlu0
        %v1477 = vpop.trf.xlu0
        %v1478 = vpop.trf.xlu0
        %1479 = vxpose.xlu0.b32.start [1/16] %v865, 128
        %1480 = vxpose.xlu0.b32.cont [2/16] %v868, 128
        %1481 = vxpose.xlu0.b32.cont [3/16] 0.0, 128
        %1482 = vxpose.xlu0.b32.cont [4/16] 0.0, 128
        %1483 = vxpose.xlu0.b32.cont [5/16] 0.0, 128
        %1484 = vxpose.xlu0.b32.cont [6/16] 0.0, 128
        %1485 = vxpose.xlu0.b32.cont [7/16] 0.0, 128
        %1486 = vxpose.xlu0.b32.cont [8/16] 0.0, 128
        %1487 = vxpose.xlu0.b32.cont [9/16] 0.0, 128
        %1488 = vxpose.xlu0.b32.cont [10/16] 0.0, 128
        %1489 = vxpose.xlu0.b32.cont [11/16] 0.0, 128
        %1490 = vxpose.xlu0.b32.cont [12/16] 0.0, 128
        %1491 = vxpose.xlu0.b32.cont [13/16] 0.0, 128
        %1492 = vxpose.xlu0.b32.cont [14/16] 0.0, 128
        %1493 = vxpose.xlu0.b32.cont [15/16] 0.0, 128
        %1494 = vxpose.xlu0.b32.end [16/16] 0.0, 128
        %v1495 = vpop.trf.xlu0
        %v1496 = vpop.trf.xlu0
        %v1497 = vpop.trf.xlu0
        %v1498 = vpop.trf.xlu0
        %v1499 = vpop.trf.xlu0
        %v1500 = vpop.trf.xlu0
        %v1501 = vpop.trf.xlu0
        %v1502 = vpop.trf.xlu0
        %v1503 = vpop.trf.xlu0
        %v1504 = vpop.trf.xlu0
        %v1505 = vpop.trf.xlu0
        %v1506 = vpop.trf.xlu0
        %v1507 = vpop.trf.xlu0
        %v1508 = vpop.trf.xlu0
        %v1509 = vpop.trf.xlu0
        %v1510 = vpop.trf.xlu0
        %1511 = vxpose.xlu0.b32.start [1/16] %v873, 128
        %1512 = vxpose.xlu0.b32.cont [2/16] %v876, 128
        %1513 = vxpose.xlu0.b32.cont [3/16] 0.0, 128
        %1514 = vxpose.xlu0.b32.cont [4/16] 0.0, 128
        %1515 = vxpose.xlu0.b32.cont [5/16] 0.0, 128
        %1516 = vxpose.xlu0.b32.cont [6/16] 0.0, 128
        %1517 = vxpose.xlu0.b32.cont [7/16] 0.0, 128
        %1518 = vxpose.xlu0.b32.cont [8/16] 0.0, 128
        %1519 = vxpose.xlu0.b32.cont [9/16] 0.0, 128
        %1520 = vxpose.xlu0.b32.cont [10/16] 0.0, 128
        %1521 = vxpose.xlu0.b32.cont [11/16] 0.0, 128
        %1522 = vxpose.xlu0.b32.cont [12/16] 0.0, 128
        %1523 = vxpose.xlu0.b32.cont [13/16] 0.0, 128
        %1524 = vxpose.xlu0.b32.cont [14/16] 0.0, 128
        %1525 = vxpose.xlu0.b32.cont [15/16] 0.0, 128
        %1526 = vxpose.xlu0.b32.end [16/16] 0.0, 128
        %v1527 = vpop.trf.xlu0
        %v1528 = vpop.trf.xlu0
        %v1529 = vpop.trf.xlu0
        %v1530 = vpop.trf.xlu0
        %v1531 = vpop.trf.xlu0
        %v1532 = vpop.trf.xlu0
        %v1533 = vpop.trf.xlu0
        %v1534 = vpop.trf.xlu0
        %v1535 = vpop.trf.xlu0
        %v1536 = vpop.trf.xlu0
        %v1537 = vpop.trf.xlu0
        %v1538 = vpop.trf.xlu0
        %v1539 = vpop.trf.xlu0
        %v1540 = vpop.trf.xlu0
        %v1541 = vpop.trf.xlu0
        %v1542 = vpop.trf.xlu0
        %1543 = vxpose.xlu0.b32.start [1/16] %v969, 128
        %1544 = vxpose.xlu0.b32.cont [2/16] %v972, 128
        %1545 = vxpose.xlu0.b32.cont [3/16] 0.0, 128
        %1546 = vxpose.xlu0.b32.cont [4/16] 0.0, 128
        %1547 = vxpose.xlu0.b32.cont [5/16] 0.0, 128
        %1548 = vxpose.xlu0.b32.cont [6/16] 0.0, 128
        %1549 = vxpose.xlu0.b32.cont [7/16] 0.0, 128
        %1550 = vxpose.xlu0.b32.cont [8/16] 0.0, 128
        %1551 = vxpose.xlu0.b32.cont [9/16] 0.0, 128
        %1552 = vxpose.xlu0.b32.cont [10/16] 0.0, 128
        %1553 = vxpose.xlu0.b32.cont [11/16] 0.0, 128
        %1554 = vxpose.xlu0.b32.cont [12/16] 0.0, 128
        %1555 = vxpose.xlu0.b32.cont [13/16] 0.0, 128
        %1556 = vxpose.xlu0.b32.cont [14/16] 0.0, 128
        %1557 = vxpose.xlu0.b32.cont [15/16] 0.0, 128
        %1558 = vxpose.xlu0.b32.end [16/16] 0.0, 128
        %v1559 = vpop.trf.xlu0
        %v1560 = vpop.trf.xlu0
        %v1561 = vpop.trf.xlu0
        %v1562 = vpop.trf.xlu0
        %v1563 = vpop.trf.xlu0
        %v1564 = vpop.trf.xlu0
        %v1565 = vpop.trf.xlu0
        %v1566 = vpop.trf.xlu0
        %v1567 = vpop.trf.xlu0
        %v1568 = vpop.trf.xlu0
        %v1569 = vpop.trf.xlu0
        %v1570 = vpop.trf.xlu0
        %v1571 = vpop.trf.xlu0
        %v1572 = vpop.trf.xlu0
        %v1573 = vpop.trf.xlu0
        %v1574 = vpop.trf.xlu0
        %1575 = vxpose.xlu0.b32.start [1/16] %v977, 128
        %1576 = vxpose.xlu0.b32.cont [2/16] %v980, 128
        %1577 = vxpose.xlu0.b32.cont [3/16] 0.0, 128
        %1578 = vxpose.xlu0.b32.cont [4/16] 0.0, 128
        %1579 = vxpose.xlu0.b32.cont [5/16] 0.0, 128
        %1580 = vxpose.xlu0.b32.cont [6/16] 0.0, 128
        %1581 = vxpose.xlu0.b32.cont [7/16] 0.0, 128
        %1582 = vxpose.xlu0.b32.cont [8/16] 0.0, 128
        %1583 = vxpose.xlu0.b32.cont [9/16] 0.0, 128
        %1584 = vxpose.xlu0.b32.cont [10/16] 0.0, 128
        %1585 = vxpose.xlu0.b32.cont [11/16] 0.0, 128
        %1586 = vxpose.xlu0.b32.cont [12/16] 0.0, 128
        %1587 = vxpose.xlu0.b32.cont [13/16] 0.0, 128
        %1588 = vxpose.xlu0.b32.cont [14/16] 0.0, 128
        %1589 = vxpose.xlu0.b32.cont [15/16] 0.0, 128
        %1590 = vxpose.xlu0.b32.end [16/16] 0.0, 128
        %v1591 = vpop.trf.xlu0
        %v1592 = vpop.trf.xlu0
        %v1593 = vpop.trf.xlu0
        %v1594 = vpop.trf.xlu0
        %v1595 = vpop.trf.xlu0
        %v1596 = vpop.trf.xlu0
        %v1597 = vpop.trf.xlu0
        %v1598 = vpop.trf.xlu0
        %v1599 = vpop.trf.xlu0
        %v1600 = vpop.trf.xlu0
        %v1601 = vpop.trf.xlu0
        %v1602 = vpop.trf.xlu0
        %v1603 = vpop.trf.xlu0
        %v1604 = vpop.trf.xlu0
        %v1605 = vpop.trf.xlu0
        %v1606 = vpop.trf.xlu0
        %1607 = vxpose.xlu0.b32.start [1/16] %v985, 128
        %1608 = vxpose.xlu0.b32.cont [2/16] %v988, 128
        %1609 = vxpose.xlu0.b32.cont [3/16] 0.0, 128
        %1610 = vxpose.xlu0.b32.cont [4/16] 0.0, 128
        %1611 = vxpose.xlu0.b32.cont [5/16] 0.0, 128
        %1612 = vxpose.xlu0.b32.cont [6/16] 0.0, 128
        %1613 = vxpose.xlu0.b32.cont [7/16] 0.0, 128
        %1614 = vxpose.xlu0.b32.cont [8/16] 0.0, 128
        %1615 = vxpose.xlu0.b32.cont [9/16] 0.0, 128
        %1616 = vxpose.xlu0.b32.cont [10/16] 0.0, 128
        %1617 = vxpose.xlu0.b32.cont [11/16] 0.0, 128
        %1618 = vxpose.xlu0.b32.cont [12/16] 0.0, 128
        %1619 = vxpose.xlu0.b32.cont [13/16] 0.0, 128
        %1620 = vxpose.xlu0.b32.cont [14/16] 0.0, 128
        %1621 = vxpose.xlu0.b32.cont [15/16] 0.0, 128
        %1622 = vxpose.xlu0.b32.end [16/16] 0.0, 128
        %v1623 = vpop.trf.xlu0
        %v1624 = vpop.trf.xlu0
        %v1625 = vpop.trf.xlu0
        %v1626 = vpop.trf.xlu0
        %v1627 = vpop.trf.xlu0
        %v1628 = vpop.trf.xlu0
        %v1629 = vpop.trf.xlu0
        %v1630 = vpop.trf.xlu0
        %v1631 = vpop.trf.xlu0
        %v1632 = vpop.trf.xlu0
        %v1633 = vpop.trf.xlu0
        %v1634 = vpop.trf.xlu0
        %v1635 = vpop.trf.xlu0
        %v1636 = vpop.trf.xlu0
        %v1637 = vpop.trf.xlu0
        %v1638 = vpop.trf.xlu0
        %1639 = vxpose.xlu0.b32.start [1/16] %v993, 128
        %1640 = vxpose.xlu0.b32.cont [2/16] %v996, 128
        %1641 = vxpose.xlu0.b32.cont [3/16] 0.0, 128
        %1642 = vxpose.xlu0.b32.cont [4/16] 0.0, 128
        %1643 = vxpose.xlu0.b32.cont [5/16] 0.0, 128
        %1644 = vxpose.xlu0.b32.cont [6/16] 0.0, 128
        %1645 = vxpose.xlu0.b32.cont [7/16] 0.0, 128
        %1646 = vxpose.xlu0.b32.cont [8/16] 0.0, 128
        %1647 = vxpose.xlu0.b32.cont [9/16] 0.0, 128
        %1648 = vxpose.xlu0.b32.cont [10/16] 0.0, 128
        %1649 = vxpose.xlu0.b32.cont [11/16] 0.0, 128
        %1650 = vxpose.xlu0.b32.cont [12/16] 0.0, 128
        %1651 = vxpose.xlu0.b32.cont [13/16] 0.0, 128
        %1652 = vxpose.xlu0.b32.cont [14/16] 0.0, 128
        %1653 = vxpose.xlu0.b32.cont [15/16] 0.0, 128
        %1654 = vxpose.xlu0.b32.end [16/16] 0.0, 128
        %v1655 = vpop.trf.xlu0
        %v1656 = vpop.trf.xlu0
        %v1657 = vpop.trf.xlu0
        %v1658 = vpop.trf.xlu0
        %v1659 = vpop.trf.xlu0
        %v1660 = vpop.trf.xlu0
        %v1661 = vpop.trf.xlu0
        %v1662 = vpop.trf.xlu0
        %v1663 = vpop.trf.xlu0
        %v1664 = vpop.trf.xlu0
        %v1665 = vpop.trf.xlu0
        %v1666 = vpop.trf.xlu0
        %v1667 = vpop.trf.xlu0
        %v1668 = vpop.trf.xlu0
        %v1669 = vpop.trf.xlu0
        %v1670 = vpop.trf.xlu0
        %1671 = vxpose.xlu0.b32.start [1/16] %v1001, 128
        %1672 = vxpose.xlu0.b32.cont [2/16] %v1004, 128
        %1673 = vxpose.xlu0.b32.cont [3/16] 0.0, 128
        %1674 = vxpose.xlu0.b32.cont [4/16] 0.0, 128
        %1675 = vxpose.xlu0.b32.cont [5/16] 0.0, 128
        %1676 = vxpose.xlu0.b32.cont [6/16] 0.0, 128
        %1677 = vxpose.xlu0.b32.cont [7/16] 0.0, 128
        %1678 = vxpose.xlu0.b32.cont [8/16] 0.0, 128
        %1679 = vxpose.xlu0.b32.cont [9/16] 0.0, 128
        %1680 = vxpose.xlu0.b32.cont [10/16] 0.0, 128
        %1681 = vxpose.xlu0.b32.cont [11/16] 0.0, 128
        %1682 = vxpose.xlu0.b32.cont [12/16] 0.0, 128
        %1683 = vxpose.xlu0.b32.cont [13/16] 0.0, 128
        %1684 = vxpose.xlu0.b32.cont [14/16] 0.0, 128
        %1685 = vxpose.xlu0.b32.cont [15/16] 0.0, 128
        %1686 = vxpose.xlu0.b32.end [16/16] 0.0, 128
        %v1687 = vpop.trf.xlu0
        %v1688 = vpop.trf.xlu0
        %v1689 = vpop.trf.xlu0
        %v1690 = vpop.trf.xlu0
        %v1691 = vpop.trf.xlu0
        %v1692 = vpop.trf.xlu0
        %v1693 = vpop.trf.xlu0
        %v1694 = vpop.trf.xlu0
        %v1695 = vpop.trf.xlu0
        %v1696 = vpop.trf.xlu0
        %v1697 = vpop.trf.xlu0
        %v1698 = vpop.trf.xlu0
        %v1699 = vpop.trf.xlu0
        %v1700 = vpop.trf.xlu0
        %v1701 = vpop.trf.xlu0
        %v1702 = vpop.trf.xlu0
        %1703 = vxpose.xlu0.b32.start [1/16] %v1009, 128
        %1704 = vxpose.xlu0.b32.cont [2/16] %v1012, 128
        %1705 = vxpose.xlu0.b32.cont [3/16] 0.0, 128
        %1706 = vxpose.xlu0.b32.cont [4/16] 0.0, 128
        %1707 = vxpose.xlu0.b32.cont [5/16] 0.0, 128
        %1708 = vxpose.xlu0.b32.cont [6/16] 0.0, 128
        %1709 = vxpose.xlu0.b32.cont [7/16] 0.0, 128
        %1710 = vxpose.xlu0.b32.cont [8/16] 0.0, 128
        %1711 = vxpose.xlu0.b32.cont [9/16] 0.0, 128
        %1712 = vxpose.xlu0.b32.cont [10/16] 0.0, 128
        %1713 = vxpose.xlu0.b32.cont [11/16] 0.0, 128
        %1714 = vxpose.xlu0.b32.cont [12/16] 0.0, 128
        %1715 = vxpose.xlu0.b32.cont [13/16] 0.0, 128
        %1716 = vxpose.xlu0.b32.cont [14/16] 0.0, 128
        %1717 = vxpose.xlu0.b32.cont [15/16] 0.0, 128
        %1718 = vxpose.xlu0.b32.end [16/16] 0.0, 128
        %v1719 = vpop.trf.xlu0
        %v1720 = vpop.trf.xlu0
        %v1721 = vpop.trf.xlu0
        %v1722 = vpop.trf.xlu0
        %v1723 = vpop.trf.xlu0
        %v1724 = vpop.trf.xlu0
        %v1725 = vpop.trf.xlu0
        %v1726 = vpop.trf.xlu0
        %v1727 = vpop.trf.xlu0
        %v1728 = vpop.trf.xlu0
        %v1729 = vpop.trf.xlu0
        %v1730 = vpop.trf.xlu0
        %v1731 = vpop.trf.xlu0
        %v1732 = vpop.trf.xlu0
        %v1733 = vpop.trf.xlu0
        %v1734 = vpop.trf.xlu0
        %1735 = vxpose.xlu0.b32.start [1/16] %v1017, 128
        %1736 = vxpose.xlu0.b32.cont [2/16] %v1020, 128
        %1737 = vxpose.xlu0.b32.cont [3/16] 0.0, 128
        %1738 = vxpose.xlu0.b32.cont [4/16] 0.0, 128
        %1739 = vxpose.xlu0.b32.cont [5/16] 0.0, 128
        %1740 = vxpose.xlu0.b32.cont [6/16] 0.0, 128
        %1741 = vxpose.xlu0.b32.cont [7/16] 0.0, 128
        %1742 = vxpose.xlu0.b32.cont [8/16] 0.0, 128
        %1743 = vxpose.xlu0.b32.cont [9/16] 0.0, 128
        %1744 = vxpose.xlu0.b32.cont [10/16] 0.0, 128
        %1745 = vxpose.xlu0.b32.cont [11/16] 0.0, 128
        %1746 = vxpose.xlu0.b32.cont [12/16] 0.0, 128
        %1747 = vxpose.xlu0.b32.cont [13/16] 0.0, 128
        %1748 = vxpose.xlu0.b32.cont [14/16] 0.0, 128
        %1749 = vxpose.xlu0.b32.cont [15/16] 0.0, 128
        %1750 = vxpose.xlu0.b32.end [16/16] 0.0, 128
        %v1751 = vpop.trf.xlu0
        %v1752 = vpop.trf.xlu0
        %v1753 = vpop.trf.xlu0
        %v1754 = vpop.trf.xlu0
        %v1755 = vpop.trf.xlu0
        %v1756 = vpop.trf.xlu0
        %v1757 = vpop.trf.xlu0
        %v1758 = vpop.trf.xlu0
        %v1759 = vpop.trf.xlu0
        %v1760 = vpop.trf.xlu0
        %v1761 = vpop.trf.xlu0
        %v1762 = vpop.trf.xlu0
        %v1763 = vpop.trf.xlu0
        %v1764 = vpop.trf.xlu0
        %v1765 = vpop.trf.xlu0
        %v1766 = vpop.trf.xlu0
        %1767 = vxpose.xlu0.b32.start [1/16] %v1025, 128
        %1768 = vxpose.xlu0.b32.cont [2/16] %v1028, 128
        %1769 = vxpose.xlu0.b32.cont [3/16] 0.0, 128
        %1770 = vxpose.xlu0.b32.cont [4/16] 0.0, 128
        %1771 = vxpose.xlu0.b32.cont [5/16] 0.0, 128
        %1772 = vxpose.xlu0.b32.cont [6/16] 0.0, 128
        %1773 = vxpose.xlu0.b32.cont [7/16] 0.0, 128
        %1774 = vxpose.xlu0.b32.cont [8/16] 0.0, 128
        %1775 = vxpose.xlu0.b32.cont [9/16] 0.0, 128
        %1776 = vxpose.xlu0.b32.cont [10/16] 0.0, 128
        %1777 = vxpose.xlu0.b32.cont [11/16] 0.0, 128
        %1778 = vxpose.xlu0.b32.cont [12/16] 0.0, 128
        %1779 = vxpose.xlu0.b32.cont [13/16] 0.0, 128
        %1780 = vxpose.xlu0.b32.cont [14/16] 0.0, 128
        %1781 = vxpose.xlu0.b32.cont [15/16] 0.0, 128
        %1782 = vxpose.xlu0.b32.end [16/16] 0.0, 128
        %v1783 = vpop.trf.xlu0
        %v1784 = vpop.trf.xlu0
        %v1785 = vpop.trf.xlu0
        %v1786 = vpop.trf.xlu0
        %v1787 = vpop.trf.xlu0
        %v1788 = vpop.trf.xlu0
        %v1789 = vpop.trf.xlu0
        %v1790 = vpop.trf.xlu0
        %v1791 = vpop.trf.xlu0
        %v1792 = vpop.trf.xlu0
        %v1793 = vpop.trf.xlu0
        %v1794 = vpop.trf.xlu0
        %v1795 = vpop.trf.xlu0
        %v1796 = vpop.trf.xlu0
        %v1797 = vpop.trf.xlu0
        %v1798 = vpop.trf.xlu0
        %v1799 = vld [vmem:[%s9] sm:$0xf]
        %v1800 = vld [vmem:[%s9 + $0x4] sm:$0xf]
        %v1801 = vld [vmem:[%s9 + $0x8] sm:$0xf]
        %v1802 = vld [vmem:[%s9 + $0xc] sm:$0xf]
        %v1803 = vld [vmem:[%s10] sm:$0xff]
        %v1804 = vld [vmem:[%s10 + $0x8] sm:$0xff]
        %v1805 = vld [vmem:[%s10 + $0x10] sm:$0xff]
        %v1806 = vld [vmem:[%s10 + $0x18] sm:$0xff]
        %v1807 = vmul.f32 %v1047, %v1303
        %v1808 = vmul.f32 %v1047, %v1335
        %v1809 = vmul.f32 %v1047, %v1367
        %v1810 = vmul.f32 %v1047, %v1399
        %v1811 = vmul.f32 %v1047, %v1431
        %v1812 = vmul.f32 %v1047, %v1463
        %v1813 = vmul.f32 %v1047, %v1495
        %v1814 = vmul.f32 %v1047, %v1527
        %v1815 = vmul.f32 %v1048, %v1304
        %v1816 = vmul.f32 %v1048, %v1336
        %v1817 = vmul.f32 %v1048, %v1368
        %v1818 = vmul.f32 %v1048, %v1400
        %v1819 = vmul.f32 %v1048, %v1432
        %v1820 = vmul.f32 %v1048, %v1464
        %v1821 = vmul.f32 %v1048, %v1496
        %v1822 = vmul.f32 %v1048, %v1528
        %v1823 = vadd.f32 %v1807, %v1815
        %v1824 = vadd.f32 %v1808, %v1816
        %v1825 = vadd.f32 %v1809, %v1817
        %v1826 = vadd.f32 %v1810, %v1818
        %v1827 = vadd.f32 %v1811, %v1819
        %v1828 = vadd.f32 %v1812, %v1820
        %v1829 = vadd.f32 %v1813, %v1821
        %v1830 = vadd.f32 %v1814, %v1822
        %v1831 = vmul.f32 %v1049, %v1305
        %v1832 = vmul.f32 %v1049, %v1337
        %v1833 = vmul.f32 %v1049, %v1369
        %v1834 = vmul.f32 %v1049, %v1401
        %v1835 = vmul.f32 %v1049, %v1433
        %v1836 = vmul.f32 %v1049, %v1465
        %v1837 = vmul.f32 %v1049, %v1497
        %v1838 = vmul.f32 %v1049, %v1529
        %v1839 = vadd.f32 %v1823, %v1831
        %v1840 = vadd.f32 %v1824, %v1832
        %v1841 = vadd.f32 %v1825, %v1833
        %v1842 = vadd.f32 %v1826, %v1834
        %v1843 = vadd.f32 %v1827, %v1835
        %v1844 = vadd.f32 %v1828, %v1836
        %v1845 = vadd.f32 %v1829, %v1837
        %v1846 = vadd.f32 %v1830, %v1838
        %v1847 = vmul.f32 %v1050, %v1306
        %v1848 = vmul.f32 %v1050, %v1338
        %v1849 = vmul.f32 %v1050, %v1370
        %v1850 = vmul.f32 %v1050, %v1402
        %v1851 = vmul.f32 %v1050, %v1434
        %v1852 = vmul.f32 %v1050, %v1466
        %v1853 = vmul.f32 %v1050, %v1498
        %v1854 = vmul.f32 %v1050, %v1530
        %v1855 = vadd.f32 %v1839, %v1847
        %v1856 = vadd.f32 %v1840, %v1848
        %v1857 = vadd.f32 %v1841, %v1849
        %v1858 = vadd.f32 %v1842, %v1850
        %v1859 = vadd.f32 %v1843, %v1851
        %v1860 = vadd.f32 %v1844, %v1852
        %v1861 = vadd.f32 %v1845, %v1853
        %v1862 = vadd.f32 %v1846, %v1854
        %vm1863 = vcmask 130048
        %v1864 = vsel %vm1863, %v1855, -inf
        %v1865 = vsel %vm1863, %v1856, -inf
        %v1866 = vsel %vm1863, %v1857, -inf
        %v1867 = vsel %vm1863, %v1858, -inf
        %v1868 = vsel %vm1863, %v1859, -inf
        %v1869 = vmax.f32 %v1864, %v1868
        %v1870 = vsel %vm1863, %v1860, -inf
        %v1871 = vmax.f32 %v1865, %v1870
        %v1872 = vsel %vm1863, %v1861, -inf
        %v1873 = vmax.f32 %v1866, %v1872
        %v1874 = vsel %vm1863, %v1862, -inf
        %v1875 = vmax.f32 %v1867, %v1874
        %v1876 = vmax.f32 %v1869, %v1871
        %v1877 = vmax.f32 %v1873, %v1875
        %v1878 = vmax.f32 %v1876, %v1877
        %v1879 = vsub.f32 %v1855, %v1878
        %v1880 = vsub.f32 %v1856, %v1878
        %v1881 = vsub.f32 %v1857, %v1878
        %v1882 = vsub.f32 %v1858, %v1878
        %v1883 = vsub.f32 %v1859, %v1878
        %v1884 = vsub.f32 %v1860, %v1878
        %v1885 = vsub.f32 %v1861, %v1878
        %v1886 = vsub.f32 %v1862, %v1878
        %v1887 = vmul.f32 %v1879, 1.442695
        %v1888 = vpow.pop %v1887
        %v1889 = vmul.f32 %v1880, 1.442695
        %v1890 = vpow.pop %v1889
        %v1891 = vmul.f32 %v1881, 1.442695
        %v1892 = vpow.pop %v1891
        %v1893 = vmul.f32 %v1882, 1.442695
        %v1894 = vpow.pop %v1893
        %v1895 = vmul.f32 %v1883, 1.442695
        %v1896 = vpow.pop %v1895
        %v1897 = vmul.f32 %v1884, 1.442695
        %v1898 = vpow.pop %v1897
        %v1899 = vmul.f32 %v1885, 1.442695
        %v1900 = vpow.pop %v1899
        %v1901 = vmul.f32 %v1886, 1.442695
        %v1902 = vpow.pop %v1901
        %v1903 = vsel %vm1863, %v1888, 0.0
        %v1904 = vsel %vm1863, %v1890, 0.0
        %v1905 = vadd.f32 %v1903, %v1904
        %v1906 = vsel %vm1863, %v1892, 0.0
        %v1907 = vadd.f32 %v1905, %v1906
        %v1908 = vsel %vm1863, %v1894, 0.0
        %v1909 = vadd.f32 %v1907, %v1908
        %v1910 = vsel %vm1863, %v1896, 0.0
        %v1911 = vadd.f32 %v1909, %v1910
        %v1912 = vsel %vm1863, %v1898, 0.0
        %v1913 = vadd.f32 %v1911, %v1912
        %v1914 = vsel %vm1863, %v1900, 0.0
        %v1915 = vadd.f32 %v1913, %v1914
        %v1916 = vsel %vm1863, %v1902, 0.0
        %v1917 = vadd.f32 %v1915, %v1916
        %v1918 = vrcp.pop %v1917
        %v1919 = vmul.f32 %v1888, %v1918
        %v1920 = vmul.f32 %v1890, %v1918
        %v1921 = vmul.f32 %v1892, %v1918
        %v1922 = vmul.f32 %v1894, %v1918
        %v1923 = vmul.f32 %v1896, %v1918
        %v1924 = vmul.f32 %v1898, %v1918
        %v1925 = vmul.f32 %v1900, %v1918
        %v1926 = vmul.f32 %v1902, %v1918
        %v1927 = vmul.f32 %v1919, %v1559
        %v1928 = vmul.f32 %v1920, %v1591
        %v1929 = vmul.f32 %v1921, %v1623
        %v1930 = vmul.f32 %v1922, %v1655
        %v1931 = vmul.f32 %v1923, %v1687
        %v1932 = vmul.f32 %v1924, %v1719
        %v1933 = vmul.f32 %v1925, %v1751
        %v1934 = vmul.f32 %v1926, %v1783
        %v1935 = vsel %vm1863, %v1927, 0.0
        %v1936 = vsel %vm1863, %v1928, 0.0
        %v1937 = vadd.f32 %v1935, %v1936
        %v1938 = vsel %vm1863, %v1929, 0.0
        %v1939 = vadd.f32 %v1937, %v1938
        %v1940 = vsel %vm1863, %v1930, 0.0
        %v1941 = vadd.f32 %v1939, %v1940
        %v1942 = vsel %vm1863, %v1931, 0.0
        %v1943 = vadd.f32 %v1941, %v1942
        %v1944 = vsel %vm1863, %v1932, 0.0
        %v1945 = vadd.f32 %v1943, %v1944
        %v1946 = vsel %vm1863, %v1933, 0.0
        %v1947 = vadd.f32 %v1945, %v1946
        %v1948 = vsel %vm1863, %v1934, 0.0
        %v1949 = vadd.f32 %v1947, %v1948
        %v1950 = vmul.f32 %v1919, %v1560
        %v1951 = vmul.f32 %v1920, %v1592
        %v1952 = vmul.f32 %v1921, %v1624
        %v1953 = vmul.f32 %v1922, %v1656
        %v1954 = vmul.f32 %v1923, %v1688
        %v1955 = vmul.f32 %v1924, %v1720
        %v1956 = vmul.f32 %v1925, %v1752
        %v1957 = vmul.f32 %v1926, %v1784
        %v1958 = vsel %vm1863, %v1950, 0.0
        %v1959 = vsel %vm1863, %v1951, 0.0
        %v1960 = vadd.f32 %v1958, %v1959
        %v1961 = vsel %vm1863, %v1952, 0.0
        %v1962 = vadd.f32 %v1960, %v1961
        %v1963 = vsel %vm1863, %v1953, 0.0
        %v1964 = vadd.f32 %v1962, %v1963
        %v1965 = vsel %vm1863, %v1954, 0.0
        %v1966 = vadd.f32 %v1964, %v1965
        %v1967 = vsel %vm1863, %v1955, 0.0
        %v1968 = vadd.f32 %v1966, %v1967
        %v1969 = vsel %vm1863, %v1956, 0.0
        %v1970 = vadd.f32 %v1968, %v1969
        %v1971 = vsel %vm1863, %v1957, 0.0
        %v1972 = vadd.f32 %v1970, %v1971
        %v1973 = vmul.f32 %v1919, %v1561
        %v1974 = vmul.f32 %v1920, %v1593
        %v1975 = vmul.f32 %v1921, %v1625
        %v1976 = vmul.f32 %v1922, %v1657
        %v1977 = vmul.f32 %v1923, %v1689
        %v1978 = vmul.f32 %v1924, %v1721
        %v1979 = vmul.f32 %v1925, %v1753
        %v1980 = vmul.f32 %v1926, %v1785
        %v1981 = vsel %vm1863, %v1973, 0.0
        %v1982 = vsel %vm1863, %v1974, 0.0
        %v1983 = vadd.f32 %v1981, %v1982
        %v1984 = vsel %vm1863, %v1975, 0.0
        %v1985 = vadd.f32 %v1983, %v1984
        %v1986 = vsel %vm1863, %v1976, 0.0
        %v1987 = vadd.f32 %v1985, %v1986
        %v1988 = vsel %vm1863, %v1977, 0.0
        %v1989 = vadd.f32 %v1987, %v1988
        %v1990 = vsel %vm1863, %v1978, 0.0
        %v1991 = vadd.f32 %v1989, %v1990
        %v1992 = vsel %vm1863, %v1979, 0.0
        %v1993 = vadd.f32 %v1991, %v1992
        %v1994 = vsel %vm1863, %v1980, 0.0
        %v1995 = vadd.f32 %v1993, %v1994
        %v1996 = vmul.f32 %v1919, %v1562
        %v1997 = vmul.f32 %v1920, %v1594
        %v1998 = vmul.f32 %v1921, %v1626
        %v1999 = vmul.f32 %v1922, %v1658
        %v2000 = vmul.f32 %v1923, %v1690
        %v2001 = vmul.f32 %v1924, %v1722
        %v2002 = vmul.f32 %v1925, %v1754
        %v2003 = vmul.f32 %v1926, %v1786
        %v2004 = vsel %vm1863, %v1996, 0.0
        %v2005 = vsel %vm1863, %v1997, 0.0
        %v2006 = vadd.f32 %v2004, %v2005
        %v2007 = vsel %vm1863, %v1998, 0.0
        %v2008 = vadd.f32 %v2006, %v2007
        %v2009 = vsel %vm1863, %v1999, 0.0
        %v2010 = vadd.f32 %v2008, %v2009
        %v2011 = vsel %vm1863, %v2000, 0.0
        %v2012 = vadd.f32 %v2010, %v2011
        %v2013 = vsel %vm1863, %v2001, 0.0
        %v2014 = vadd.f32 %v2012, %v2013
        %v2015 = vsel %vm1863, %v2002, 0.0
        %v2016 = vadd.f32 %v2014, %v2015
        %v2017 = vsel %vm1863, %v2003, 0.0
        %v2018 = vadd.f32 %v2016, %v2017
        %v2019 = vpack.c.bf16 %v1972, %v1949
        %v2020 = vpack.c.bf16 %v2018, %v1995
        %2022 = vset.pattern.permute.xlu0 0
        %2023 = vperm.xlu0 %2022, %v1803
        %v2024 = vpop.permute.xlu0 %2023
        %2027 = vset.pattern.permute.xlu0 0
        %2028 = vperm.xlu0 %2027, %v1804
        %v2029 = vpop.permute.xlu0 %2028
        %2032 = vset.pattern.permute.xlu0 0
        %2033 = vperm.xlu0 %2032, %v1805
        %v2034 = vpop.permute.xlu0 %2033
        %2037 = vset.pattern.permute.xlu0 0
        %2038 = vperm.xlu0 %2037, %v1806
        %v2039 = vpop.permute.xlu0 %2038
        %v2045 = vunpack.c.l.b16 %v1799
        %v2046 = vunpack.c.l.b16 %v1800
        %v2047 = vunpack.c.l.b16 %v1801
        %v2048 = vunpack.c.l.b16 %v1802
        %v2049 = vpack.c.b16 %v2046, %v2045
        %v2050 = vpack.c.b16 %v2048, %v2047
        %v2052 = vsel %vm605, %v2049, 0
        %v2055 = vsel %vm605, %v2050, 0
        %2057 = vmatprep.subr.bf16.mxu0 0
        %2058 = vmatpush1.bf16.msra.mxu0 %v2019
        %2059 = vmatprep.subr.bf16.mxu0 0
        %2060 = vmatpush1.bf16.msra.mxu0 %v2020
        %2061 = vmatprep.subr.bf16.mxu0 0
        %2062 = vmatpush1.bf16.msra.mxu0 0
        %2063 = vmatprep.subr.bf16.mxu0 0
        %2064 = vmatpush1.bf16.msra.mxu0 0
        %2065 = vmatprep.subr.bf16.mxu0 0
        %2066 = vmatpush1.bf16.msra.mxu0 0
        %2067 = vmatprep.subr.bf16.mxu0 0
        %2068 = vmatpush1.bf16.msra.mxu0 0
        %2069 = vmatprep.subr.bf16.mxu0 0
        %2070 = vmatpush1.bf16.msra.mxu0 0
        %2071 = vmatprep.subr.bf16.mxu0 0
        %2072 = vmatpush1.bf16.msra.mxu0 0
        %2073 = vmatprep.subr.bf16.mxu0 0
        %2074 = vmatpush1.bf16.msra.mxu0 0
        %2075 = vmatprep.subr.bf16.mxu0 0
        %2076 = vmatpush1.bf16.msra.mxu0 0
        %2077 = vmatprep.subr.bf16.mxu0 0
        %2078 = vmatpush1.bf16.msra.mxu0 0
        %2079 = vmatprep.subr.bf16.mxu0 0
        %2080 = vmatpush1.bf16.msra.mxu0 0
        %2081 = vmatprep.subr.bf16.mxu0 0
        %2082 = vmatpush1.bf16.msra.mxu0 0
        %2083 = vmatprep.subr.bf16.mxu0 0
        %2084 = vmatpush1.bf16.msra.mxu0 0
        %2085 = vmatprep.subr.bf16.mxu0 0
        %2086 = vmatpush1.bf16.msra.mxu0 0
        %2087 = vmatprep.subr.bf16.mxu0 0
        %2088 = vmatpush1.bf16.msra.mxu0 0
        %2089 = vmatprep.mubr.bf16.mxu0 0
        %2090 = vmatmul.mubr.bf16.gmra.mrb[0].mxu0 %v2052
        %v2091 = vpop.f32.mrb[0].mxu0
        %v2092 = vadd.f32 %v2024, %v2091
        %v2093 = vpop.f32.mrb[0].mxu0
        %v2094 = vpop.f32.mrb[0].mxu0
        %v2095 = vadd.f32 %v2029, %v2094
        %v2096 = vpop.f32.mrb[0].mxu0
        %2097 = vmatprep.mubr.bf16.mxu0 0
        %2098 = vmatmul.mubr.bf16.gmra.mrb[0].mxu0 %v2055
        %v2099 = vpop.f32.mrb[0].mxu0
        %v2100 = vadd.f32 %v2034, %v2099
        %v2101 = vpop.f32.mrb[0].mxu0
        %v2102 = vpop.f32.mrb[0].mxu0
        %v2103 = vadd.f32 %v2039, %v2102
        %v2104 = vpop.f32.mrb[0].mxu0
        %2105 = vdwg.mxu0
        %2106 = vxpose.xlu0.b32.start [1/16] %v2092, 128
        %2107 = vxpose.xlu0.b32.cont [2/16] %v2095, 128
        %2108 = vxpose.xlu0.b32.cont [3/16] %v2100, 128
        %2109 = vxpose.xlu0.b32.cont [4/16] %v2103, 128
        %2110 = vxpose.xlu0.b32.cont [5/16] 0.0, 128
        %2111 = vxpose.xlu0.b32.cont [6/16] 0.0, 128
        %2112 = vxpose.xlu0.b32.cont [7/16] 0.0, 128
        %2113 = vxpose.xlu0.b32.cont [8/16] 0.0, 128
        %2114 = vxpose.xlu0.b32.cont [9/16] 0.0, 128
        %2115 = vxpose.xlu0.b32.cont [10/16] 0.0, 128
        %2116 = vxpose.xlu0.b32.cont [11/16] 0.0, 128
        %2117 = vxpose.xlu0.b32.cont [12/16] 0.0, 128
        %2118 = vxpose.xlu0.b32.cont [13/16] 0.0, 128
        %2119 = vxpose.xlu0.b32.cont [14/16] 0.0, 128
        %2120 = vxpose.xlu0.b32.cont [15/16] 0.0, 128
        %2121 = vxpose.xlu0.b32.end [16/16] 0.0, 128
        %v2122 = vpop.trf.xlu0
        %v2123 = vpop.trf.xlu0
        %v2124 = vpop.trf.xlu0
        %v2125 = vpop.trf.xlu0
        %v2126 = vpop.trf.xlu0
        %v2127 = vpop.trf.xlu0
        %v2128 = vpop.trf.xlu0
        %v2129 = vpop.trf.xlu0
        %v2130 = vpop.trf.xlu0
        %v2131 = vpop.trf.xlu0
        %v2132 = vpop.trf.xlu0
        %v2133 = vpop.trf.xlu0
        %v2134 = vpop.trf.xlu0
        %v2135 = vpop.trf.xlu0
        %v2136 = vpop.trf.xlu0
        %v2137 = vpop.trf.xlu0
        %2138 = vst.msk [vmem:[%s520] sm:$0xff] %vm605, %v2122
        %2139 = vst.msk [vmem:[%s520 + $0x8] sm:$0xff] %vm605, %v2123
        %v2140 = vmul.f32 %v1079, %v1303
        %v2141 = vmul.f32 %v1079, %v1335
        %v2142 = vmul.f32 %v1079, %v1367
        %v2143 = vmul.f32 %v1079, %v1399
        %v2144 = vmul.f32 %v1079, %v1431
        %v2145 = vmul.f32 %v1079, %v1463
        %v2146 = vmul.f32 %v1079, %v1495
        %v2147 = vmul.f32 %v1079, %v1527
        %v2148 = vmul.f32 %v1080, %v1304
        %v2149 = vmul.f32 %v1080, %v1336
        %v2150 = vmul.f32 %v1080, %v1368
        %v2151 = vmul.f32 %v1080, %v1400
        %v2152 = vmul.f32 %v1080, %v1432
        %v2153 = vmul.f32 %v1080, %v1464
        %v2154 = vmul.f32 %v1080, %v1496
        %v2155 = vmul.f32 %v1080, %v1528
        %v2156 = vadd.f32 %v2140, %v2148
        %v2157 = vadd.f32 %v2141, %v2149
        %v2158 = vadd.f32 %v2142, %v2150
        %v2159 = vadd.f32 %v2143, %v2151
        %v2160 = vadd.f32 %v2144, %v2152
        %v2161 = vadd.f32 %v2145, %v2153
        %v2162 = vadd.f32 %v2146, %v2154
        %v2163 = vadd.f32 %v2147, %v2155
        %v2164 = vmul.f32 %v1081, %v1305
        %v2165 = vmul.f32 %v1081, %v1337
        %v2166 = vmul.f32 %v1081, %v1369
        %v2167 = vmul.f32 %v1081, %v1401
        %v2168 = vmul.f32 %v1081, %v1433
        %v2169 = vmul.f32 %v1081, %v1465
        %v2170 = vmul.f32 %v1081, %v1497
        %v2171 = vmul.f32 %v1081, %v1529
        %v2172 = vadd.f32 %v2156, %v2164
        %v2173 = vadd.f32 %v2157, %v2165
        %v2174 = vadd.f32 %v2158, %v2166
        %v2175 = vadd.f32 %v2159, %v2167
        %v2176 = vadd.f32 %v2160, %v2168
        %v2177 = vadd.f32 %v2161, %v2169
        %v2178 = vadd.f32 %v2162, %v2170
        %v2179 = vadd.f32 %v2163, %v2171
        %v2180 = vmul.f32 %v1082, %v1306
        %v2181 = vmul.f32 %v1082, %v1338
        %v2182 = vmul.f32 %v1082, %v1370
        %v2183 = vmul.f32 %v1082, %v1402
        %v2184 = vmul.f32 %v1082, %v1434
        %v2185 = vmul.f32 %v1082, %v1466
        %v2186 = vmul.f32 %v1082, %v1498
        %v2187 = vmul.f32 %v1082, %v1530
        %v2188 = vadd.f32 %v2172, %v2180
        %v2189 = vadd.f32 %v2173, %v2181
        %v2190 = vadd.f32 %v2174, %v2182
        %v2191 = vadd.f32 %v2175, %v2183
        %v2192 = vadd.f32 %v2176, %v2184
        %v2193 = vadd.f32 %v2177, %v2185
        %v2194 = vadd.f32 %v2178, %v2186
        %v2195 = vadd.f32 %v2179, %v2187
        %v2196 = vsel %vm1863, %v2188, -inf
        %v2197 = vsel %vm1863, %v2189, -inf
        %v2198 = vsel %vm1863, %v2190, -inf
        %v2199 = vsel %vm1863, %v2191, -inf
        %v2200 = vsel %vm1863, %v2192, -inf
        %v2201 = vmax.f32 %v2196, %v2200
        %v2202 = vsel %vm1863, %v2193, -inf
        %v2203 = vmax.f32 %v2197, %v2202
        %v2204 = vsel %vm1863, %v2194, -inf
        %v2205 = vmax.f32 %v2198, %v2204
        %v2206 = vsel %vm1863, %v2195, -inf
        %v2207 = vmax.f32 %v2199, %v2206
        %v2208 = vmax.f32 %v2201, %v2203
        %v2209 = vmax.f32 %v2205, %v2207
        %v2210 = vmax.f32 %v2208, %v2209
        %v2211 = vsub.f32 %v2188, %v2210
        %v2212 = vsub.f32 %v2189, %v2210
        %v2213 = vsub.f32 %v2190, %v2210
        %v2214 = vsub.f32 %v2191, %v2210
        %v2215 = vsub.f32 %v2192, %v2210
        %v2216 = vsub.f32 %v2193, %v2210
        %v2217 = vsub.f32 %v2194, %v2210
        %v2218 = vsub.f32 %v2195, %v2210
        %v2219 = vmul.f32 %v2211, 1.442695
        %v2220 = vpow.pop %v2219
        %v2221 = vmul.f32 %v2212, 1.442695
        %v2222 = vpow.pop %v2221
        %v2223 = vmul.f32 %v2213, 1.442695
        %v2224 = vpow.pop %v2223
        %v2225 = vmul.f32 %v2214, 1.442695
        %v2226 = vpow.pop %v2225
        %v2227 = vmul.f32 %v2215, 1.442695
        %v2228 = vpow.pop %v2227
        %v2229 = vmul.f32 %v2216, 1.442695
        %v2230 = vpow.pop %v2229
        %v2231 = vmul.f32 %v2217, 1.442695
        %v2232 = vpow.pop %v2231
        %v2233 = vmul.f32 %v2218, 1.442695
        %v2234 = vpow.pop %v2233
        %v2235 = vsel %vm1863, %v2220, 0.0
        %v2236 = vsel %vm1863, %v2222, 0.0
        %v2237 = vadd.f32 %v2235, %v2236
        %v2238 = vsel %vm1863, %v2224, 0.0
        %v2239 = vadd.f32 %v2237, %v2238
        %v2240 = vsel %vm1863, %v2226, 0.0
        %v2241 = vadd.f32 %v2239, %v2240
        %v2242 = vsel %vm1863, %v2228, 0.0
        %v2243 = vadd.f32 %v2241, %v2242
        %v2244 = vsel %vm1863, %v2230, 0.0
        %v2245 = vadd.f32 %v2243, %v2244
        %v2246 = vsel %vm1863, %v2232, 0.0
        %v2247 = vadd.f32 %v2245, %v2246
        %v2248 = vsel %vm1863, %v2234, 0.0
        %v2249 = vadd.f32 %v2247, %v2248
        %v2250 = vrcp.pop %v2249
        %v2251 = vmul.f32 %v2220, %v2250
        %v2252 = vmul.f32 %v2222, %v2250
        %v2253 = vmul.f32 %v2224, %v2250
        %v2254 = vmul.f32 %v2226, %v2250
        %v2255 = vmul.f32 %v2228, %v2250
        %v2256 = vmul.f32 %v2230, %v2250
        %v2257 = vmul.f32 %v2232, %v2250
        %v2258 = vmul.f32 %v2234, %v2250
        %v2259 = vmul.f32 %v2251, %v1559
        %v2260 = vmul.f32 %v2252, %v1591
        %v2261 = vmul.f32 %v2253, %v1623
        %v2262 = vmul.f32 %v2254, %v1655
        %v2263 = vmul.f32 %v2255, %v1687
        %v2264 = vmul.f32 %v2256, %v1719
        %v2265 = vmul.f32 %v2257, %v1751
        %v2266 = vmul.f32 %v2258, %v1783
        %v2267 = vsel %vm1863, %v2259, 0.0
        %v2268 = vsel %vm1863, %v2260, 0.0
        %v2269 = vadd.f32 %v2267, %v2268
        %v2270 = vsel %vm1863, %v2261, 0.0
        %v2271 = vadd.f32 %v2269, %v2270
        %v2272 = vsel %vm1863, %v2262, 0.0
        %v2273 = vadd.f32 %v2271, %v2272
        %v2274 = vsel %vm1863, %v2263, 0.0
        %v2275 = vadd.f32 %v2273, %v2274
        %v2276 = vsel %vm1863, %v2264, 0.0
        %v2277 = vadd.f32 %v2275, %v2276
        %v2278 = vsel %vm1863, %v2265, 0.0
        %v2279 = vadd.f32 %v2277, %v2278
        %v2280 = vsel %vm1863, %v2266, 0.0
        %v2281 = vadd.f32 %v2279, %v2280
        %v2282 = vmul.f32 %v2251, %v1560
        %v2283 = vmul.f32 %v2252, %v1592
        %v2284 = vmul.f32 %v2253, %v1624
        %v2285 = vmul.f32 %v2254, %v1656
        %v2286 = vmul.f32 %v2255, %v1688
        %v2287 = vmul.f32 %v2256, %v1720
        %v2288 = vmul.f32 %v2257, %v1752
        %v2289 = vmul.f32 %v2258, %v1784
        %v2290 = vsel %vm1863, %v2282, 0.0
        %v2291 = vsel %vm1863, %v2283, 0.0
        %v2292 = vadd.f32 %v2290, %v2291
        %v2293 = vsel %vm1863, %v2284, 0.0
        %v2294 = vadd.f32 %v2292, %v2293
        %v2295 = vsel %vm1863, %v2285, 0.0
        %v2296 = vadd.f32 %v2294, %v2295
        %v2297 = vsel %vm1863, %v2286, 0.0
        %v2298 = vadd.f32 %v2296, %v2297
        %v2299 = vsel %vm1863, %v2287, 0.0
        %v2300 = vadd.f32 %v2298, %v2299
        %v2301 = vsel %vm1863, %v2288, 0.0
        %v2302 = vadd.f32 %v2300, %v2301
        %v2303 = vsel %vm1863, %v2289, 0.0
        %v2304 = vadd.f32 %v2302, %v2303
        %v2305 = vmul.f32 %v2251, %v1561
        %v2306 = vmul.f32 %v2252, %v1593
        %v2307 = vmul.f32 %v2253, %v1625
        %v2308 = vmul.f32 %v2254, %v1657
        %v2309 = vmul.f32 %v2255, %v1689
        %v2310 = vmul.f32 %v2256, %v1721
        %v2311 = vmul.f32 %v2257, %v1753
        %v2312 = vmul.f32 %v2258, %v1785
        %v2313 = vsel %vm1863, %v2305, 0.0
        %v2314 = vsel %vm1863, %v2306, 0.0
        %v2315 = vadd.f32 %v2313, %v2314
        %v2316 = vsel %vm1863, %v2307, 0.0
        %v2317 = vadd.f32 %v2315, %v2316
        %v2318 = vsel %vm1863, %v2308, 0.0
        %v2319 = vadd.f32 %v2317, %v2318
        %v2320 = vsel %vm1863, %v2309, 0.0
        %v2321 = vadd.f32 %v2319, %v2320
        %v2322 = vsel %vm1863, %v2310, 0.0
        %v2323 = vadd.f32 %v2321, %v2322
        %v2324 = vsel %vm1863, %v2311, 0.0
        %v2325 = vadd.f32 %v2323, %v2324
        %v2326 = vsel %vm1863, %v2312, 0.0
        %v2327 = vadd.f32 %v2325, %v2326
        %v2328 = vmul.f32 %v2251, %v1562
        %v2329 = vmul.f32 %v2252, %v1594
        %v2330 = vmul.f32 %v2253, %v1626
        %v2331 = vmul.f32 %v2254, %v1658
        %v2332 = vmul.f32 %v2255, %v1690
        %v2333 = vmul.f32 %v2256, %v1722
        %v2334 = vmul.f32 %v2257, %v1754
        %v2335 = vmul.f32 %v2258, %v1786
        %v2336 = vsel %vm1863, %v2328, 0.0
        %v2337 = vsel %vm1863, %v2329, 0.0
        %v2338 = vadd.f32 %v2336, %v2337
        %v2339 = vsel %vm1863, %v2330, 0.0
        %v2340 = vadd.f32 %v2338, %v2339
        %v2341 = vsel %vm1863, %v2331, 0.0
        %v2342 = vadd.f32 %v2340, %v2341
        %v2343 = vsel %vm1863, %v2332, 0.0
        %v2344 = vadd.f32 %v2342, %v2343
        %v2345 = vsel %vm1863, %v2333, 0.0
        %v2346 = vadd.f32 %v2344, %v2345
        %v2347 = vsel %vm1863, %v2334, 0.0
        %v2348 = vadd.f32 %v2346, %v2347
        %v2349 = vsel %vm1863, %v2335, 0.0
        %v2350 = vadd.f32 %v2348, %v2349
        %v2351 = vpack.c.bf16 %v2304, %v2281
        %v2352 = vpack.c.bf16 %v2350, %v2327
        %2353 = vmatprep.subr.bf16.mxu0 0
        %2354 = vmatpush1.bf16.msra.mxu0 %v2351
        %2355 = vmatprep.subr.bf16.mxu0 0
        %2356 = vmatpush1.bf16.msra.mxu0 %v2352
        %2357 = vmatprep.subr.bf16.mxu0 0
        %2358 = vmatpush1.bf16.msra.mxu0 0
        %2359 = vmatprep.subr.bf16.mxu0 0
        %2360 = vmatpush1.bf16.msra.mxu0 0
        %2361 = vmatprep.subr.bf16.mxu0 0
        %2362 = vmatpush1.bf16.msra.mxu0 0
        %2363 = vmatprep.subr.bf16.mxu0 0
        %2364 = vmatpush1.bf16.msra.mxu0 0
        %2365 = vmatprep.subr.bf16.mxu0 0
        %2366 = vmatpush1.bf16.msra.mxu0 0
        %2367 = vmatprep.subr.bf16.mxu0 0
        %2368 = vmatpush1.bf16.msra.mxu0 0
        %2369 = vmatprep.subr.bf16.mxu0 0
        %2370 = vmatpush1.bf16.msra.mxu0 0
        %2371 = vmatprep.subr.bf16.mxu0 0
        %2372 = vmatpush1.bf16.msra.mxu0 0
        %2373 = vmatprep.subr.bf16.mxu0 0
        %2374 = vmatpush1.bf16.msra.mxu0 0
        %2375 = vmatprep.subr.bf16.mxu0 0
        %2376 = vmatpush1.bf16.msra.mxu0 0
        %2377 = vmatprep.subr.bf16.mxu0 0
        %2378 = vmatpush1.bf16.msra.mxu0 0
        %2379 = vmatprep.subr.bf16.mxu0 0
        %2380 = vmatpush1.bf16.msra.mxu0 0
        %2381 = vmatprep.subr.bf16.mxu0 0
        %2382 = vmatpush1.bf16.msra.mxu0 0
        %2383 = vmatprep.subr.bf16.mxu0 0
        %2384 = vmatpush1.bf16.msra.mxu0 0
        %2385 = vmatprep.mubr.bf16.mxu0 0
        %2386 = vmatmul.mubr.bf16.gmra.mrb[0].mxu0 %v2052
        %v2387 = vpop.f32.mrb[0].mxu0
        %v2388 = vadd.f32 %v2024, %v2387
        %v2389 = vpop.f32.mrb[0].mxu0
        %v2390 = vpop.f32.mrb[0].mxu0
        %v2391 = vadd.f32 %v2029, %v2390
        %v2392 = vpop.f32.mrb[0].mxu0
        %2393 = vmatprep.mubr.bf16.mxu0 0
        %2394 = vmatmul.mubr.bf16.gmra.mrb[0].mxu0 %v2055
        %v2395 = vpop.f32.mrb[0].mxu0
        %v2396 = vadd.f32 %v2034, %v2395
        %v2397 = vpop.f32.mrb[0].mxu0
        %v2398 = vpop.f32.mrb[0].mxu0
        %v2399 = vadd.f32 %v2039, %v2398
        %v2400 = vpop.f32.mrb[0].mxu0
        %2401 = vdwg.mxu0
        %2402 = vxpose.xlu0.b32.start [1/16] %v2388, 128
        %2403 = vxpose.xlu0.b32.cont [2/16] %v2391, 128
        %2404 = vxpose.xlu0.b32.cont [3/16] %v2396, 128
        %2405 = vxpose.xlu0.b32.cont [4/16] %v2399, 128
        %2406 = vxpose.xlu0.b32.cont [5/16] 0.0, 128
        %2407 = vxpose.xlu0.b32.cont [6/16] 0.0, 128
        %2408 = vxpose.xlu0.b32.cont [7/16] 0.0, 128
        %2409 = vxpose.xlu0.b32.cont [8/16] 0.0, 128
        %2410 = vxpose.xlu0.b32.cont [9/16] 0.0, 128
        %2411 = vxpose.xlu0.b32.cont [10/16] 0.0, 128
        %2412 = vxpose.xlu0.b32.cont [11/16] 0.0, 128
        %2413 = vxpose.xlu0.b32.cont [12/16] 0.0, 128
        %2414 = vxpose.xlu0.b32.cont [13/16] 0.0, 128
        %2415 = vxpose.xlu0.b32.cont [14/16] 0.0, 128
        %2416 = vxpose.xlu0.b32.cont [15/16] 0.0, 128
        %2417 = vxpose.xlu0.b32.end [16/16] 0.0, 128
        %v2418 = vpop.trf.xlu0
        %v2419 = vpop.trf.xlu0
        %v2420 = vpop.trf.xlu0
        %v2421 = vpop.trf.xlu0
        %v2422 = vpop.trf.xlu0
        %v2423 = vpop.trf.xlu0
        %v2424 = vpop.trf.xlu0
        %v2425 = vpop.trf.xlu0
        %v2426 = vpop.trf.xlu0
        %v2427 = vpop.trf.xlu0
        %v2428 = vpop.trf.xlu0
        %v2429 = vpop.trf.xlu0
        %v2430 = vpop.trf.xlu0
        %v2431 = vpop.trf.xlu0
        %v2432 = vpop.trf.xlu0
        %v2433 = vpop.trf.xlu0
        %s2434 = scalar_lea.vmem %s520, 16 [#allocation10]
        %2435 = vst.msk [vmem:[%s2434] sm:$0xff] %vm605, %v2418
        %2436 = vst.msk [vmem:[%s2434 + $0x8] sm:$0xff] %vm605, %v2419
        %v2437 = vmul.f32 %v1111, %v1303
        %v2438 = vmul.f32 %v1111, %v1335
        %v2439 = vmul.f32 %v1111, %v1367
        %v2440 = vmul.f32 %v1111, %v1399
        %v2441 = vmul.f32 %v1111, %v1431
        %v2442 = vmul.f32 %v1111, %v1463
        %v2443 = vmul.f32 %v1111, %v1495
        %v2444 = vmul.f32 %v1111, %v1527
        %v2445 = vmul.f32 %v1112, %v1304
        %v2446 = vmul.f32 %v1112, %v1336
        %v2447 = vmul.f32 %v1112, %v1368
        %v2448 = vmul.f32 %v1112, %v1400
        %v2449 = vmul.f32 %v1112, %v1432
        %v2450 = vmul.f32 %v1112, %v1464
        %v2451 = vmul.f32 %v1112, %v1496
        %v2452 = vmul.f32 %v1112, %v1528
        %v2453 = vadd.f32 %v2437, %v2445
        %v2454 = vadd.f32 %v2438, %v2446
        %v2455 = vadd.f32 %v2439, %v2447
        %v2456 = vadd.f32 %v2440, %v2448
        %v2457 = vadd.f32 %v2441, %v2449
        %v2458 = vadd.f32 %v2442, %v2450
        %v2459 = vadd.f32 %v2443, %v2451
        %v2460 = vadd.f32 %v2444, %v2452
        %v2461 = vmul.f32 %v1113, %v1305
        %v2462 = vmul.f32 %v1113, %v1337
        %v2463 = vmul.f32 %v1113, %v1369
        %v2464 = vmul.f32 %v1113, %v1401
        %v2465 = vmul.f32 %v1113, %v1433
        %v2466 = vmul.f32 %v1113, %v1465
        %v2467 = vmul.f32 %v1113, %v1497
        %v2468 = vmul.f32 %v1113, %v1529
        %v2469 = vadd.f32 %v2453, %v2461
        %v2470 = vadd.f32 %v2454, %v2462
        %v2471 = vadd.f32 %v2455, %v2463
        %v2472 = vadd.f32 %v2456, %v2464
        %v2473 = vadd.f32 %v2457, %v2465
        %v2474 = vadd.f32 %v2458, %v2466
        %v2475 = vadd.f32 %v2459, %v2467
        %v2476 = vadd.f32 %v2460, %v2468
        %v2477 = vmul.f32 %v1114, %v1306
        %v2478 = vmul.f32 %v1114, %v1338
        %v2479 = vmul.f32 %v1114, %v1370
        %v2480 = vmul.f32 %v1114, %v1402
        %v2481 = vmul.f32 %v1114, %v1434
        %v2482 = vmul.f32 %v1114, %v1466
        %v2483 = vmul.f32 %v1114, %v1498
        %v2484 = vmul.f32 %v1114, %v1530
        %v2485 = vadd.f32 %v2469, %v2477
        %v2486 = vadd.f32 %v2470, %v2478
        %v2487 = vadd.f32 %v2471, %v2479
        %v2488 = vadd.f32 %v2472, %v2480
        %v2489 = vadd.f32 %v2473, %v2481
        %v2490 = vadd.f32 %v2474, %v2482
        %v2491 = vadd.f32 %v2475, %v2483
        %v2492 = vadd.f32 %v2476, %v2484
        %v2493 = vsel %vm1863, %v2485, -inf
        %v2494 = vsel %vm1863, %v2486, -inf
        %v2495 = vsel %vm1863, %v2487, -inf
        %v2496 = vsel %vm1863, %v2488, -inf
        %v2497 = vsel %vm1863, %v2489, -inf
        %v2498 = vmax.f32 %v2493, %v2497
        %v2499 = vsel %vm1863, %v2490, -inf
        %v2500 = vmax.f32 %v2494, %v2499
        %v2501 = vsel %vm1863, %v2491, -inf
        %v2502 = vmax.f32 %v2495, %v2501
        %v2503 = vsel %vm1863, %v2492, -inf
        %v2504 = vmax.f32 %v2496, %v2503
        %v2505 = vmax.f32 %v2498, %v2500
        %v2506 = vmax.f32 %v2502, %v2504
        %v2507 = vmax.f32 %v2505, %v2506
        %v2508 = vsub.f32 %v2485, %v2507
        %v2509 = vsub.f32 %v2486, %v2507
        %v2510 = vsub.f32 %v2487, %v2507
        %v2511 = vsub.f32 %v2488, %v2507
        %v2512 = vsub.f32 %v2489, %v2507
        %v2513 = vsub.f32 %v2490, %v2507
        %v2514 = vsub.f32 %v2491, %v2507
        %v2515 = vsub.f32 %v2492, %v2507
        %v2516 = vmul.f32 %v2508, 1.442695
        %v2517 = vpow.pop %v2516
        %v2518 = vmul.f32 %v2509, 1.442695
        %v2519 = vpow.pop %v2518
        %v2520 = vmul.f32 %v2510, 1.442695
        %v2521 = vpow.pop %v2520
        %v2522 = vmul.f32 %v2511, 1.442695
        %v2523 = vpow.pop %v2522
        %v2524 = vmul.f32 %v2512, 1.442695
        %v2525 = vpow.pop %v2524
        %v2526 = vmul.f32 %v2513, 1.442695
        %v2527 = vpow.pop %v2526
        %v2528 = vmul.f32 %v2514, 1.442695
        %v2529 = vpow.pop %v2528
        %v2530 = vmul.f32 %v2515, 1.442695
        %v2531 = vpow.pop %v2530
        %v2532 = vsel %vm1863, %v2517, 0.0
        %v2533 = vsel %vm1863, %v2519, 0.0
        %v2534 = vadd.f32 %v2532, %v2533
        %v2535 = vsel %vm1863, %v2521, 0.0
        %v2536 = vadd.f32 %v2534, %v2535
        %v2537 = vsel %vm1863, %v2523, 0.0
        %v2538 = vadd.f32 %v2536, %v2537
        %v2539 = vsel %vm1863, %v2525, 0.0
        %v2540 = vadd.f32 %v2538, %v2539
        %v2541 = vsel %vm1863, %v2527, 0.0
        %v2542 = vadd.f32 %v2540, %v2541
        %v2543 = vsel %vm1863, %v2529, 0.0
        %v2544 = vadd.f32 %v2542, %v2543
        %v2545 = vsel %vm1863, %v2531, 0.0
        %v2546 = vadd.f32 %v2544, %v2545
        %v2547 = vrcp.pop %v2546
        %v2548 = vmul.f32 %v2517, %v2547
        %v2549 = vmul.f32 %v2519, %v2547
        %v2550 = vmul.f32 %v2521, %v2547
        %v2551 = vmul.f32 %v2523, %v2547
        %v2552 = vmul.f32 %v2525, %v2547
        %v2553 = vmul.f32 %v2527, %v2547
        %v2554 = vmul.f32 %v2529, %v2547
        %v2555 = vmul.f32 %v2531, %v2547
        %v2556 = vmul.f32 %v2548, %v1559
        %v2557 = vmul.f32 %v2549, %v1591
        %v2558 = vmul.f32 %v2550, %v1623
        %v2559 = vmul.f32 %v2551, %v1655
        %v2560 = vmul.f32 %v2552, %v1687
        %v2561 = vmul.f32 %v2553, %v1719
        %v2562 = vmul.f32 %v2554, %v1751
        %v2563 = vmul.f32 %v2555, %v1783
        %v2564 = vsel %vm1863, %v2556, 0.0
        %v2565 = vsel %vm1863, %v2557, 0.0
        %v2566 = vadd.f32 %v2564, %v2565
        %v2567 = vsel %vm1863, %v2558, 0.0
        %v2568 = vadd.f32 %v2566, %v2567
        %v2569 = vsel %vm1863, %v2559, 0.0
        %v2570 = vadd.f32 %v2568, %v2569
        %v2571 = vsel %vm1863, %v2560, 0.0
        %v2572 = vadd.f32 %v2570, %v2571
        %v2573 = vsel %vm1863, %v2561, 0.0
        %v2574 = vadd.f32 %v2572, %v2573
        %v2575 = vsel %vm1863, %v2562, 0.0
        %v2576 = vadd.f32 %v2574, %v2575
        %v2577 = vsel %vm1863, %v2563, 0.0
        %v2578 = vadd.f32 %v2576, %v2577
        %v2579 = vmul.f32 %v2548, %v1560
        %v2580 = vmul.f32 %v2549, %v1592
        %v2581 = vmul.f32 %v2550, %v1624
        %v2582 = vmul.f32 %v2551, %v1656
        %v2583 = vmul.f32 %v2552, %v1688
        %v2584 = vmul.f32 %v2553, %v1720
        %v2585 = vmul.f32 %v2554, %v1752
        %v2586 = vmul.f32 %v2555, %v1784
        %v2587 = vsel %vm1863, %v2579, 0.0
        %v2588 = vsel %vm1863, %v2580, 0.0
        %v2589 = vadd.f32 %v2587, %v2588
        %v2590 = vsel %vm1863, %v2581, 0.0
        %v2591 = vadd.f32 %v2589, %v2590
        %v2592 = vsel %vm1863, %v2582, 0.0
        %v2593 = vadd.f32 %v2591, %v2592
        %v2594 = vsel %vm1863, %v2583, 0.0
        %v2595 = vadd.f32 %v2593, %v2594
        %v2596 = vsel %vm1863, %v2584, 0.0
        %v2597 = vadd.f32 %v2595, %v2596
        %v2598 = vsel %vm1863, %v2585, 0.0
        %v2599 = vadd.f32 %v2597, %v2598
        %v2600 = vsel %vm1863, %v2586, 0.0
        %v2601 = vadd.f32 %v2599, %v2600
        %v2602 = vmul.f32 %v2548, %v1561
        %v2603 = vmul.f32 %v2549, %v1593
        %v2604 = vmul.f32 %v2550, %v1625
        %v2605 = vmul.f32 %v2551, %v1657
        %v2606 = vmul.f32 %v2552, %v1689
        %v2607 = vmul.f32 %v2553, %v1721
        %v2608 = vmul.f32 %v2554, %v1753
        %v2609 = vmul.f32 %v2555, %v1785
        %v2610 = vsel %vm1863, %v2602, 0.0
        %v2611 = vsel %vm1863, %v2603, 0.0
        %v2612 = vadd.f32 %v2610, %v2611
        %v2613 = vsel %vm1863, %v2604, 0.0
        %v2614 = vadd.f32 %v2612, %v2613
        %v2615 = vsel %vm1863, %v2605, 0.0
        %v2616 = vadd.f32 %v2614, %v2615
        %v2617 = vsel %vm1863, %v2606, 0.0
        %v2618 = vadd.f32 %v2616, %v2617
        %v2619 = vsel %vm1863, %v2607, 0.0
        %v2620 = vadd.f32 %v2618, %v2619
        %v2621 = vsel %vm1863, %v2608, 0.0
        %v2622 = vadd.f32 %v2620, %v2621
        %v2623 = vsel %vm1863, %v2609, 0.0
        %v2624 = vadd.f32 %v2622, %v2623
        %v2625 = vmul.f32 %v2548, %v1562
        %v2626 = vmul.f32 %v2549, %v1594
        %v2627 = vmul.f32 %v2550, %v1626
        %v2628 = vmul.f32 %v2551, %v1658
        %v2629 = vmul.f32 %v2552, %v1690
        %v2630 = vmul.f32 %v2553, %v1722
        %v2631 = vmul.f32 %v2554, %v1754
        %v2632 = vmul.f32 %v2555, %v1786
        %v2633 = vsel %vm1863, %v2625, 0.0
        %v2634 = vsel %vm1863, %v2626, 0.0
        %v2635 = vadd.f32 %v2633, %v2634
        %v2636 = vsel %vm1863, %v2627, 0.0
        %v2637 = vadd.f32 %v2635, %v2636
        %v2638 = vsel %vm1863, %v2628, 0.0
        %v2639 = vadd.f32 %v2637, %v2638
        %v2640 = vsel %vm1863, %v2629, 0.0
        %v2641 = vadd.f32 %v2639, %v2640
        %v2642 = vsel %vm1863, %v2630, 0.0
        %v2643 = vadd.f32 %v2641, %v2642
        %v2644 = vsel %vm1863, %v2631, 0.0
        %v2645 = vadd.f32 %v2643, %v2644
        %v2646 = vsel %vm1863, %v2632, 0.0
        %v2647 = vadd.f32 %v2645, %v2646
        %v2648 = vpack.c.bf16 %v2601, %v2578
        %v2649 = vpack.c.bf16 %v2647, %v2624
        %2650 = vmatprep.subr.bf16.mxu0 0
        %2651 = vmatpush1.bf16.msra.mxu0 %v2648
        %2652 = vmatprep.subr.bf16.mxu0 0
        %2653 = vmatpush1.bf16.msra.mxu0 %v2649
        %2654 = vmatprep.subr.bf16.mxu0 0
        %2655 = vmatpush1.bf16.msra.mxu0 0
        %2656 = vmatprep.subr.bf16.mxu0 0
        %2657 = vmatpush1.bf16.msra.mxu0 0
        %2658 = vmatprep.subr.bf16.mxu0 0
        %2659 = vmatpush1.bf16.msra.mxu0 0
        %2660 = vmatprep.subr.bf16.mxu0 0
        %2661 = vmatpush1.bf16.msra.mxu0 0
        %2662 = vmatprep.subr.bf16.mxu0 0
        %2663 = vmatpush1.bf16.msra.mxu0 0
        %2664 = vmatprep.subr.bf16.mxu0 0
        %2665 = vmatpush1.bf16.msra.mxu0 0
        %2666 = vmatprep.subr.bf16.mxu0 0
        %2667 = vmatpush1.bf16.msra.mxu0 0
        %2668 = vmatprep.subr.bf16.mxu0 0
        %2669 = vmatpush1.bf16.msra.mxu0 0
        %2670 = vmatprep.subr.bf16.mxu0 0
        %2671 = vmatpush1.bf16.msra.mxu0 0
        %2672 = vmatprep.subr.bf16.mxu0 0
        %2673 = vmatpush1.bf16.msra.mxu0 0
        %2674 = vmatprep.subr.bf16.mxu0 0
        %2675 = vmatpush1.bf16.msra.mxu0 0
        %2676 = vmatprep.subr.bf16.mxu0 0
        %2677 = vmatpush1.bf16.msra.mxu0 0
        %2678 = vmatprep.subr.bf16.mxu0 0
        %2679 = vmatpush1.bf16.msra.mxu0 0
        %2680 = vmatprep.subr.bf16.mxu0 0
        %2681 = vmatpush1.bf16.msra.mxu0 0
        %2682 = vmatprep.mubr.bf16.mxu0 0
        %2683 = vmatmul.mubr.bf16.gmra.mrb[0].mxu0 %v2052
        %v2684 = vpop.f32.mrb[0].mxu0
        %v2685 = vadd.f32 %v2024, %v2684
        %v2686 = vpop.f32.mrb[0].mxu0
        %v2687 = vpop.f32.mrb[0].mxu0
        %v2688 = vadd.f32 %v2029, %v2687
        %v2689 = vpop.f32.mrb[0].mxu0
        %2690 = vmatprep.mubr.bf16.mxu0 0
        %2691 = vmatmul.mubr.bf16.gmra.mrb[0].mxu0 %v2055
        %v2692 = vpop.f32.mrb[0].mxu0
        %v2693 = vadd.f32 %v2034, %v2692
        %v2694 = vpop.f32.mrb[0].mxu0
        %v2695 = vpop.f32.mrb[0].mxu0
        %v2696 = vadd.f32 %v2039, %v2695
        %v2697 = vpop.f32.mrb[0].mxu0
        %2698 = vdwg.mxu0
        %2699 = vxpose.xlu0.b32.start [1/16] %v2685, 128
        %2700 = vxpose.xlu0.b32.cont [2/16] %v2688, 128
        %2701 = vxpose.xlu0.b32.cont [3/16] %v2693, 128
        %2702 = vxpose.xlu0.b32.cont [4/16] %v2696, 128
        %2703 = vxpose.xlu0.b32.cont [5/16] 0.0, 128
        %2704 = vxpose.xlu0.b32.cont [6/16] 0.0, 128
        %2705 = vxpose.xlu0.b32.cont [7/16] 0.0, 128
        %2706 = vxpose.xlu0.b32.cont [8/16] 0.0, 128
        %2707 = vxpose.xlu0.b32.cont [9/16] 0.0, 128
        %2708 = vxpose.xlu0.b32.cont [10/16] 0.0, 128
        %2709 = vxpose.xlu0.b32.cont [11/16] 0.0, 128
        %2710 = vxpose.xlu0.b32.cont [12/16] 0.0, 128
        %2711 = vxpose.xlu0.b32.cont [13/16] 0.0, 128
        %2712 = vxpose.xlu0.b32.cont [14/16] 0.0, 128
        %2713 = vxpose.xlu0.b32.cont [15/16] 0.0, 128
        %2714 = vxpose.xlu0.b32.end [16/16] 0.0, 128
        %v2715 = vpop.trf.xlu0
        %v2716 = vpop.trf.xlu0
        %v2717 = vpop.trf.xlu0
        %v2718 = vpop.trf.xlu0
        %v2719 = vpop.trf.xlu0
        %v2720 = vpop.trf.xlu0
        %v2721 = vpop.trf.xlu0
        %v2722 = vpop.trf.xlu0
        %v2723 = vpop.trf.xlu0
        %v2724 = vpop.trf.xlu0
        %v2725 = vpop.trf.xlu0
        %v2726 = vpop.trf.xlu0
        %v2727 = vpop.trf.xlu0
        %v2728 = vpop.trf.xlu0
        %v2729 = vpop.trf.xlu0
        %v2730 = vpop.trf.xlu0
        %s2731 = scalar_lea.vmem %s520, 32 [#allocation10]
        %2732 = vst.msk [vmem:[%s2731] sm:$0xff] %vm605, %v2715
        %2733 = vst.msk [vmem:[%s2731 + $0x8] sm:$0xff] %vm605, %v2716
        %v2734 = vmul.f32 %v1143, %v1303
        %v2735 = vmul.f32 %v1143, %v1335
        %v2736 = vmul.f32 %v1143, %v1367
        %v2737 = vmul.f32 %v1143, %v1399
        %v2738 = vmul.f32 %v1143, %v1431
        %v2739 = vmul.f32 %v1143, %v1463
        %v2740 = vmul.f32 %v1143, %v1495
        %v2741 = vmul.f32 %v1143, %v1527
        %v2742 = vmul.f32 %v1144, %v1304
        %v2743 = vmul.f32 %v1144, %v1336
        %v2744 = vmul.f32 %v1144, %v1368
        %v2745 = vmul.f32 %v1144, %v1400
        %v2746 = vmul.f32 %v1144, %v1432
        %v2747 = vmul.f32 %v1144, %v1464
        %v2748 = vmul.f32 %v1144, %v1496
        %v2749 = vmul.f32 %v1144, %v1528
        %v2750 = vadd.f32 %v2734, %v2742
        %v2751 = vadd.f32 %v2735, %v2743
        %v2752 = vadd.f32 %v2736, %v2744
        %v2753 = vadd.f32 %v2737, %v2745
        %v2754 = vadd.f32 %v2738, %v2746
        %v2755 = vadd.f32 %v2739, %v2747
        %v2756 = vadd.f32 %v2740, %v2748
        %v2757 = vadd.f32 %v2741, %v2749
        %v2758 = vmul.f32 %v1145, %v1305
        %v2759 = vmul.f32 %v1145, %v1337
        %v2760 = vmul.f32 %v1145, %v1369
        %v2761 = vmul.f32 %v1145, %v1401
        %v2762 = vmul.f32 %v1145, %v1433
        %v2763 = vmul.f32 %v1145, %v1465
        %v2764 = vmul.f32 %v1145, %v1497
        %v2765 = vmul.f32 %v1145, %v1529
        %v2766 = vadd.f32 %v2750, %v2758
        %v2767 = vadd.f32 %v2751, %v2759
        %v2768 = vadd.f32 %v2752, %v2760
        %v2769 = vadd.f32 %v2753, %v2761
        %v2770 = vadd.f32 %v2754, %v2762
        %v2771 = vadd.f32 %v2755, %v2763
        %v2772 = vadd.f32 %v2756, %v2764
        %v2773 = vadd.f32 %v2757, %v2765
        %v2774 = vmul.f32 %v1146, %v1306
        %v2775 = vmul.f32 %v1146, %v1338
        %v2776 = vmul.f32 %v1146, %v1370
        %v2777 = vmul.f32 %v1146, %v1402
        %v2778 = vmul.f32 %v1146, %v1434
        %v2779 = vmul.f32 %v1146, %v1466
        %v2780 = vmul.f32 %v1146, %v1498
        %v2781 = vmul.f32 %v1146, %v1530
        %v2782 = vadd.f32 %v2766, %v2774
        %v2783 = vadd.f32 %v2767, %v2775
        %v2784 = vadd.f32 %v2768, %v2776
        %v2785 = vadd.f32 %v2769, %v2777
        %v2786 = vadd.f32 %v2770, %v2778
        %v2787 = vadd.f32 %v2771, %v2779
        %v2788 = vadd.f32 %v2772, %v2780
        %v2789 = vadd.f32 %v2773, %v2781
        %v2790 = vsel %vm1863, %v2782, -inf
        %v2791 = vsel %vm1863, %v2783, -inf
        %v2792 = vsel %vm1863, %v2784, -inf
        %v2793 = vsel %vm1863, %v2785, -inf
        %v2794 = vsel %vm1863, %v2786, -inf
        %v2795 = vmax.f32 %v2790, %v2794
        %v2796 = vsel %vm1863, %v2787, -inf
        %v2797 = vmax.f32 %v2791, %v2796
        %v2798 = vsel %vm1863, %v2788, -inf
        %v2799 = vmax.f32 %v2792, %v2798
        %v2800 = vsel %vm1863, %v2789, -inf
        %v2801 = vmax.f32 %v2793, %v2800
        %v2802 = vmax.f32 %v2795, %v2797
        %v2803 = vmax.f32 %v2799, %v2801
        %v2804 = vmax.f32 %v2802, %v2803
        %v2805 = vsub.f32 %v2782, %v2804
        %v2806 = vsub.f32 %v2783, %v2804
        %v2807 = vsub.f32 %v2784, %v2804
        %v2808 = vsub.f32 %v2785, %v2804
        %v2809 = vsub.f32 %v2786, %v2804
        %v2810 = vsub.f32 %v2787, %v2804
        %v2811 = vsub.f32 %v2788, %v2804
        %v2812 = vsub.f32 %v2789, %v2804
        %v2813 = vmul.f32 %v2805, 1.442695
        %v2814 = vpow.pop %v2813
        %v2815 = vmul.f32 %v2806, 1.442695
        %v2816 = vpow.pop %v2815
        %v2817 = vmul.f32 %v2807, 1.442695
        %v2818 = vpow.pop %v2817
        %v2819 = vmul.f32 %v2808, 1.442695
        %v2820 = vpow.pop %v2819
        %v2821 = vmul.f32 %v2809, 1.442695
        %v2822 = vpow.pop %v2821
        %v2823 = vmul.f32 %v2810, 1.442695
        %v2824 = vpow.pop %v2823
        %v2825 = vmul.f32 %v2811, 1.442695
        %v2826 = vpow.pop %v2825
        %v2827 = vmul.f32 %v2812, 1.442695
        %v2828 = vpow.pop %v2827
        %v2829 = vsel %vm1863, %v2814, 0.0
        %v2830 = vsel %vm1863, %v2816, 0.0
        %v2831 = vadd.f32 %v2829, %v2830
        %v2832 = vsel %vm1863, %v2818, 0.0
        %v2833 = vadd.f32 %v2831, %v2832
        %v2834 = vsel %vm1863, %v2820, 0.0
        %v2835 = vadd.f32 %v2833, %v2834
        %v2836 = vsel %vm1863, %v2822, 0.0
        %v2837 = vadd.f32 %v2835, %v2836
        %v2838 = vsel %vm1863, %v2824, 0.0
        %v2839 = vadd.f32 %v2837, %v2838
        %v2840 = vsel %vm1863, %v2826, 0.0
        %v2841 = vadd.f32 %v2839, %v2840
        %v2842 = vsel %vm1863, %v2828, 0.0
        %v2843 = vadd.f32 %v2841, %v2842
        %v2844 = vrcp.pop %v2843
        %v2845 = vmul.f32 %v2814, %v2844
        %v2846 = vmul.f32 %v2816, %v2844
        %v2847 = vmul.f32 %v2818, %v2844
        %v2848 = vmul.f32 %v2820, %v2844
        %v2849 = vmul.f32 %v2822, %v2844
        %v2850 = vmul.f32 %v2824, %v2844
        %v2851 = vmul.f32 %v2826, %v2844
        %v2852 = vmul.f32 %v2828, %v2844
        %v2853 = vmul.f32 %v2845, %v1559
        %v2854 = vmul.f32 %v2846, %v1591
        %v2855 = vmul.f32 %v2847, %v1623
        %v2856 = vmul.f32 %v2848, %v1655
        %v2857 = vmul.f32 %v2849, %v1687
        %v2858 = vmul.f32 %v2850, %v1719
        %v2859 = vmul.f32 %v2851, %v1751
        %v2860 = vmul.f32 %v2852, %v1783
        %v2861 = vsel %vm1863, %v2853, 0.0
        %v2862 = vsel %vm1863, %v2854, 0.0
        %v2863 = vadd.f32 %v2861, %v2862
        %v2864 = vsel %vm1863, %v2855, 0.0
        %v2865 = vadd.f32 %v2863, %v2864
        %v2866 = vsel %vm1863, %v2856, 0.0
        %v2867 = vadd.f32 %v2865, %v2866
        %v2868 = vsel %vm1863, %v2857, 0.0
        %v2869 = vadd.f32 %v2867, %v2868
        %v2870 = vsel %vm1863, %v2858, 0.0
        %v2871 = vadd.f32 %v2869, %v2870
        %v2872 = vsel %vm1863, %v2859, 0.0
        %v2873 = vadd.f32 %v2871, %v2872
        %v2874 = vsel %vm1863, %v2860, 0.0
        %v2875 = vadd.f32 %v2873, %v2874
        %v2876 = vmul.f32 %v2845, %v1560
        %v2877 = vmul.f32 %v2846, %v1592
        %v2878 = vmul.f32 %v2847, %v1624
        %v2879 = vmul.f32 %v2848, %v1656
        %v2880 = vmul.f32 %v2849, %v1688
        %v2881 = vmul.f32 %v2850, %v1720
        %v2882 = vmul.f32 %v2851, %v1752
        %v2883 = vmul.f32 %v2852, %v1784
        %v2884 = vsel %vm1863, %v2876, 0.0
        %v2885 = vsel %vm1863, %v2877, 0.0
        %v2886 = vadd.f32 %v2884, %v2885
        %v2887 = vsel %vm1863, %v2878, 0.0
        %v2888 = vadd.f32 %v2886, %v2887
        %v2889 = vsel %vm1863, %v2879, 0.0
        %v2890 = vadd.f32 %v2888, %v2889
        %v2891 = vsel %vm1863, %v2880, 0.0
        %v2892 = vadd.f32 %v2890, %v2891
        %v2893 = vsel %vm1863, %v2881, 0.0
        %v2894 = vadd.f32 %v2892, %v2893
        %v2895 = vsel %vm1863, %v2882, 0.0
        %v2896 = vadd.f32 %v2894, %v2895
        %v2897 = vsel %vm1863, %v2883, 0.0
        %v2898 = vadd.f32 %v2896, %v2897
        %v2899 = vmul.f32 %v2845, %v1561
        %v2900 = vmul.f32 %v2846, %v1593
        %v2901 = vmul.f32 %v2847, %v1625
        %v2902 = vmul.f32 %v2848, %v1657
        %v2903 = vmul.f32 %v2849, %v1689
        %v2904 = vmul.f32 %v2850, %v1721
        %v2905 = vmul.f32 %v2851, %v1753
        %v2906 = vmul.f32 %v2852, %v1785
        %v2907 = vsel %vm1863, %v2899, 0.0
        %v2908 = vsel %vm1863, %v2900, 0.0
        %v2909 = vadd.f32 %v2907, %v2908
        %v2910 = vsel %vm1863, %v2901, 0.0
        %v2911 = vadd.f32 %v2909, %v2910
        %v2912 = vsel %vm1863, %v2902, 0.0
        %v2913 = vadd.f32 %v2911, %v2912
        %v2914 = vsel %vm1863, %v2903, 0.0
        %v2915 = vadd.f32 %v2913, %v2914
        %v2916 = vsel %vm1863, %v2904, 0.0
        %v2917 = vadd.f32 %v2915, %v2916
        %v2918 = vsel %vm1863, %v2905, 0.0
        %v2919 = vadd.f32 %v2917, %v2918
        %v2920 = vsel %vm1863, %v2906, 0.0
        %v2921 = vadd.f32 %v2919, %v2920
        %v2922 = vmul.f32 %v2845, %v1562
        %v2923 = vmul.f32 %v2846, %v1594
        %v2924 = vmul.f32 %v2847, %v1626
        %v2925 = vmul.f32 %v2848, %v1658
        %v2926 = vmul.f32 %v2849, %v1690
        %v2927 = vmul.f32 %v2850, %v1722
        %v2928 = vmul.f32 %v2851, %v1754
        %v2929 = vmul.f32 %v2852, %v1786
        %v2930 = vsel %vm1863, %v2922, 0.0
        %v2931 = vsel %vm1863, %v2923, 0.0
        %v2932 = vadd.f32 %v2930, %v2931
        %v2933 = vsel %vm1863, %v2924, 0.0
        %v2934 = vadd.f32 %v2932, %v2933
        %v2935 = vsel %vm1863, %v2925, 0.0
        %v2936 = vadd.f32 %v2934, %v2935
        %v2937 = vsel %vm1863, %v2926, 0.0
        %v2938 = vadd.f32 %v2936, %v2937
        %v2939 = vsel %vm1863, %v2927, 0.0
        %v2940 = vadd.f32 %v2938, %v2939
        %v2941 = vsel %vm1863, %v2928, 0.0
        %v2942 = vadd.f32 %v2940, %v2941
        %v2943 = vsel %vm1863, %v2929, 0.0
        %v2944 = vadd.f32 %v2942, %v2943
        %v2945 = vpack.c.bf16 %v2898, %v2875
        %v2946 = vpack.c.bf16 %v2944, %v2921
        %2947 = vmatprep.subr.bf16.mxu0 0
        %2948 = vmatpush1.bf16.msra.mxu0 %v2945
        %2949 = vmatprep.subr.bf16.mxu0 0
        %2950 = vmatpush1.bf16.msra.mxu0 %v2946
        %2951 = vmatprep.subr.bf16.mxu0 0
        %2952 = vmatpush1.bf16.msra.mxu0 0
        %2953 = vmatprep.subr.bf16.mxu0 0
        %2954 = vmatpush1.bf16.msra.mxu0 0
        %2955 = vmatprep.subr.bf16.mxu0 0
        %2956 = vmatpush1.bf16.msra.mxu0 0
        %2957 = vmatprep.subr.bf16.mxu0 0
        %2958 = vmatpush1.bf16.msra.mxu0 0
        %2959 = vmatprep.subr.bf16.mxu0 0
        %2960 = vmatpush1.bf16.msra.mxu0 0
        %2961 = vmatprep.subr.bf16.mxu0 0
        %2962 = vmatpush1.bf16.msra.mxu0 0
        %2963 = vmatprep.subr.bf16.mxu0 0
        %2964 = vmatpush1.bf16.msra.mxu0 0
        %2965 = vmatprep.subr.bf16.mxu0 0
        %2966 = vmatpush1.bf16.msra.mxu0 0
        %2967 = vmatprep.subr.bf16.mxu0 0
        %2968 = vmatpush1.bf16.msra.mxu0 0
        %2969 = vmatprep.subr.bf16.mxu0 0
        %2970 = vmatpush1.bf16.msra.mxu0 0
        %2971 = vmatprep.subr.bf16.mxu0 0
        %2972 = vmatpush1.bf16.msra.mxu0 0
        %2973 = vmatprep.subr.bf16.mxu0 0
        %2974 = vmatpush1.bf16.msra.mxu0 0
        %2975 = vmatprep.subr.bf16.mxu0 0
        %2976 = vmatpush1.bf16.msra.mxu0 0
        %2977 = vmatprep.subr.bf16.mxu0 0
        %2978 = vmatpush1.bf16.msra.mxu0 0
        %2979 = vmatprep.mubr.bf16.mxu0 0
        %2980 = vmatmul.mubr.bf16.gmra.mrb[0].mxu0 %v2052
        %v2981 = vpop.f32.mrb[0].mxu0
        %v2982 = vadd.f32 %v2024, %v2981
        %v2983 = vpop.f32.mrb[0].mxu0
        %v2984 = vpop.f32.mrb[0].mxu0
        %v2985 = vadd.f32 %v2029, %v2984
        %v2986 = vpop.f32.mrb[0].mxu0
        %2987 = vmatprep.mubr.bf16.mxu0 0
        %2988 = vmatmul.mubr.bf16.gmra.mrb[0].mxu0 %v2055
        %v2989 = vpop.f32.mrb[0].mxu0
        %v2990 = vadd.f32 %v2034, %v2989
        %v2991 = vpop.f32.mrb[0].mxu0
        %v2992 = vpop.f32.mrb[0].mxu0
        %v2993 = vadd.f32 %v2039, %v2992
        %v2994 = vpop.f32.mrb[0].mxu0
        %2995 = vdwg.mxu0
        %2996 = vxpose.xlu0.b32.start [1/16] %v2982, 128
        %2997 = vxpose.xlu0.b32.cont [2/16] %v2985, 128
        %2998 = vxpose.xlu0.b32.cont [3/16] %v2990, 128
        %2999 = vxpose.xlu0.b32.cont [4/16] %v2993, 128
        %3000 = vxpose.xlu0.b32.cont [5/16] 0.0, 128
        %3001 = vxpose.xlu0.b32.cont [6/16] 0.0, 128
        %3002 = vxpose.xlu0.b32.cont [7/16] 0.0, 128
        %3003 = vxpose.xlu0.b32.cont [8/16] 0.0, 128
        %3004 = vxpose.xlu0.b32.cont [9/16] 0.0, 128
        %3005 = vxpose.xlu0.b32.cont [10/16] 0.0, 128
        %3006 = vxpose.xlu0.b32.cont [11/16] 0.0, 128
        %3007 = vxpose.xlu0.b32.cont [12/16] 0.0, 128
        %3008 = vxpose.xlu0.b32.cont [13/16] 0.0, 128
        %3009 = vxpose.xlu0.b32.cont [14/16] 0.0, 128
        %3010 = vxpose.xlu0.b32.cont [15/16] 0.0, 128
        %3011 = vxpose.xlu0.b32.end [16/16] 0.0, 128
        %v3012 = vpop.trf.xlu0
        %v3013 = vpop.trf.xlu0
        %v3014 = vpop.trf.xlu0
        %v3015 = vpop.trf.xlu0
        %v3016 = vpop.trf.xlu0
        %v3017 = vpop.trf.xlu0
        %v3018 = vpop.trf.xlu0
        %v3019 = vpop.trf.xlu0
        %v3020 = vpop.trf.xlu0
        %v3021 = vpop.trf.xlu0
        %v3022 = vpop.trf.xlu0
        %v3023 = vpop.trf.xlu0
        %v3024 = vpop.trf.xlu0
        %v3025 = vpop.trf.xlu0
        %v3026 = vpop.trf.xlu0
        %v3027 = vpop.trf.xlu0
        %s3028 = scalar_lea.vmem %s520, 48 [#allocation10]
        %3029 = vst.msk [vmem:[%s3028] sm:$0xff] %vm605, %v3012
        %3030 = vst.msk [vmem:[%s3028 + $0x8] sm:$0xff] %vm605, %v3013
        %v3031 = vmul.f32 %v1175, %v1303
        %v3032 = vmul.f32 %v1175, %v1335
        %v3033 = vmul.f32 %v1175, %v1367
        %v3034 = vmul.f32 %v1175, %v1399
        %v3035 = vmul.f32 %v1175, %v1431
        %v3036 = vmul.f32 %v1175, %v1463
        %v3037 = vmul.f32 %v1175, %v1495
        %v3038 = vmul.f32 %v1175, %v1527
        %v3039 = vmul.f32 %v1176, %v1304
        %v3040 = vmul.f32 %v1176, %v1336
        %v3041 = vmul.f32 %v1176, %v1368
        %v3042 = vmul.f32 %v1176, %v1400
        %v3043 = vmul.f32 %v1176, %v1432
        %v3044 = vmul.f32 %v1176, %v1464
        %v3045 = vmul.f32 %v1176, %v1496
        %v3046 = vmul.f32 %v1176, %v1528
        %v3047 = vadd.f32 %v3031, %v3039
        %v3048 = vadd.f32 %v3032, %v3040
        %v3049 = vadd.f32 %v3033, %v3041
        %v3050 = vadd.f32 %v3034, %v3042
        %v3051 = vadd.f32 %v3035, %v3043
        %v3052 = vadd.f32 %v3036, %v3044
        %v3053 = vadd.f32 %v3037, %v3045
        %v3054 = vadd.f32 %v3038, %v3046
        %v3055 = vmul.f32 %v1177, %v1305
        %v3056 = vmul.f32 %v1177, %v1337
        %v3057 = vmul.f32 %v1177, %v1369
        %v3058 = vmul.f32 %v1177, %v1401
        %v3059 = vmul.f32 %v1177, %v1433
        %v3060 = vmul.f32 %v1177, %v1465
        %v3061 = vmul.f32 %v1177, %v1497
        %v3062 = vmul.f32 %v1177, %v1529
        %v3063 = vadd.f32 %v3047, %v3055
        %v3064 = vadd.f32 %v3048, %v3056
        %v3065 = vadd.f32 %v3049, %v3057
        %v3066 = vadd.f32 %v3050, %v3058
        %v3067 = vadd.f32 %v3051, %v3059
        %v3068 = vadd.f32 %v3052, %v3060
        %v3069 = vadd.f32 %v3053, %v3061
        %v3070 = vadd.f32 %v3054, %v3062
        %v3071 = vmul.f32 %v1178, %v1306
        %v3072 = vmul.f32 %v1178, %v1338
        %v3073 = vmul.f32 %v1178, %v1370
        %v3074 = vmul.f32 %v1178, %v1402
        %v3075 = vmul.f32 %v1178, %v1434
        %v3076 = vmul.f32 %v1178, %v1466
        %v3077 = vmul.f32 %v1178, %v1498
        %v3078 = vmul.f32 %v1178, %v1530
        %v3079 = vadd.f32 %v3063, %v3071
        %v3080 = vadd.f32 %v3064, %v3072
        %v3081 = vadd.f32 %v3065, %v3073
        %v3082 = vadd.f32 %v3066, %v3074
        %v3083 = vadd.f32 %v3067, %v3075
        %v3084 = vadd.f32 %v3068, %v3076
        %v3085 = vadd.f32 %v3069, %v3077
        %v3086 = vadd.f32 %v3070, %v3078
        %v3087 = vsel %vm1863, %v3079, -inf
        %v3088 = vsel %vm1863, %v3080, -inf
        %v3089 = vsel %vm1863, %v3081, -inf
        %v3090 = vsel %vm1863, %v3082, -inf
        %v3091 = vsel %vm1863, %v3083, -inf
        %v3092 = vmax.f32 %v3087, %v3091
        %v3093 = vsel %vm1863, %v3084, -inf
        %v3094 = vmax.f32 %v3088, %v3093
        %v3095 = vsel %vm1863, %v3085, -inf
        %v3096 = vmax.f32 %v3089, %v3095
        %v3097 = vsel %vm1863, %v3086, -inf
        %v3098 = vmax.f32 %v3090, %v3097
        %v3099 = vmax.f32 %v3092, %v3094
        %v3100 = vmax.f32 %v3096, %v3098
        %v3101 = vmax.f32 %v3099, %v3100
        %v3102 = vsub.f32 %v3079, %v3101
        %v3103 = vsub.f32 %v3080, %v3101
        %v3104 = vsub.f32 %v3081, %v3101
        %v3105 = vsub.f32 %v3082, %v3101
        %v3106 = vsub.f32 %v3083, %v3101
        %v3107 = vsub.f32 %v3084, %v3101
        %v3108 = vsub.f32 %v3085, %v3101
        %v3109 = vsub.f32 %v3086, %v3101
        %v3110 = vmul.f32 %v3102, 1.442695
        %v3111 = vpow.pop %v3110
        %v3112 = vmul.f32 %v3103, 1.442695
        %v3113 = vpow.pop %v3112
        %v3114 = vmul.f32 %v3104, 1.442695
        %v3115 = vpow.pop %v3114
        %v3116 = vmul.f32 %v3105, 1.442695
        %v3117 = vpow.pop %v3116
        %v3118 = vmul.f32 %v3106, 1.442695
        %v3119 = vpow.pop %v3118
        %v3120 = vmul.f32 %v3107, 1.442695
        %v3121 = vpow.pop %v3120
        %v3122 = vmul.f32 %v3108, 1.442695
        %v3123 = vpow.pop %v3122
        %v3124 = vmul.f32 %v3109, 1.442695
        %v3125 = vpow.pop %v3124
        %v3126 = vsel %vm1863, %v3111, 0.0
        %v3127 = vsel %vm1863, %v3113, 0.0
        %v3128 = vadd.f32 %v3126, %v3127
        %v3129 = vsel %vm1863, %v3115, 0.0
        %v3130 = vadd.f32 %v3128, %v3129
        %v3131 = vsel %vm1863, %v3117, 0.0
        %v3132 = vadd.f32 %v3130, %v3131
        %v3133 = vsel %vm1863, %v3119, 0.0
        %v3134 = vadd.f32 %v3132, %v3133
        %v3135 = vsel %vm1863, %v3121, 0.0
        %v3136 = vadd.f32 %v3134, %v3135
        %v3137 = vsel %vm1863, %v3123, 0.0
        %v3138 = vadd.f32 %v3136, %v3137
        %v3139 = vsel %vm1863, %v3125, 0.0
        %v3140 = vadd.f32 %v3138, %v3139
        %v3141 = vrcp.pop %v3140
        %v3142 = vmul.f32 %v3111, %v3141
        %v3143 = vmul.f32 %v3113, %v3141
        %v3144 = vmul.f32 %v3115, %v3141
        %v3145 = vmul.f32 %v3117, %v3141
        %v3146 = vmul.f32 %v3119, %v3141
        %v3147 = vmul.f32 %v3121, %v3141
        %v3148 = vmul.f32 %v3123, %v3141
        %v3149 = vmul.f32 %v3125, %v3141
        %v3150 = vmul.f32 %v3142, %v1559
        %v3151 = vmul.f32 %v3143, %v1591
        %v3152 = vmul.f32 %v3144, %v1623
        %v3153 = vmul.f32 %v3145, %v1655
        %v3154 = vmul.f32 %v3146, %v1687
        %v3155 = vmul.f32 %v3147, %v1719
        %v3156 = vmul.f32 %v3148, %v1751
        %v3157 = vmul.f32 %v3149, %v1783
        %v3158 = vsel %vm1863, %v3150, 0.0
        %v3159 = vsel %vm1863, %v3151, 0.0
        %v3160 = vadd.f32 %v3158, %v3159
        %v3161 = vsel %vm1863, %v3152, 0.0
        %v3162 = vadd.f32 %v3160, %v3161
        %v3163 = vsel %vm1863, %v3153, 0.0
        %v3164 = vadd.f32 %v3162, %v3163
        %v3165 = vsel %vm1863, %v3154, 0.0
        %v3166 = vadd.f32 %v3164, %v3165
        %v3167 = vsel %vm1863, %v3155, 0.0
        %v3168 = vadd.f32 %v3166, %v3167
        %v3169 = vsel %vm1863, %v3156, 0.0
        %v3170 = vadd.f32 %v3168, %v3169
        %v3171 = vsel %vm1863, %v3157, 0.0
        %v3172 = vadd.f32 %v3170, %v3171
        %v3173 = vmul.f32 %v3142, %v1560
        %v3174 = vmul.f32 %v3143, %v1592
        %v3175 = vmul.f32 %v3144, %v1624
        %v3176 = vmul.f32 %v3145, %v1656
        %v3177 = vmul.f32 %v3146, %v1688
        %v3178 = vmul.f32 %v3147, %v1720
        %v3179 = vmul.f32 %v3148, %v1752
        %v3180 = vmul.f32 %v3149, %v1784
        %v3181 = vsel %vm1863, %v3173, 0.0
        %v3182 = vsel %vm1863, %v3174, 0.0
        %v3183 = vadd.f32 %v3181, %v3182
        %v3184 = vsel %vm1863, %v3175, 0.0
        %v3185 = vadd.f32 %v3183, %v3184
        %v3186 = vsel %vm1863, %v3176, 0.0
        %v3187 = vadd.f32 %v3185, %v3186
        %v3188 = vsel %vm1863, %v3177, 0.0
        %v3189 = vadd.f32 %v3187, %v3188
        %v3190 = vsel %vm1863, %v3178, 0.0
        %v3191 = vadd.f32 %v3189, %v3190
        %v3192 = vsel %vm1863, %v3179, 0.0
        %v3193 = vadd.f32 %v3191, %v3192
        %v3194 = vsel %vm1863, %v3180, 0.0
        %v3195 = vadd.f32 %v3193, %v3194
        %v3196 = vmul.f32 %v3142, %v1561
        %v3197 = vmul.f32 %v3143, %v1593
        %v3198 = vmul.f32 %v3144, %v1625
        %v3199 = vmul.f32 %v3145, %v1657
        %v3200 = vmul.f32 %v3146, %v1689
        %v3201 = vmul.f32 %v3147, %v1721
        %v3202 = vmul.f32 %v3148, %v1753
        %v3203 = vmul.f32 %v3149, %v1785
        %v3204 = vsel %vm1863, %v3196, 0.0
        %v3205 = vsel %vm1863, %v3197, 0.0
        %v3206 = vadd.f32 %v3204, %v3205
        %v3207 = vsel %vm1863, %v3198, 0.0
        %v3208 = vadd.f32 %v3206, %v3207
        %v3209 = vsel %vm1863, %v3199, 0.0
        %v3210 = vadd.f32 %v3208, %v3209
        %v3211 = vsel %vm1863, %v3200, 0.0
        %v3212 = vadd.f32 %v3210, %v3211
        %v3213 = vsel %vm1863, %v3201, 0.0
        %v3214 = vadd.f32 %v3212, %v3213
        %v3215 = vsel %vm1863, %v3202, 0.0
        %v3216 = vadd.f32 %v3214, %v3215
        %v3217 = vsel %vm1863, %v3203, 0.0
        %v3218 = vadd.f32 %v3216, %v3217
        %v3219 = vmul.f32 %v3142, %v1562
        %v3220 = vmul.f32 %v3143, %v1594
        %v3221 = vmul.f32 %v3144, %v1626
        %v3222 = vmul.f32 %v3145, %v1658
        %v3223 = vmul.f32 %v3146, %v1690
        %v3224 = vmul.f32 %v3147, %v1722
        %v3225 = vmul.f32 %v3148, %v1754
        %v3226 = vmul.f32 %v3149, %v1786
        %v3227 = vsel %vm1863, %v3219, 0.0
        %v3228 = vsel %vm1863, %v3220, 0.0
        %v3229 = vadd.f32 %v3227, %v3228
        %v3230 = vsel %vm1863, %v3221, 0.0
        %v3231 = vadd.f32 %v3229, %v3230
        %v3232 = vsel %vm1863, %v3222, 0.0
        %v3233 = vadd.f32 %v3231, %v3232
        %v3234 = vsel %vm1863, %v3223, 0.0
        %v3235 = vadd.f32 %v3233, %v3234
        %v3236 = vsel %vm1863, %v3224, 0.0
        %v3237 = vadd.f32 %v3235, %v3236
        %v3238 = vsel %vm1863, %v3225, 0.0
        %v3239 = vadd.f32 %v3237, %v3238
        %v3240 = vsel %vm1863, %v3226, 0.0
        %v3241 = vadd.f32 %v3239, %v3240
        %v3242 = vpack.c.bf16 %v3195, %v3172
        %v3243 = vpack.c.bf16 %v3241, %v3218
        %3244 = vmatprep.subr.bf16.mxu0 0
        %3245 = vmatpush1.bf16.msra.mxu0 %v3242
        %3246 = vmatprep.subr.bf16.mxu0 0
        %3247 = vmatpush1.bf16.msra.mxu0 %v3243
        %3248 = vmatprep.subr.bf16.mxu0 0
        %3249 = vmatpush1.bf16.msra.mxu0 0
        %3250 = vmatprep.subr.bf16.mxu0 0
        %3251 = vmatpush1.bf16.msra.mxu0 0
        %3252 = vmatprep.subr.bf16.mxu0 0
        %3253 = vmatpush1.bf16.msra.mxu0 0
        %3254 = vmatprep.subr.bf16.mxu0 0
        %3255 = vmatpush1.bf16.msra.mxu0 0
        %3256 = vmatprep.subr.bf16.mxu0 0
        %3257 = vmatpush1.bf16.msra.mxu0 0
        %3258 = vmatprep.subr.bf16.mxu0 0
        %3259 = vmatpush1.bf16.msra.mxu0 0
        %3260 = vmatprep.subr.bf16.mxu0 0
        %3261 = vmatpush1.bf16.msra.mxu0 0
        %3262 = vmatprep.subr.bf16.mxu0 0
        %3263 = vmatpush1.bf16.msra.mxu0 0
        %3264 = vmatprep.subr.bf16.mxu0 0
        %3265 = vmatpush1.bf16.msra.mxu0 0
        %3266 = vmatprep.subr.bf16.mxu0 0
        %3267 = vmatpush1.bf16.msra.mxu0 0
        %3268 = vmatprep.subr.bf16.mxu0 0
        %3269 = vmatpush1.bf16.msra.mxu0 0
        %3270 = vmatprep.subr.bf16.mxu0 0
        %3271 = vmatpush1.bf16.msra.mxu0 0
        %3272 = vmatprep.subr.bf16.mxu0 0
        %3273 = vmatpush1.bf16.msra.mxu0 0
        %3274 = vmatprep.subr.bf16.mxu0 0
        %3275 = vmatpush1.bf16.msra.mxu0 0
        %3276 = vmatprep.mubr.bf16.mxu0 0
        %3277 = vmatmul.mubr.bf16.gmra.mrb[0].mxu0 %v2052
        %v3278 = vpop.f32.mrb[0].mxu0
        %v3279 = vadd.f32 %v2024, %v3278
        %v3280 = vpop.f32.mrb[0].mxu0
        %v3281 = vpop.f32.mrb[0].mxu0
        %v3282 = vadd.f32 %v2029, %v3281
        %v3283 = vpop.f32.mrb[0].mxu0
        %3284 = vmatprep.mubr.bf16.mxu0 0
        %3285 = vmatmul.mubr.bf16.gmra.mrb[0].mxu0 %v2055
        %v3286 = vpop.f32.mrb[0].mxu0
        %v3287 = vadd.f32 %v2034, %v3286
        %v3288 = vpop.f32.mrb[0].mxu0
        %v3289 = vpop.f32.mrb[0].mxu0
        %v3290 = vadd.f32 %v2039, %v3289
        %v3291 = vpop.f32.mrb[0].mxu0
        %3292 = vdwg.mxu0
        %3293 = vxpose.xlu0.b32.start [1/16] %v3279, 128
        %3294 = vxpose.xlu0.b32.cont [2/16] %v3282, 128
        %3295 = vxpose.xlu0.b32.cont [3/16] %v3287, 128
        %3296 = vxpose.xlu0.b32.cont [4/16] %v3290, 128
        %3297 = vxpose.xlu0.b32.cont [5/16] 0.0, 128
        %3298 = vxpose.xlu0.b32.cont [6/16] 0.0, 128
        %3299 = vxpose.xlu0.b32.cont [7/16] 0.0, 128
        %3300 = vxpose.xlu0.b32.cont [8/16] 0.0, 128
        %3301 = vxpose.xlu0.b32.cont [9/16] 0.0, 128
        %3302 = vxpose.xlu0.b32.cont [10/16] 0.0, 128
        %3303 = vxpose.xlu0.b32.cont [11/16] 0.0, 128
        %3304 = vxpose.xlu0.b32.cont [12/16] 0.0, 128
        %3305 = vxpose.xlu0.b32.cont [13/16] 0.0, 128
        %3306 = vxpose.xlu0.b32.cont [14/16] 0.0, 128
        %3307 = vxpose.xlu0.b32.cont [15/16] 0.0, 128
        %3308 = vxpose.xlu0.b32.end [16/16] 0.0, 128
        %v3309 = vpop.trf.xlu0
        %v3310 = vpop.trf.xlu0
        %v3311 = vpop.trf.xlu0
        %v3312 = vpop.trf.xlu0
        %v3313 = vpop.trf.xlu0
        %v3314 = vpop.trf.xlu0
        %v3315 = vpop.trf.xlu0
        %v3316 = vpop.trf.xlu0
        %v3317 = vpop.trf.xlu0
        %v3318 = vpop.trf.xlu0
        %v3319 = vpop.trf.xlu0
        %v3320 = vpop.trf.xlu0
        %v3321 = vpop.trf.xlu0
        %v3322 = vpop.trf.xlu0
        %v3323 = vpop.trf.xlu0
        %v3324 = vpop.trf.xlu0
        %s3325 = scalar_lea.vmem %s520, 64 [#allocation10]
        %3326 = vst.msk [vmem:[%s3325] sm:$0xff] %vm605, %v3309
        %3327 = vst.msk [vmem:[%s3325 + $0x8] sm:$0xff] %vm605, %v3310
        %v3328 = vmul.f32 %v1207, %v1303
        %v3329 = vmul.f32 %v1207, %v1335
        %v3330 = vmul.f32 %v1207, %v1367
        %v3331 = vmul.f32 %v1207, %v1399
        %v3332 = vmul.f32 %v1207, %v1431
        %v3333 = vmul.f32 %v1207, %v1463
        %v3334 = vmul.f32 %v1207, %v1495
        %v3335 = vmul.f32 %v1207, %v1527
        %v3336 = vmul.f32 %v1208, %v1304
        %v3337 = vmul.f32 %v1208, %v1336
        %v3338 = vmul.f32 %v1208, %v1368
        %v3339 = vmul.f32 %v1208, %v1400
        %v3340 = vmul.f32 %v1208, %v1432
        %v3341 = vmul.f32 %v1208, %v1464
        %v3342 = vmul.f32 %v1208, %v1496
        %v3343 = vmul.f32 %v1208, %v1528
        %v3344 = vadd.f32 %v3328, %v3336
        %v3345 = vadd.f32 %v3329, %v3337
        %v3346 = vadd.f32 %v3330, %v3338
        %v3347 = vadd.f32 %v3331, %v3339
        %v3348 = vadd.f32 %v3332, %v3340
        %v3349 = vadd.f32 %v3333, %v3341
        %v3350 = vadd.f32 %v3334, %v3342
        %v3351 = vadd.f32 %v3335, %v3343
        %v3352 = vmul.f32 %v1209, %v1305
        %v3353 = vmul.f32 %v1209, %v1337
        %v3354 = vmul.f32 %v1209, %v1369
        %v3355 = vmul.f32 %v1209, %v1401
        %v3356 = vmul.f32 %v1209, %v1433
        %v3357 = vmul.f32 %v1209, %v1465
        %v3358 = vmul.f32 %v1209, %v1497
        %v3359 = vmul.f32 %v1209, %v1529
        %v3360 = vadd.f32 %v3344, %v3352
        %v3361 = vadd.f32 %v3345, %v3353
        %v3362 = vadd.f32 %v3346, %v3354
        %v3363 = vadd.f32 %v3347, %v3355
        %v3364 = vadd.f32 %v3348, %v3356
        %v3365 = vadd.f32 %v3349, %v3357
        %v3366 = vadd.f32 %v3350, %v3358
        %v3367 = vadd.f32 %v3351, %v3359
        %v3368 = vmul.f32 %v1210, %v1306
        %v3369 = vmul.f32 %v1210, %v1338
        %v3370 = vmul.f32 %v1210, %v1370
        %v3371 = vmul.f32 %v1210, %v1402
        %v3372 = vmul.f32 %v1210, %v1434
        %v3373 = vmul.f32 %v1210, %v1466
        %v3374 = vmul.f32 %v1210, %v1498
        %v3375 = vmul.f32 %v1210, %v1530
        %v3376 = vadd.f32 %v3360, %v3368
        %v3377 = vadd.f32 %v3361, %v3369
        %v3378 = vadd.f32 %v3362, %v3370
        %v3379 = vadd.f32 %v3363, %v3371
        %v3380 = vadd.f32 %v3364, %v3372
        %v3381 = vadd.f32 %v3365, %v3373
        %v3382 = vadd.f32 %v3366, %v3374
        %v3383 = vadd.f32 %v3367, %v3375
        %v3384 = vsel %vm1863, %v3376, -inf
        %v3385 = vsel %vm1863, %v3377, -inf
        %v3386 = vsel %vm1863, %v3378, -inf
        %v3387 = vsel %vm1863, %v3379, -inf
        %v3388 = vsel %vm1863, %v3380, -inf
        %v3389 = vmax.f32 %v3384, %v3388
        %v3390 = vsel %vm1863, %v3381, -inf
        %v3391 = vmax.f32 %v3385, %v3390
        %v3392 = vsel %vm1863, %v3382, -inf
        %v3393 = vmax.f32 %v3386, %v3392
        %v3394 = vsel %vm1863, %v3383, -inf
        %v3395 = vmax.f32 %v3387, %v3394
        %v3396 = vmax.f32 %v3389, %v3391
        %v3397 = vmax.f32 %v3393, %v3395
        %v3398 = vmax.f32 %v3396, %v3397
        %v3399 = vsub.f32 %v3376, %v3398
        %v3400 = vsub.f32 %v3377, %v3398
        %v3401 = vsub.f32 %v3378, %v3398
        %v3402 = vsub.f32 %v3379, %v3398
        %v3403 = vsub.f32 %v3380, %v3398
        %v3404 = vsub.f32 %v3381, %v3398
        %v3405 = vsub.f32 %v3382, %v3398
        %v3406 = vsub.f32 %v3383, %v3398
        %v3407 = vmul.f32 %v3399, 1.442695
        %v3408 = vpow.pop %v3407
        %v3409 = vmul.f32 %v3400, 1.442695
        %v3410 = vpow.pop %v3409
        %v3411 = vmul.f32 %v3401, 1.442695
        %v3412 = vpow.pop %v3411
        %v3413 = vmul.f32 %v3402, 1.442695
        %v3414 = vpow.pop %v3413
        %v3415 = vmul.f32 %v3403, 1.442695
        %v3416 = vpow.pop %v3415
        %v3417 = vmul.f32 %v3404, 1.442695
        %v3418 = vpow.pop %v3417
        %v3419 = vmul.f32 %v3405, 1.442695
        %v3420 = vpow.pop %v3419
        %v3421 = vmul.f32 %v3406, 1.442695
        %v3422 = vpow.pop %v3421
        %v3423 = vsel %vm1863, %v3408, 0.0
        %v3424 = vsel %vm1863, %v3410, 0.0
        %v3425 = vadd.f32 %v3423, %v3424
        %v3426 = vsel %vm1863, %v3412, 0.0
        %v3427 = vadd.f32 %v3425, %v3426
        %v3428 = vsel %vm1863, %v3414, 0.0
        %v3429 = vadd.f32 %v3427, %v3428
        %v3430 = vsel %vm1863, %v3416, 0.0
        %v3431 = vadd.f32 %v3429, %v3430
        %v3432 = vsel %vm1863, %v3418, 0.0
        %v3433 = vadd.f32 %v3431, %v3432
        %v3434 = vsel %vm1863, %v3420, 0.0
        %v3435 = vadd.f32 %v3433, %v3434
        %v3436 = vsel %vm1863, %v3422, 0.0
        %v3437 = vadd.f32 %v3435, %v3436
        %v3438 = vrcp.pop %v3437
        %v3439 = vmul.f32 %v3408, %v3438
        %v3440 = vmul.f32 %v3410, %v3438
        %v3441 = vmul.f32 %v3412, %v3438
        %v3442 = vmul.f32 %v3414, %v3438
        %v3443 = vmul.f32 %v3416, %v3438
        %v3444 = vmul.f32 %v3418, %v3438
        %v3445 = vmul.f32 %v3420, %v3438
        %v3446 = vmul.f32 %v3422, %v3438
        %v3447 = vmul.f32 %v3439, %v1559
        %v3448 = vmul.f32 %v3440, %v1591
        %v3449 = vmul.f32 %v3441, %v1623
        %v3450 = vmul.f32 %v3442, %v1655
        %v3451 = vmul.f32 %v3443, %v1687
        %v3452 = vmul.f32 %v3444, %v1719
        %v3453 = vmul.f32 %v3445, %v1751
        %v3454 = vmul.f32 %v3446, %v1783
        %v3455 = vsel %vm1863, %v3447, 0.0
        %v3456 = vsel %vm1863, %v3448, 0.0
        %v3457 = vadd.f32 %v3455, %v3456
        %v3458 = vsel %vm1863, %v3449, 0.0
        %v3459 = vadd.f32 %v3457, %v3458
        %v3460 = vsel %vm1863, %v3450, 0.0
        %v3461 = vadd.f32 %v3459, %v3460
        %v3462 = vsel %vm1863, %v3451, 0.0
        %v3463 = vadd.f32 %v3461, %v3462
        %v3464 = vsel %vm1863, %v3452, 0.0
        %v3465 = vadd.f32 %v3463, %v3464
        %v3466 = vsel %vm1863, %v3453, 0.0
        %v3467 = vadd.f32 %v3465, %v3466
        %v3468 = vsel %vm1863, %v3454, 0.0
        %v3469 = vadd.f32 %v3467, %v3468
        %v3470 = vmul.f32 %v3439, %v1560
        %v3471 = vmul.f32 %v3440, %v1592
        %v3472 = vmul.f32 %v3441, %v1624
        %v3473 = vmul.f32 %v3442, %v1656
        %v3474 = vmul.f32 %v3443, %v1688
        %v3475 = vmul.f32 %v3444, %v1720
        %v3476 = vmul.f32 %v3445, %v1752
        %v3477 = vmul.f32 %v3446, %v1784
        %v3478 = vsel %vm1863, %v3470, 0.0
        %v3479 = vsel %vm1863, %v3471, 0.0
        %v3480 = vadd.f32 %v3478, %v3479
        %v3481 = vsel %vm1863, %v3472, 0.0
        %v3482 = vadd.f32 %v3480, %v3481
        %v3483 = vsel %vm1863, %v3473, 0.0
        %v3484 = vadd.f32 %v3482, %v3483
        %v3485 = vsel %vm1863, %v3474, 0.0
        %v3486 = vadd.f32 %v3484, %v3485
        %v3487 = vsel %vm1863, %v3475, 0.0
        %v3488 = vadd.f32 %v3486, %v3487
        %v3489 = vsel %vm1863, %v3476, 0.0
        %v3490 = vadd.f32 %v3488, %v3489
        %v3491 = vsel %vm1863, %v3477, 0.0
        %v3492 = vadd.f32 %v3490, %v3491
        %v3493 = vmul.f32 %v3439, %v1561
        %v3494 = vmul.f32 %v3440, %v1593
        %v3495 = vmul.f32 %v3441, %v1625
        %v3496 = vmul.f32 %v3442, %v1657
        %v3497 = vmul.f32 %v3443, %v1689
        %v3498 = vmul.f32 %v3444, %v1721
        %v3499 = vmul.f32 %v3445, %v1753
        %v3500 = vmul.f32 %v3446, %v1785
        %v3501 = vsel %vm1863, %v3493, 0.0
        %v3502 = vsel %vm1863, %v3494, 0.0
        %v3503 = vadd.f32 %v3501, %v3502
        %v3504 = vsel %vm1863, %v3495, 0.0
        %v3505 = vadd.f32 %v3503, %v3504
        %v3506 = vsel %vm1863, %v3496, 0.0
        %v3507 = vadd.f32 %v3505, %v3506
        %v3508 = vsel %vm1863, %v3497, 0.0
        %v3509 = vadd.f32 %v3507, %v3508
        %v3510 = vsel %vm1863, %v3498, 0.0
        %v3511 = vadd.f32 %v3509, %v3510
        %v3512 = vsel %vm1863, %v3499, 0.0
        %v3513 = vadd.f32 %v3511, %v3512
        %v3514 = vsel %vm1863, %v3500, 0.0
        %v3515 = vadd.f32 %v3513, %v3514
        %v3516 = vmul.f32 %v3439, %v1562
        %v3517 = vmul.f32 %v3440, %v1594
        %v3518 = vmul.f32 %v3441, %v1626
        %v3519 = vmul.f32 %v3442, %v1658
        %v3520 = vmul.f32 %v3443, %v1690
        %v3521 = vmul.f32 %v3444, %v1722
        %v3522 = vmul.f32 %v3445, %v1754
        %v3523 = vmul.f32 %v3446, %v1786
        %v3524 = vsel %vm1863, %v3516, 0.0
        %v3525 = vsel %vm1863, %v3517, 0.0
        %v3526 = vadd.f32 %v3524, %v3525
        %v3527 = vsel %vm1863, %v3518, 0.0
        %v3528 = vadd.f32 %v3526, %v3527
        %v3529 = vsel %vm1863, %v3519, 0.0
        %v3530 = vadd.f32 %v3528, %v3529
        %v3531 = vsel %vm1863, %v3520, 0.0
        %v3532 = vadd.f32 %v3530, %v3531
        %v3533 = vsel %vm1863, %v3521, 0.0
        %v3534 = vadd.f32 %v3532, %v3533
        %v3535 = vsel %vm1863, %v3522, 0.0
        %v3536 = vadd.f32 %v3534, %v3535
        %v3537 = vsel %vm1863, %v3523, 0.0
        %v3538 = vadd.f32 %v3536, %v3537
        %v3539 = vpack.c.bf16 %v3492, %v3469
        %v3540 = vpack.c.bf16 %v3538, %v3515
        %3541 = vmatprep.subr.bf16.mxu0 0
        %3542 = vmatpush1.bf16.msra.mxu0 %v3539
        %3543 = vmatprep.subr.bf16.mxu0 0
        %3544 = vmatpush1.bf16.msra.mxu0 %v3540
        %3545 = vmatprep.subr.bf16.mxu0 0
        %3546 = vmatpush1.bf16.msra.mxu0 0
        %3547 = vmatprep.subr.bf16.mxu0 0
        %3548 = vmatpush1.bf16.msra.mxu0 0
        %3549 = vmatprep.subr.bf16.mxu0 0
        %3550 = vmatpush1.bf16.msra.mxu0 0
        %3551 = vmatprep.subr.bf16.mxu0 0
        %3552 = vmatpush1.bf16.msra.mxu0 0
        %3553 = vmatprep.subr.bf16.mxu0 0
        %3554 = vmatpush1.bf16.msra.mxu0 0
        %3555 = vmatprep.subr.bf16.mxu0 0
        %3556 = vmatpush1.bf16.msra.mxu0 0
        %3557 = vmatprep.subr.bf16.mxu0 0
        %3558 = vmatpush1.bf16.msra.mxu0 0
        %3559 = vmatprep.subr.bf16.mxu0 0
        %3560 = vmatpush1.bf16.msra.mxu0 0
        %3561 = vmatprep.subr.bf16.mxu0 0
        %3562 = vmatpush1.bf16.msra.mxu0 0
        %3563 = vmatprep.subr.bf16.mxu0 0
        %3564 = vmatpush1.bf16.msra.mxu0 0
        %3565 = vmatprep.subr.bf16.mxu0 0
        %3566 = vmatpush1.bf16.msra.mxu0 0
        %3567 = vmatprep.subr.bf16.mxu0 0
        %3568 = vmatpush1.bf16.msra.mxu0 0
        %3569 = vmatprep.subr.bf16.mxu0 0
        %3570 = vmatpush1.bf16.msra.mxu0 0
        %3571 = vmatprep.subr.bf16.mxu0 0
        %3572 = vmatpush1.bf16.msra.mxu0 0
        %3573 = vmatprep.mubr.bf16.mxu0 0
        %3574 = vmatmul.mubr.bf16.gmra.mrb[0].mxu0 %v2052
        %v3575 = vpop.f32.mrb[0].mxu0
        %v3576 = vadd.f32 %v2024, %v3575
        %v3577 = vpop.f32.mrb[0].mxu0
        %v3578 = vpop.f32.mrb[0].mxu0
        %v3579 = vadd.f32 %v2029, %v3578
        %v3580 = vpop.f32.mrb[0].mxu0
        %3581 = vmatprep.mubr.bf16.mxu0 0
        %3582 = vmatmul.mubr.bf16.gmra.mrb[0].mxu0 %v2055
        %v3583 = vpop.f32.mrb[0].mxu0
        %v3584 = vadd.f32 %v2034, %v3583
        %v3585 = vpop.f32.mrb[0].mxu0
        %v3586 = vpop.f32.mrb[0].mxu0
        %v3587 = vadd.f32 %v2039, %v3586
        %v3588 = vpop.f32.mrb[0].mxu0
        %3589 = vdwg.mxu0
        %3590 = vxpose.xlu0.b32.start [1/16] %v3576, 128
        %3591 = vxpose.xlu0.b32.cont [2/16] %v3579, 128
        %3592 = vxpose.xlu0.b32.cont [3/16] %v3584, 128
        %3593 = vxpose.xlu0.b32.cont [4/16] %v3587, 128
        %3594 = vxpose.xlu0.b32.cont [5/16] 0.0, 128
        %3595 = vxpose.xlu0.b32.cont [6/16] 0.0, 128
        %3596 = vxpose.xlu0.b32.cont [7/16] 0.0, 128
        %3597 = vxpose.xlu0.b32.cont [8/16] 0.0, 128
        %3598 = vxpose.xlu0.b32.cont [9/16] 0.0, 128
        %3599 = vxpose.xlu0.b32.cont [10/16] 0.0, 128
        %3600 = vxpose.xlu0.b32.cont [11/16] 0.0, 128
        %3601 = vxpose.xlu0.b32.cont [12/16] 0.0, 128
        %3602 = vxpose.xlu0.b32.cont [13/16] 0.0, 128
        %3603 = vxpose.xlu0.b32.cont [14/16] 0.0, 128
        %3604 = vxpose.xlu0.b32.cont [15/16] 0.0, 128
        %3605 = vxpose.xlu0.b32.end [16/16] 0.0, 128
        %v3606 = vpop.trf.xlu0
        %v3607 = vpop.trf.xlu0
        %v3608 = vpop.trf.xlu0
        %v3609 = vpop.trf.xlu0
        %v3610 = vpop.trf.xlu0
        %v3611 = vpop.trf.xlu0
        %v3612 = vpop.trf.xlu0
        %v3613 = vpop.trf.xlu0
        %v3614 = vpop.trf.xlu0
        %v3615 = vpop.trf.xlu0
        %v3616 = vpop.trf.xlu0
        %v3617 = vpop.trf.xlu0
        %v3618 = vpop.trf.xlu0
        %v3619 = vpop.trf.xlu0
        %v3620 = vpop.trf.xlu0
        %v3621 = vpop.trf.xlu0
        %s3622 = scalar_lea.vmem %s520, 80 [#allocation10]
        %3623 = vst.msk [vmem:[%s3622] sm:$0xff] %vm605, %v3606
        %3624 = vst.msk [vmem:[%s3622 + $0x8] sm:$0xff] %vm605, %v3607
        %v3625 = vmul.f32 %v1239, %v1303
        %v3626 = vmul.f32 %v1239, %v1335
        %v3627 = vmul.f32 %v1239, %v1367
        %v3628 = vmul.f32 %v1239, %v1399
        %v3629 = vmul.f32 %v1239, %v1431
        %v3630 = vmul.f32 %v1239, %v1463
        %v3631 = vmul.f32 %v1239, %v1495
        %v3632 = vmul.f32 %v1239, %v1527
        %v3633 = vmul.f32 %v1240, %v1304
        %v3634 = vmul.f32 %v1240, %v1336
        %v3635 = vmul.f32 %v1240, %v1368
        %v3636 = vmul.f32 %v1240, %v1400
        %v3637 = vmul.f32 %v1240, %v1432
        %v3638 = vmul.f32 %v1240, %v1464
        %v3639 = vmul.f32 %v1240, %v1496
        %v3640 = vmul.f32 %v1240, %v1528
        %v3641 = vadd.f32 %v3625, %v3633
        %v3642 = vadd.f32 %v3626, %v3634
        %v3643 = vadd.f32 %v3627, %v3635
        %v3644 = vadd.f32 %v3628, %v3636
        %v3645 = vadd.f32 %v3629, %v3637
        %v3646 = vadd.f32 %v3630, %v3638
        %v3647 = vadd.f32 %v3631, %v3639
        %v3648 = vadd.f32 %v3632, %v3640
        %v3649 = vmul.f32 %v1241, %v1305
        %v3650 = vmul.f32 %v1241, %v1337
        %v3651 = vmul.f32 %v1241, %v1369
        %v3652 = vmul.f32 %v1241, %v1401
        %v3653 = vmul.f32 %v1241, %v1433
        %v3654 = vmul.f32 %v1241, %v1465
        %v3655 = vmul.f32 %v1241, %v1497
        %v3656 = vmul.f32 %v1241, %v1529
        %v3657 = vadd.f32 %v3641, %v3649
        %v3658 = vadd.f32 %v3642, %v3650
        %v3659 = vadd.f32 %v3643, %v3651
        %v3660 = vadd.f32 %v3644, %v3652
        %v3661 = vadd.f32 %v3645, %v3653
        %v3662 = vadd.f32 %v3646, %v3654
        %v3663 = vadd.f32 %v3647, %v3655
        %v3664 = vadd.f32 %v3648, %v3656
        %v3665 = vmul.f32 %v1242, %v1306
        %v3666 = vmul.f32 %v1242, %v1338
        %v3667 = vmul.f32 %v1242, %v1370
        %v3668 = vmul.f32 %v1242, %v1402
        %v3669 = vmul.f32 %v1242, %v1434
        %v3670 = vmul.f32 %v1242, %v1466
        %v3671 = vmul.f32 %v1242, %v1498
        %v3672 = vmul.f32 %v1242, %v1530
        %v3673 = vadd.f32 %v3657, %v3665
        %v3674 = vadd.f32 %v3658, %v3666
        %v3675 = vadd.f32 %v3659, %v3667
        %v3676 = vadd.f32 %v3660, %v3668
        %v3677 = vadd.f32 %v3661, %v3669
        %v3678 = vadd.f32 %v3662, %v3670
        %v3679 = vadd.f32 %v3663, %v3671
        %v3680 = vadd.f32 %v3664, %v3672
        %v3681 = vsel %vm1863, %v3673, -inf
        %v3682 = vsel %vm1863, %v3674, -inf
        %v3683 = vsel %vm1863, %v3675, -inf
        %v3684 = vsel %vm1863, %v3676, -inf
        %v3685 = vsel %vm1863, %v3677, -inf
        %v3686 = vmax.f32 %v3681, %v3685
        %v3687 = vsel %vm1863, %v3678, -inf
        %v3688 = vmax.f32 %v3682, %v3687
        %v3689 = vsel %vm1863, %v3679, -inf
        %v3690 = vmax.f32 %v3683, %v3689
        %v3691 = vsel %vm1863, %v3680, -inf
        %v3692 = vmax.f32 %v3684, %v3691
        %v3693 = vmax.f32 %v3686, %v3688
        %v3694 = vmax.f32 %v3690, %v3692
        %v3695 = vmax.f32 %v3693, %v3694
        %v3696 = vsub.f32 %v3673, %v3695
        %v3697 = vsub.f32 %v3674, %v3695
        %v3698 = vsub.f32 %v3675, %v3695
        %v3699 = vsub.f32 %v3676, %v3695
        %v3700 = vsub.f32 %v3677, %v3695
        %v3701 = vsub.f32 %v3678, %v3695
        %v3702 = vsub.f32 %v3679, %v3695
        %v3703 = vsub.f32 %v3680, %v3695
        %v3704 = vmul.f32 %v3696, 1.442695
        %v3705 = vpow.pop %v3704
        %v3706 = vmul.f32 %v3697, 1.442695
        %v3707 = vpow.pop %v3706
        %v3708 = vmul.f32 %v3698, 1.442695
        %v3709 = vpow.pop %v3708
        %v3710 = vmul.f32 %v3699, 1.442695
        %v3711 = vpow.pop %v3710
        %v3712 = vmul.f32 %v3700, 1.442695
        %v3713 = vpow.pop %v3712
        %v3714 = vmul.f32 %v3701, 1.442695
        %v3715 = vpow.pop %v3714
        %v3716 = vmul.f32 %v3702, 1.442695
        %v3717 = vpow.pop %v3716
        %v3718 = vmul.f32 %v3703, 1.442695
        %v3719 = vpow.pop %v3718
        %v3720 = vsel %vm1863, %v3705, 0.0
        %v3721 = vsel %vm1863, %v3707, 0.0
        %v3722 = vadd.f32 %v3720, %v3721
        %v3723 = vsel %vm1863, %v3709, 0.0
        %v3724 = vadd.f32 %v3722, %v3723
        %v3725 = vsel %vm1863, %v3711, 0.0
        %v3726 = vadd.f32 %v3724, %v3725
        %v3727 = vsel %vm1863, %v3713, 0.0
        %v3728 = vadd.f32 %v3726, %v3727
        %v3729 = vsel %vm1863, %v3715, 0.0
        %v3730 = vadd.f32 %v3728, %v3729
        %v3731 = vsel %vm1863, %v3717, 0.0
        %v3732 = vadd.f32 %v3730, %v3731
        %v3733 = vsel %vm1863, %v3719, 0.0
        %v3734 = vadd.f32 %v3732, %v3733
        %v3735 = vrcp.pop %v3734
        %v3736 = vmul.f32 %v3705, %v3735
        %v3737 = vmul.f32 %v3707, %v3735
        %v3738 = vmul.f32 %v3709, %v3735
        %v3739 = vmul.f32 %v3711, %v3735
        %v3740 = vmul.f32 %v3713, %v3735
        %v3741 = vmul.f32 %v3715, %v3735
        %v3742 = vmul.f32 %v3717, %v3735
        %v3743 = vmul.f32 %v3719, %v3735
        %v3744 = vmul.f32 %v3736, %v1559
        %v3745 = vmul.f32 %v3737, %v1591
        %v3746 = vmul.f32 %v3738, %v1623
        %v3747 = vmul.f32 %v3739, %v1655
        %v3748 = vmul.f32 %v3740, %v1687
        %v3749 = vmul.f32 %v3741, %v1719
        %v3750 = vmul.f32 %v3742, %v1751
        %v3751 = vmul.f32 %v3743, %v1783
        %v3752 = vsel %vm1863, %v3744, 0.0
        %v3753 = vsel %vm1863, %v3745, 0.0
        %v3754 = vadd.f32 %v3752, %v3753
        %v3755 = vsel %vm1863, %v3746, 0.0
        %v3756 = vadd.f32 %v3754, %v3755
        %v3757 = vsel %vm1863, %v3747, 0.0
        %v3758 = vadd.f32 %v3756, %v3757
        %v3759 = vsel %vm1863, %v3748, 0.0
        %v3760 = vadd.f32 %v3758, %v3759
        %v3761 = vsel %vm1863, %v3749, 0.0
        %v3762 = vadd.f32 %v3760, %v3761
        %v3763 = vsel %vm1863, %v3750, 0.0
        %v3764 = vadd.f32 %v3762, %v3763
        %v3765 = vsel %vm1863, %v3751, 0.0
        %v3766 = vadd.f32 %v3764, %v3765
        %v3767 = vmul.f32 %v3736, %v1560
        %v3768 = vmul.f32 %v3737, %v1592
        %v3769 = vmul.f32 %v3738, %v1624
        %v3770 = vmul.f32 %v3739, %v1656
        %v3771 = vmul.f32 %v3740, %v1688
        %v3772 = vmul.f32 %v3741, %v1720
        %v3773 = vmul.f32 %v3742, %v1752
        %v3774 = vmul.f32 %v3743, %v1784
        %v3775 = vsel %vm1863, %v3767, 0.0
        %v3776 = vsel %vm1863, %v3768, 0.0
        %v3777 = vadd.f32 %v3775, %v3776
        %v3778 = vsel %vm1863, %v3769, 0.0
        %v3779 = vadd.f32 %v3777, %v3778
        %v3780 = vsel %vm1863, %v3770, 0.0
        %v3781 = vadd.f32 %v3779, %v3780
        %v3782 = vsel %vm1863, %v3771, 0.0
        %v3783 = vadd.f32 %v3781, %v3782
        %v3784 = vsel %vm1863, %v3772, 0.0
        %v3785 = vadd.f32 %v3783, %v3784
        %v3786 = vsel %vm1863, %v3773, 0.0
        %v3787 = vadd.f32 %v3785, %v3786
        %v3788 = vsel %vm1863, %v3774, 0.0
        %v3789 = vadd.f32 %v3787, %v3788
        %v3790 = vmul.f32 %v3736, %v1561
        %v3791 = vmul.f32 %v3737, %v1593
        %v3792 = vmul.f32 %v3738, %v1625
        %v3793 = vmul.f32 %v3739, %v1657
        %v3794 = vmul.f32 %v3740, %v1689
        %v3795 = vmul.f32 %v3741, %v1721
        %v3796 = vmul.f32 %v3742, %v1753
        %v3797 = vmul.f32 %v3743, %v1785
        %v3798 = vsel %vm1863, %v3790, 0.0
        %v3799 = vsel %vm1863, %v3791, 0.0
        %v3800 = vadd.f32 %v3798, %v3799
        %v3801 = vsel %vm1863, %v3792, 0.0
        %v3802 = vadd.f32 %v3800, %v3801
        %v3803 = vsel %vm1863, %v3793, 0.0
        %v3804 = vadd.f32 %v3802, %v3803
        %v3805 = vsel %vm1863, %v3794, 0.0
        %v3806 = vadd.f32 %v3804, %v3805
        %v3807 = vsel %vm1863, %v3795, 0.0
        %v3808 = vadd.f32 %v3806, %v3807
        %v3809 = vsel %vm1863, %v3796, 0.0
        %v3810 = vadd.f32 %v3808, %v3809
        %v3811 = vsel %vm1863, %v3797, 0.0
        %v3812 = vadd.f32 %v3810, %v3811
        %v3813 = vmul.f32 %v3736, %v1562
        %v3814 = vmul.f32 %v3737, %v1594
        %v3815 = vmul.f32 %v3738, %v1626
        %v3816 = vmul.f32 %v3739, %v1658
        %v3817 = vmul.f32 %v3740, %v1690
        %v3818 = vmul.f32 %v3741, %v1722
        %v3819 = vmul.f32 %v3742, %v1754
        %v3820 = vmul.f32 %v3743, %v1786
        %v3821 = vsel %vm1863, %v3813, 0.0
        %v3822 = vsel %vm1863, %v3814, 0.0
        %v3823 = vadd.f32 %v3821, %v3822
        %v3824 = vsel %vm1863, %v3815, 0.0
        %v3825 = vadd.f32 %v3823, %v3824
        %v3826 = vsel %vm1863, %v3816, 0.0
        %v3827 = vadd.f32 %v3825, %v3826
        %v3828 = vsel %vm1863, %v3817, 0.0
        %v3829 = vadd.f32 %v3827, %v3828
        %v3830 = vsel %vm1863, %v3818, 0.0
        %v3831 = vadd.f32 %v3829, %v3830
        %v3832 = vsel %vm1863, %v3819, 0.0
        %v3833 = vadd.f32 %v3831, %v3832
        %v3834 = vsel %vm1863, %v3820, 0.0
        %v3835 = vadd.f32 %v3833, %v3834
        %v3836 = vpack.c.bf16 %v3789, %v3766
        %v3837 = vpack.c.bf16 %v3835, %v3812
        %3838 = vmatprep.subr.bf16.mxu0 0
        %3839 = vmatpush1.bf16.msra.mxu0 %v3836
        %3840 = vmatprep.subr.bf16.mxu0 0
        %3841 = vmatpush1.bf16.msra.mxu0 %v3837
        %3842 = vmatprep.subr.bf16.mxu0 0
        %3843 = vmatpush1.bf16.msra.mxu0 0
        %3844 = vmatprep.subr.bf16.mxu0 0
        %3845 = vmatpush1.bf16.msra.mxu0 0
        %3846 = vmatprep.subr.bf16.mxu0 0
        %3847 = vmatpush1.bf16.msra.mxu0 0
        %3848 = vmatprep.subr.bf16.mxu0 0
        %3849 = vmatpush1.bf16.msra.mxu0 0
        %3850 = vmatprep.subr.bf16.mxu0 0
        %3851 = vmatpush1.bf16.msra.mxu0 0
        %3852 = vmatprep.subr.bf16.mxu0 0
        %3853 = vmatpush1.bf16.msra.mxu0 0
        %3854 = vmatprep.subr.bf16.mxu0 0
        %3855 = vmatpush1.bf16.msra.mxu0 0
        %3856 = vmatprep.subr.bf16.mxu0 0
        %3857 = vmatpush1.bf16.msra.mxu0 0
        %3858 = vmatprep.subr.bf16.mxu0 0
        %3859 = vmatpush1.bf16.msra.mxu0 0
        %3860 = vmatprep.subr.bf16.mxu0 0
        %3861 = vmatpush1.bf16.msra.mxu0 0
        %3862 = vmatprep.subr.bf16.mxu0 0
        %3863 = vmatpush1.bf16.msra.mxu0 0
        %3864 = vmatprep.subr.bf16.mxu0 0
        %3865 = vmatpush1.bf16.msra.mxu0 0
        %3866 = vmatprep.subr.bf16.mxu0 0
        %3867 = vmatpush1.bf16.msra.mxu0 0
        %3868 = vmatprep.subr.bf16.mxu0 0
        %3869 = vmatpush1.bf16.msra.mxu0 0
        %3870 = vmatprep.mubr.bf16.mxu0 0
        %3871 = vmatmul.mubr.bf16.gmra.mrb[0].mxu0 %v2052
        %v3872 = vpop.f32.mrb[0].mxu0
        %v3873 = vadd.f32 %v2024, %v3872
        %v3874 = vpop.f32.mrb[0].mxu0
        %v3875 = vpop.f32.mrb[0].mxu0
        %v3876 = vadd.f32 %v2029, %v3875
        %v3877 = vpop.f32.mrb[0].mxu0
        %3878 = vmatprep.mubr.bf16.mxu0 0
        %3879 = vmatmul.mubr.bf16.gmra.mrb[0].mxu0 %v2055
        %v3880 = vpop.f32.mrb[0].mxu0
        %v3881 = vadd.f32 %v2034, %v3880
        %v3882 = vpop.f32.mrb[0].mxu0
        %v3883 = vpop.f32.mrb[0].mxu0
        %v3884 = vadd.f32 %v2039, %v3883
        %v3885 = vpop.f32.mrb[0].mxu0
        %3886 = vdwg.mxu0
        %3887 = vxpose.xlu0.b32.start [1/16] %v3873, 128
        %3888 = vxpose.xlu0.b32.cont [2/16] %v3876, 128
        %3889 = vxpose.xlu0.b32.cont [3/16] %v3881, 128
        %3890 = vxpose.xlu0.b32.cont [4/16] %v3884, 128
        %3891 = vxpose.xlu0.b32.cont [5/16] 0.0, 128
        %3892 = vxpose.xlu0.b32.cont [6/16] 0.0, 128
        %3893 = vxpose.xlu0.b32.cont [7/16] 0.0, 128
        %3894 = vxpose.xlu0.b32.cont [8/16] 0.0, 128
        %3895 = vxpose.xlu0.b32.cont [9/16] 0.0, 128
        %3896 = vxpose.xlu0.b32.cont [10/16] 0.0, 128
        %3897 = vxpose.xlu0.b32.cont [11/16] 0.0, 128
        %3898 = vxpose.xlu0.b32.cont [12/16] 0.0, 128
        %3899 = vxpose.xlu0.b32.cont [13/16] 0.0, 128
        %3900 = vxpose.xlu0.b32.cont [14/16] 0.0, 128
        %3901 = vxpose.xlu0.b32.cont [15/16] 0.0, 128
        %3902 = vxpose.xlu0.b32.end [16/16] 0.0, 128
        %v3903 = vpop.trf.xlu0
        %v3904 = vpop.trf.xlu0
        %v3905 = vpop.trf.xlu0
        %v3906 = vpop.trf.xlu0
        %v3907 = vpop.trf.xlu0
        %v3908 = vpop.trf.xlu0
        %v3909 = vpop.trf.xlu0
        %v3910 = vpop.trf.xlu0
        %v3911 = vpop.trf.xlu0
        %v3912 = vpop.trf.xlu0
        %v3913 = vpop.trf.xlu0
        %v3914 = vpop.trf.xlu0
        %v3915 = vpop.trf.xlu0
        %v3916 = vpop.trf.xlu0
        %v3917 = vpop.trf.xlu0
        %v3918 = vpop.trf.xlu0
        %s3919 = scalar_lea.vmem %s520, 96 [#allocation10]
        %3920 = vst.msk [vmem:[%s3919] sm:$0xff] %vm605, %v3903
        %3921 = vst.msk [vmem:[%s3919 + $0x8] sm:$0xff] %vm605, %v3904
        %v3922 = vmul.f32 %v1271, %v1303
        %v3923 = vmul.f32 %v1271, %v1335
        %v3924 = vmul.f32 %v1271, %v1367
        %v3925 = vmul.f32 %v1271, %v1399
        %v3926 = vmul.f32 %v1271, %v1431
        %v3927 = vmul.f32 %v1271, %v1463
        %v3928 = vmul.f32 %v1271, %v1495
        %v3929 = vmul.f32 %v1271, %v1527
        %v3930 = vmul.f32 %v1272, %v1304
        %v3931 = vmul.f32 %v1272, %v1336
        %v3932 = vmul.f32 %v1272, %v1368
        %v3933 = vmul.f32 %v1272, %v1400
        %v3934 = vmul.f32 %v1272, %v1432
        %v3935 = vmul.f32 %v1272, %v1464
        %v3936 = vmul.f32 %v1272, %v1496
        %v3937 = vmul.f32 %v1272, %v1528
        %v3938 = vadd.f32 %v3922, %v3930
        %v3939 = vadd.f32 %v3923, %v3931
        %v3940 = vadd.f32 %v3924, %v3932
        %v3941 = vadd.f32 %v3925, %v3933
        %v3942 = vadd.f32 %v3926, %v3934
        %v3943 = vadd.f32 %v3927, %v3935
        %v3944 = vadd.f32 %v3928, %v3936
        %v3945 = vadd.f32 %v3929, %v3937
        %v3946 = vmul.f32 %v1273, %v1305
        %v3947 = vmul.f32 %v1273, %v1337
        %v3948 = vmul.f32 %v1273, %v1369
        %v3949 = vmul.f32 %v1273, %v1401
        %v3950 = vmul.f32 %v1273, %v1433
        %v3951 = vmul.f32 %v1273, %v1465
        %v3952 = vmul.f32 %v1273, %v1497
        %v3953 = vmul.f32 %v1273, %v1529
        %v3954 = vadd.f32 %v3938, %v3946
        %v3955 = vadd.f32 %v3939, %v3947
        %v3956 = vadd.f32 %v3940, %v3948
        %v3957 = vadd.f32 %v3941, %v3949
        %v3958 = vadd.f32 %v3942, %v3950
        %v3959 = vadd.f32 %v3943, %v3951
        %v3960 = vadd.f32 %v3944, %v3952
        %v3961 = vadd.f32 %v3945, %v3953
        %v3962 = vmul.f32 %v1274, %v1306
        %v3963 = vmul.f32 %v1274, %v1338
        %v3964 = vmul.f32 %v1274, %v1370
        %v3965 = vmul.f32 %v1274, %v1402
        %v3966 = vmul.f32 %v1274, %v1434
        %v3967 = vmul.f32 %v1274, %v1466
        %v3968 = vmul.f32 %v1274, %v1498
        %v3969 = vmul.f32 %v1274, %v1530
        %v3970 = vadd.f32 %v3954, %v3962
        %v3971 = vadd.f32 %v3955, %v3963
        %v3972 = vadd.f32 %v3956, %v3964
        %v3973 = vadd.f32 %v3957, %v3965
        %v3974 = vadd.f32 %v3958, %v3966
        %v3975 = vadd.f32 %v3959, %v3967
        %v3976 = vadd.f32 %v3960, %v3968
        %v3977 = vadd.f32 %v3961, %v3969
        %v3978 = vsel %vm1863, %v3970, -inf
        %v3979 = vsel %vm1863, %v3971, -inf
        %v3980 = vsel %vm1863, %v3972, -inf
        %v3981 = vsel %vm1863, %v3973, -inf
        %v3982 = vsel %vm1863, %v3974, -inf
        %v3983 = vmax.f32 %v3978, %v3982
        %v3984 = vsel %vm1863, %v3975, -inf
        %v3985 = vmax.f32 %v3979, %v3984
        %v3986 = vsel %vm1863, %v3976, -inf
        %v3987 = vmax.f32 %v3980, %v3986
        %v3988 = vsel %vm1863, %v3977, -inf
        %v3989 = vmax.f32 %v3981, %v3988
        %v3990 = vmax.f32 %v3983, %v3985
        %v3991 = vmax.f32 %v3987, %v3989
        %v3992 = vmax.f32 %v3990, %v3991
        %v3993 = vsub.f32 %v3970, %v3992
        %v3994 = vsub.f32 %v3971, %v3992
        %v3995 = vsub.f32 %v3972, %v3992
        %v3996 = vsub.f32 %v3973, %v3992
        %v3997 = vsub.f32 %v3974, %v3992
        %v3998 = vsub.f32 %v3975, %v3992
        %v3999 = vsub.f32 %v3976, %v3992
        %v4000 = vsub.f32 %v3977, %v3992
        %v4001 = vmul.f32 %v3993, 1.442695
        %v4002 = vpow.pop %v4001
        %v4003 = vmul.f32 %v3994, 1.442695
        %v4004 = vpow.pop %v4003
        %v4005 = vmul.f32 %v3995, 1.442695
        %v4006 = vpow.pop %v4005
        %v4007 = vmul.f32 %v3996, 1.442695
        %v4008 = vpow.pop %v4007
        %v4009 = vmul.f32 %v3997, 1.442695
        %v4010 = vpow.pop %v4009
        %v4011 = vmul.f32 %v3998, 1.442695
        %v4012 = vpow.pop %v4011
        %v4013 = vmul.f32 %v3999, 1.442695
        %v4014 = vpow.pop %v4013
        %v4015 = vmul.f32 %v4000, 1.442695
        %v4016 = vpow.pop %v4015
        %v4017 = vsel %vm1863, %v4002, 0.0
        %v4018 = vsel %vm1863, %v4004, 0.0
        %v4019 = vadd.f32 %v4017, %v4018
        %v4020 = vsel %vm1863, %v4006, 0.0
        %v4021 = vadd.f32 %v4019, %v4020
        %v4022 = vsel %vm1863, %v4008, 0.0
        %v4023 = vadd.f32 %v4021, %v4022
        %v4024 = vsel %vm1863, %v4010, 0.0
        %v4025 = vadd.f32 %v4023, %v4024
        %v4026 = vsel %vm1863, %v4012, 0.0
        %v4027 = vadd.f32 %v4025, %v4026
        %v4028 = vsel %vm1863, %v4014, 0.0
        %v4029 = vadd.f32 %v4027, %v4028
        %v4030 = vsel %vm1863, %v4016, 0.0
        %v4031 = vadd.f32 %v4029, %v4030
        %v4032 = vrcp.pop %v4031
        %v4033 = vmul.f32 %v4002, %v4032
        %v4034 = vmul.f32 %v4004, %v4032
        %v4035 = vmul.f32 %v4006, %v4032
        %v4036 = vmul.f32 %v4008, %v4032
        %v4037 = vmul.f32 %v4010, %v4032
        %v4038 = vmul.f32 %v4012, %v4032
        %v4039 = vmul.f32 %v4014, %v4032
        %v4040 = vmul.f32 %v4016, %v4032
        %v4041 = vmul.f32 %v4033, %v1559
        %v4042 = vmul.f32 %v4034, %v1591
        %v4043 = vmul.f32 %v4035, %v1623
        %v4044 = vmul.f32 %v4036, %v1655
        %v4045 = vmul.f32 %v4037, %v1687
        %v4046 = vmul.f32 %v4038, %v1719
        %v4047 = vmul.f32 %v4039, %v1751
        %v4048 = vmul.f32 %v4040, %v1783
        %v4049 = vsel %vm1863, %v4041, 0.0
        %v4050 = vsel %vm1863, %v4042, 0.0
        %v4051 = vadd.f32 %v4049, %v4050
        %v4052 = vsel %vm1863, %v4043, 0.0
        %v4053 = vadd.f32 %v4051, %v4052
        %v4054 = vsel %vm1863, %v4044, 0.0
        %v4055 = vadd.f32 %v4053, %v4054
        %v4056 = vsel %vm1863, %v4045, 0.0
        %v4057 = vadd.f32 %v4055, %v4056
        %v4058 = vsel %vm1863, %v4046, 0.0
        %v4059 = vadd.f32 %v4057, %v4058
        %v4060 = vsel %vm1863, %v4047, 0.0
        %v4061 = vadd.f32 %v4059, %v4060
        %v4062 = vsel %vm1863, %v4048, 0.0
        %v4063 = vadd.f32 %v4061, %v4062
        %v4064 = vmul.f32 %v4033, %v1560
        %v4065 = vmul.f32 %v4034, %v1592
        %v4066 = vmul.f32 %v4035, %v1624
        %v4067 = vmul.f32 %v4036, %v1656
        %v4068 = vmul.f32 %v4037, %v1688
        %v4069 = vmul.f32 %v4038, %v1720
        %v4070 = vmul.f32 %v4039, %v1752
        %v4071 = vmul.f32 %v4040, %v1784
        %v4072 = vsel %vm1863, %v4064, 0.0
        %v4073 = vsel %vm1863, %v4065, 0.0
        %v4074 = vadd.f32 %v4072, %v4073
        %v4075 = vsel %vm1863, %v4066, 0.0
        %v4076 = vadd.f32 %v4074, %v4075
        %v4077 = vsel %vm1863, %v4067, 0.0
        %v4078 = vadd.f32 %v4076, %v4077
        %v4079 = vsel %vm1863, %v4068, 0.0
        %v4080 = vadd.f32 %v4078, %v4079
        %v4081 = vsel %vm1863, %v4069, 0.0
        %v4082 = vadd.f32 %v4080, %v4081
        %v4083 = vsel %vm1863, %v4070, 0.0
        %v4084 = vadd.f32 %v4082, %v4083
        %v4085 = vsel %vm1863, %v4071, 0.0
        %v4086 = vadd.f32 %v4084, %v4085
        %v4087 = vmul.f32 %v4033, %v1561
        %v4088 = vmul.f32 %v4034, %v1593
        %v4089 = vmul.f32 %v4035, %v1625
        %v4090 = vmul.f32 %v4036, %v1657
        %v4091 = vmul.f32 %v4037, %v1689
        %v4092 = vmul.f32 %v4038, %v1721
        %v4093 = vmul.f32 %v4039, %v1753
        %v4094 = vmul.f32 %v4040, %v1785
        %v4095 = vsel %vm1863, %v4087, 0.0
        %v4096 = vsel %vm1863, %v4088, 0.0
        %v4097 = vadd.f32 %v4095, %v4096
        %v4098 = vsel %vm1863, %v4089, 0.0
        %v4099 = vadd.f32 %v4097, %v4098
        %v4100 = vsel %vm1863, %v4090, 0.0
        %v4101 = vadd.f32 %v4099, %v4100
        %v4102 = vsel %vm1863, %v4091, 0.0
        %v4103 = vadd.f32 %v4101, %v4102
        %v4104 = vsel %vm1863, %v4092, 0.0
        %v4105 = vadd.f32 %v4103, %v4104
        %v4106 = vsel %vm1863, %v4093, 0.0
        %v4107 = vadd.f32 %v4105, %v4106
        %v4108 = vsel %vm1863, %v4094, 0.0
        %v4109 = vadd.f32 %v4107, %v4108
        %v4110 = vmul.f32 %v4033, %v1562
        %v4111 = vmul.f32 %v4034, %v1594
        %v4112 = vmul.f32 %v4035, %v1626
        %v4113 = vmul.f32 %v4036, %v1658
        %v4114 = vmul.f32 %v4037, %v1690
        %v4115 = vmul.f32 %v4038, %v1722
        %v4116 = vmul.f32 %v4039, %v1754
        %v4117 = vmul.f32 %v4040, %v1786
        %v4118 = vsel %vm1863, %v4110, 0.0
        %v4119 = vsel %vm1863, %v4111, 0.0
        %v4120 = vadd.f32 %v4118, %v4119
        %v4121 = vsel %vm1863, %v4112, 0.0
        %v4122 = vadd.f32 %v4120, %v4121
        %v4123 = vsel %vm1863, %v4113, 0.0
        %v4124 = vadd.f32 %v4122, %v4123
        %v4125 = vsel %vm1863, %v4114, 0.0
        %v4126 = vadd.f32 %v4124, %v4125
        %v4127 = vsel %vm1863, %v4115, 0.0
        %v4128 = vadd.f32 %v4126, %v4127
        %v4129 = vsel %vm1863, %v4116, 0.0
        %v4130 = vadd.f32 %v4128, %v4129
        %v4131 = vsel %vm1863, %v4117, 0.0
        %v4132 = vadd.f32 %v4130, %v4131
        %v4133 = vpack.c.bf16 %v4086, %v4063
        %v4134 = vpack.c.bf16 %v4132, %v4109
        %4135 = vmatprep.subr.bf16.mxu0 0
        %4136 = vmatpush1.bf16.msra.mxu0 %v4133
        %4137 = vmatprep.subr.bf16.mxu0 0
        %4138 = vmatpush1.bf16.msra.mxu0 %v4134
        %4139 = vmatprep.subr.bf16.mxu0 0
        %4140 = vmatpush1.bf16.msra.mxu0 0
        %4141 = vmatprep.subr.bf16.mxu0 0
        %4142 = vmatpush1.bf16.msra.mxu0 0
        %4143 = vmatprep.subr.bf16.mxu0 0
        %4144 = vmatpush1.bf16.msra.mxu0 0
        %4145 = vmatprep.subr.bf16.mxu0 0
        %4146 = vmatpush1.bf16.msra.mxu0 0
        %4147 = vmatprep.subr.bf16.mxu0 0
        %4148 = vmatpush1.bf16.msra.mxu0 0
        %4149 = vmatprep.subr.bf16.mxu0 0
        %4150 = vmatpush1.bf16.msra.mxu0 0
        %4151 = vmatprep.subr.bf16.mxu0 0
        %4152 = vmatpush1.bf16.msra.mxu0 0
        %4153 = vmatprep.subr.bf16.mxu0 0
        %4154 = vmatpush1.bf16.msra.mxu0 0
        %4155 = vmatprep.subr.bf16.mxu0 0
        %4156 = vmatpush1.bf16.msra.mxu0 0
        %4157 = vmatprep.subr.bf16.mxu0 0
        %4158 = vmatpush1.bf16.msra.mxu0 0
        %4159 = vmatprep.subr.bf16.mxu0 0
        %4160 = vmatpush1.bf16.msra.mxu0 0
        %4161 = vmatprep.subr.bf16.mxu0 0
        %4162 = vmatpush1.bf16.msra.mxu0 0
        %4163 = vmatprep.subr.bf16.mxu0 0
        %4164 = vmatpush1.bf16.msra.mxu0 0
        %4165 = vmatprep.subr.bf16.mxu0 0
        %4166 = vmatpush1.bf16.msra.mxu0 0
        %4167 = vmatprep.mubr.bf16.mxu0 0
        %4168 = vmatmul.mubr.bf16.gmra.mrb[0].mxu0 %v2052
        %v4169 = vpop.f32.mrb[0].mxu0
        %v4170 = vadd.f32 %v2024, %v4169
        %v4171 = vpop.f32.mrb[0].mxu0
        %v4172 = vpop.f32.mrb[0].mxu0
        %v4173 = vadd.f32 %v2029, %v4172
        %v4174 = vpop.f32.mrb[0].mxu0
        %4175 = vmatprep.mubr.bf16.mxu0 0
        %4176 = vmatmul.mubr.bf16.gmra.mrb[0].mxu0 %v2055
        %v4177 = vpop.f32.mrb[0].mxu0
        %v4178 = vadd.f32 %v2034, %v4177
        %v4179 = vpop.f32.mrb[0].mxu0
        %v4180 = vpop.f32.mrb[0].mxu0
        %v4181 = vadd.f32 %v2039, %v4180
        %v4182 = vpop.f32.mrb[0].mxu0
        %4183 = vdwg.mxu0
        %4184 = vxpose.xlu0.b32.start [1/16] %v4170, 128
        %4185 = vxpose.xlu0.b32.cont [2/16] %v4173, 128
        %4186 = vxpose.xlu0.b32.cont [3/16] %v4178, 128
        %4187 = vxpose.xlu0.b32.cont [4/16] %v4181, 128
        %4188 = vxpose.xlu0.b32.cont [5/16] 0.0, 128
        %4189 = vxpose.xlu0.b32.cont [6/16] 0.0, 128
        %4190 = vxpose.xlu0.b32.cont [7/16] 0.0, 128
        %4191 = vxpose.xlu0.b32.cont [8/16] 0.0, 128
        %4192 = vxpose.xlu0.b32.cont [9/16] 0.0, 128
        %4193 = vxpose.xlu0.b32.cont [10/16] 0.0, 128
        %4194 = vxpose.xlu0.b32.cont [11/16] 0.0, 128
        %4195 = vxpose.xlu0.b32.cont [12/16] 0.0, 128
        %4196 = vxpose.xlu0.b32.cont [13/16] 0.0, 128
        %4197 = vxpose.xlu0.b32.cont [14/16] 0.0, 128
        %4198 = vxpose.xlu0.b32.cont [15/16] 0.0, 128
        %4199 = vxpose.xlu0.b32.end [16/16] 0.0, 128
        %v4200 = vpop.trf.xlu0
        %v4201 = vpop.trf.xlu0
        %v4202 = vpop.trf.xlu0
        %v4203 = vpop.trf.xlu0
        %v4204 = vpop.trf.xlu0
        %v4205 = vpop.trf.xlu0
        %v4206 = vpop.trf.xlu0
        %v4207 = vpop.trf.xlu0
        %v4208 = vpop.trf.xlu0
        %v4209 = vpop.trf.xlu0
        %v4210 = vpop.trf.xlu0
        %v4211 = vpop.trf.xlu0
        %v4212 = vpop.trf.xlu0
        %v4213 = vpop.trf.xlu0
        %v4214 = vpop.trf.xlu0
        %v4215 = vpop.trf.xlu0
        %s4216 = scalar_lea.vmem %s520, 112 [#allocation10]
        %4217 = vst.msk [vmem:[%s4216] sm:$0xff] %vm605, %v4200
        %4218 = vst.msk [vmem:[%s4216 + $0x8] sm:$0xff] %vm605, %v4201
        %s4219 = sand.u32 %s306, 1
        %s4220 = scalar_lea.sflag [#allocation4], %s4219
        %s4221 = sand.u32 %s306, 1
        %s4222 = smul.addr %s4221, 128
        %s4223 = scalar_lea.vmem [#allocation10], %s4222
        // Predicated region
        $region81: #{tpu_custom_call.1} parent=63 // pred_check
          %p4224 = pneg %p316
        $region82: #{tpu_custom_call.1} parent=63 // pred_check_branch
          %4226 = sbr.rel (%p4224) target = $region84
        $region83: #{tpu_custom_call.1} parent=63 // pred_region
          %s4227 = smul.u32 2, %s37
          %s4229 = ssub.s32 2048, 2048
          %4230 = vsyncadd %s4220, %s4229
          %s4231 = smul.addr %s36, 16
          %s4232 = sadd.s32 %s4227, %s4231
          %s4233 = smul.addr %s4232, 128
          %s4234 = scalar_lea.hbm %s11, %s4233
          %s4235 = sshll.u32 %s4223, 4
          %s4236 = int_to_ptr.vmem [resolvable:$true] %s4235
          %4241 = dma.vmem_to_hbm [thread:$0]  %s4236, 2048, %s4234, %s4220, 128, 128, 8
        $region84: #{tpu_custom_call.1} parent=63 // pred_fallthru
          _
      $region64: #{tpu_custom_call.1} parent=5 // pred_fallthru
        _
      %p4242 = scmp.le.s32.totalorder 2, %s27
      // Predicated region
      $region85: #{tpu_custom_call.1} parent=5 // pred_check
        %p4243 = pneg %p4242
      $region86: #{tpu_custom_call.1} parent=5 // pred_check_branch
        %4245 = sbr.rel (%p4243) target = $region88
      $region87: #{tpu_custom_call.1} parent=5 // pred_region
        %s4246 = ssub.s32 %s27, 2
        // Predicated region
        $region89: #{tpu_custom_call.1} parent=87 // pred_check
          %p4247 = pneg %p322
        $region90: #{tpu_custom_call.1} parent=87 // pred_check_branch
          %4249 = sbr.rel (%p4247) target = $region92
        $region91: #{tpu_custom_call.1} parent=87 // pred_region
          %s4250 = sand.u32 %s307, 1
          %s4251 = scalar_lea.sflag [#allocation4], %s4250
          %s4252 = sand.u32 %s307, 1
          %s4253 = smul.addr %s4252, 128
          %s4254 = scalar_lea.vmem [#allocation10], %s4253
          %4255 = dma.done %s4251, 2048
        $region92: #{tpu_custom_call.1} parent=87 // pred_fallthru
          _
      $region88: #{tpu_custom_call.1} parent=5 // pred_fallthru
        _
    $region6: #{tpu_custom_call.1} parent=1 // loop_footer
      %s31 = sadd.s32 1, %s27
    $region7: #{tpu_custom_call.1} parent=1 // loop_footer_branch
      %26 = sbr.rel target = $region3
    $region8: #{tpu_custom_call.1} parent=1 // loop_exit
      _
    %4256 = vsyncpa [#allocation3], 1
    %s4257 = scalar_lea.sflag [#allocation3], 1
    %4258 = vsyncpa %s4257, 1
    %4259 = vsyncpa [#allocation6], 1
    %s4260 = scalar_lea.sflag [#allocation6], 1
    %4261 = vsyncpa %s4260, 1
    %4262 = vsyncpa [#allocation9], 1
    %4263 = vsyncpa [#allocation4], 1
    %s4264 = scalar_lea.sflag [#allocation4], 1
    %4265 = vsyncpa %s4264, 1

</llo_original>
